<compile_context>
chip_gen: v7x
topology: tpu7x:2x2x1
jax: 0.10.0
libtpu: 0.0.40
codegen_flags: <defaults>
</compile_context>

<pallas_src>
import jax
import jax.numpy as jnp
import numpy as np
from jax.experimental import pallas as pl
from jax.experimental.pallas import tpu as pltpu

EPS = 1e-5          # nn.InstanceNorm2d default eps
NEG_SLOPE = 0.1     # nn.LeakyReLU(0.1)
LANE = 128          # TPU lane width; channels padded to a multiple of this
# NOTE: for Cout >= 256 on v6e/v7x (2x256^2 MXU) a 256-multiple cpo gives better MXU
# fill; data-movement fixes dominate first, so cpo stays a 128 multiple here.


def _round_up(x, m):
    return (x + m - 1) // m * m


def _inorm_lrelu(y, gamma, beta, inv_hw):
    """InstanceNorm (affine) + LeakyReLU(0.1) on (hw, C) f32 activations.

    Centered two-pass statistics: avoids the E[x^2]-E[x]^2 cancellation when the
    post-conv mean is large relative to the std.
    """
    mean = jnp.sum(y, axis=0, keepdims=True) * inv_hw
    yc = y - mean
    var = jnp.sum(yc * yc, axis=0, keepdims=True) * inv_hw
    yn = yc * jax.lax.rsqrt(var + EPS) * gamma + beta
    return jnp.where(yn >= 0, yn, NEG_SLOPE * yn)


def _conv3x3_taps(src, w_ref, H, W, m_l, m_r):
    """3x3 'same' conv of one flattened image via 9 accumulated MXU matmuls.

    src:   (H*W, C)      bf16 flattened activation (no spatial padding).
    w_ref: (9, C, Cout)  bf16 taps in (ky, kx) row-major (HWIO) order.
    m_l / m_r: (H*W, 1)  bool column-validity masks for dx = -1 / +1 (built once
                         by the caller and reused by both conv layers).
    Returns (H*W, Cout) f32.
    """
    hw = H * W
    c = src.shape[-1]
    cout = w_ref.shape[-1]

    # One-row zero halo along H only; the ky row slices then start at ky*W which is
    # sublane-aligned whenever W % 8 == 0 -> no unaligned re-layout copies.
    zrow = jnp.zeros((W, c), src.dtype)
    xp = jnp.concatenate([zrow, src, zrow], axis=0)               # ((H+2)*W, C)

    def s_for_kx(kx):
        acc = jnp.zeros((hw, cout), jnp.float32)
        for ky in range(3):                                       # tiny static unroll
            row = xp[ky * W:ky * W + hw, :]                       # aligned slice
            acc = acc + jnp.dot(row, w_ref[ky * 3 + kx],
                                preferred_element_type=jnp.float32)
        return acc

    # The +/-1 column shift commutes with the channel matmul, so shift the (hw, Cout)
    # f32 partial sums: 2 XLU rolls + 2 masked adds per conv, no (hw, 9*C) patches
    # buffer and no shifted copies of the input.
    out = s_for_kx(1)
    out = out + jnp.where(m_l, pltpu.roll(s_for_kx(0), shift=1, axis=0), 0.0)
    out = out + jnp.where(m_r, pltpu.roll(s_for_kx(2), shift=hw - 1, axis=0), 0.0)
    return out


def _make_kernel(H, W, l1_im2col):
    hw = H * W
    inv_hw = 1.0 / float(hw)

    def kernel(x_ref, w1_ref, b1_ref, g1_ref, bt1_ref,
               w2_ref, b2_ref, g2_ref, bt2_ref, o_ref):
        # Column masks built once per grid step (hoisted; reused by both conv layers).
        col = jax.lax.broadcasted_iota(jnp.int32, (hw, 1), 0) % W
        m_l = col >= 1          # w-1 in bounds (dx = -1 tap valid)
        m_r = col <= W - 2      # w+1 in bounds (dx = +1 tap valid)

        x = x_ref[0]                                              # (hw, K1) bf16

        # ---- layer 1: conv3x3 -> InstanceNorm(affine) -> LeakyReLU ----
        if l1_im2col:
            # Small-Cin path: host packed all 9*Cin im2col taps into one lane-dense K,
            # so layer 1 is a single MXU matmul (bf16 operands, f32 accumulation).
            y1 = jnp.dot(x, w1_ref[...], preferred_element_type=jnp.float32)
        else:
            y1 = _conv3x3_taps(x, w1_ref, H, W, m_l, m_r)
        y1 = _inorm_lrelu(y1 + b1_ref[...], g1_ref[...], bt1_ref[...], inv_hw)

        # ---- layer 2: conv3x3 -> InstanceNorm(affine) -> LeakyReLU ----
        # Intermediate is cast to bf16 for the MXU (explicit, documented choice).
        y2 = _conv3x3_taps(y1.astype(jnp.bfloat16), w2_ref, H, W, m_l, m_r)
        y2 = _inorm_lrelu(y2 + b2_ref[...], g2_ref[...], bt2_ref[...], inv_hw)

        o_ref[0] = y2.astype(o_ref.dtype)

    return kernel


def vgg_block_forward(x_nchw, p, out_dtype=jnp.bfloat16):
    """VGGBlock forward: NCHW in, NCHW out (matches the PyTorch module).

    out_dtype defaults to bf16: accuracy is already bf16-MXU limited and a bf16 store
    halves HBM writeback; pass jnp.float32 for an f32 output.
    """
    N, Cin, H, W = x_nchw.shape
    Cout = p["w1"].shape[-1]
    cpo = _round_up(Cout, LANE)
    hw = H * W

    # NCHW -> NHWC.  TODO(synk): keep activations NHWC end-to-end (or fuse this prep
    # into the pallas_call input DMA) to avoid the extra HBM round-trip of x.
    x = jnp.transpose(x_nchw, (0, 2, 3, 1))

    # Layer-1 input packing decision: use host im2col whenever packing 9*Cin into one
    # lane-dense K is no wider than padding Cin itself to the lane width.
    l1_im2col = _round_up(9 * Cin, LANE) <= _round_up(Cin, LANE)

    if l1_im2col:
        k1 = _round_up(9 * Cin, LANE)
        xpad = jnp.pad(x, ((0, 0), (1, 1), (1, 1), (0, 0)))
        taps = [xpad[:, ky:ky + H, kx:kx + W, :]
                for ky in range(3) for kx in range(3)]
        patches = jnp.concatenate(taps, axis=-1)                  # (N, H, W, 9*Cin)
        x_in = jnp.pad(patches, ((0, 0), (0, 0), (0, 0), (0, k1 - 9 * Cin)))
        x_in = x_in.astype(jnp.bfloat16).reshape(N, hw, k1)
        w1 = jnp.pad(p["w1"].reshape(9 * Cin, Cout),
                     ((0, k1 - 9 * Cin), (0, cpo - Cout))).astype(jnp.bfloat16)
        w1_spec = pl.BlockSpec((k1, cpo), lambda i: (0, 0))
        k1_eff = k1
    else:
        cpi = _round_up(Cin, LANE)
        k1 = cpi
        x_in = jnp.pad(x, ((0, 0), (0, 0), (0, 0), (0, cpi - Cin)))
        x_in = x_in.astype(jnp.bfloat16).reshape(N, hw, cpi)
        w1 = jnp.pad(p["w1"], ((0, 0), (0, 0), (0, cpi - Cin), (0, cpo - Cout)))
        w1 = w1.reshape(9, cpi, cpo).astype(jnp.bfloat16)
        w1_spec = pl.BlockSpec((9, cpi, cpo), lambda i: (0, 0, 0))
        k1_eff = 9 * cpi

    w2 = jnp.pad(p["w2"], ((0, 0), (0, 0), (0, cpo - Cout), (0, cpo - Cout)))
    w2 = w2.reshape(9, cpo, cpo).astype(jnp.bfloat16)

    def prep_v(v):
        # Zero padding keeps the padded output channels exactly zero
        # (var=0 -> 0*rsqrt(eps)*gamma(=0) + beta(=0)).  Do NOT pad gamma with ones.
        return jnp.pad(v, (0, cpo - v.shape[0])).reshape(1, cpo).astype(jnp.float32)

    b1, g1, bt1 = prep_v(p["b1"]), prep_v(p["g1"]), prep_v(p["bt1"])
    b2, g2, bt2 = prep_v(p["b2"]), prep_v(p["g2"]), prep_v(p["bt2"])

    out_bytes = jnp.dtype(out_dtype).itemsize

    # ---- VMEM-aware limit (bn=1, per-image grid step) ----
    bytes_io = 2 * (hw * k1 * 2) + 2 * (hw * cpo * out_bytes)     # double-buffered I/O
    bytes_w = (w1.size + w2.size) * 2 + 8 * cpo * 4               # weights + vec params
    bytes_inter = ((hw + 2 * W) * max(k1, cpo) * 2                # bf16 halo copy
                   + 6 * hw * cpo * 4                             # f32 partial sums / y1 / y2
                   + hw * cpo * 2)                                # bf16 y1
    est = bytes_io + bytes_w + bytes_inter
    try:
        phys_vmem = int(pltpu.get_tpu_info().vmem_capacity_bytes)
    except Exception:
        phys_vmem = 64 << 20                                      # conservative: v7x per-core
    budget = int(phys_vmem * 0.85)
    vmem_limit = int(min(max(2 * est, 32 << 20), budget))
    # TODO(synk): if est > budget, switch to spatial strip tiling with cross-strip
    #             InstanceNorm statistics instead of whole-image blocks.

    flops = 2 * N * hw * (k1_eff * cpo + 9 * cpo * cpo)
    bytes_accessed = (x_in.size * 2 + (w1.size + w2.size) * 2
                      + 8 * cpo * 4 + N * hw * cpo * out_bytes)
    cost = pl.CostEstimate(flops=int(flops), transcendentals=int(2 * N * cpo),
                           bytes_accessed=int(bytes_accessed))

    vec_spec = pl.BlockSpec((1, cpo), lambda i: (0, 0))
    out = pl.pallas_call(
        _make_kernel(H, W, l1_im2col),
        out_shape=jax.ShapeDtypeStruct((N, hw, cpo), out_dtype),
        grid=(N,),
        in_specs=[
            pl.BlockSpec((1, hw, k1), lambda i: (i, 0, 0)),
            w1_spec,
            vec_spec, vec_spec, vec_spec,
            pl.BlockSpec((9, cpo, cpo), lambda i: (0, 0, 0)),
            vec_spec, vec_spec, vec_spec,
        ],
        out_specs=pl.BlockSpec((1, hw, cpo), lambda i: (i, 0, 0)),
        compiler_params=pltpu.CompilerParams(
            dimension_semantics=("parallel",),
            vmem_limit_bytes=vmem_limit),
        cost_estimate=cost,
    )(x_in, w1, b1, g1, bt1, w2, b2, g2, bt2)

    # Drop padded channels and return NCHW like the PyTorch module.
    out = out.reshape(N, H, W, cpo)[..., :Cout]
    return jnp.transpose(out, (0, 3, 1, 2))


# ---------------- pure-JAX reference (f32, HIGHEST precision) ----------------
def _ref_forward(x_nchw, p):
    def conv(x, w, b):
        y = jax.lax.conv_general_dilated(
            x, w, window_strides=(1, 1), padding="SAME",
            dimension_numbers=("NHWC", "HWIO", "NHWC"),
            precision=jax.lax.Precision.HIGHEST)
        return y + b

    def inorm(y, g, beta):
        mean = y.mean(axis=(1, 2), keepdims=True)
        var = ((y - mean) ** 2).mean(axis=(1, 2), keepdims=True)
        return (y - mean) * jax.lax.rsqrt(var + EPS) * g + beta

    def lrelu(y):
        return jnp.where(y >= 0, y, NEG_SLOPE * y)

    x = jnp.transpose(x_nchw, (0, 2, 3, 1))
    y = lrelu(inorm(conv(x, p["w1"], p["b1"]), p["g1"], p["bt1"]))
    z = lrelu(inorm(conv(y, p["w2"], p["b2"]), p["g2"], p["bt2"]))
    return jnp.transpose(z, (0, 3, 1, 2))


def init_params(key, in_ch, out_ch):
    ks = jax.random.split(key, 8)
    return {
        # conv weights in HWIO layout (kh, kw, Cin, Cout)
        "w1": 0.2 * jax.random.normal(ks[0], (3, 3, in_ch, out_ch), jnp.float32),
        "b1": 0.1 * jax.random.normal(ks[1], (out_ch,), jnp.float32),
        "g1": 1.0 + 0.1 * jax.random.normal(ks[2], (out_ch,), jnp.float32),
        "bt1": 0.1 * jax.random.normal(ks[3], (out_ch,), jnp.float32),
        "w2": 0.2 * jax.random.normal(ks[4], (3, 3, out_ch, out_ch), jnp.float32),
        "b2": 0.1 * jax.random.normal(ks[5], (out_ch,), jnp.float32),
        "g2": 1.0 + 0.1 * jax.random.normal(ks[6], (out_ch,), jnp.float32),
        "bt2": 0.1 * jax.random.normal(ks[7], (out_ch,), jnp.float32),
    }


if __name__ == "__main__":
    N, Cin, Cout, H, W = 2, 4, 8, 16, 16
    key = jax.random.PRNGKey(0)
    kx, kp = jax.random.split(key)
    x = jax.random.normal(kx, (N, Cin, H, W), jnp.float32)        # NCHW like PyTorch
    params = init_params(kp, Cin, Cout)

    fwd = jax.jit(vgg_block_forward)
    out = jax.block_until_ready(fwd(x, params))
    assert out.shape == (N, Cout, H, W), out.shape

    ref = jax.block_until_ready(_ref_forward(x, params))
    out_f32 = np.asarray(jax.block_until_ready(out.astype(jnp.float32)))
    ref_f32 = np.asarray(ref)
    err = float(np.max(np.abs(out_f32 - ref_f32)))
    # Kernel uses bf16 MXU operands / bf16 intermediate+output (f32 accumulation and
    # stats) vs. the f32 HIGHEST reference, so allow a slightly looser tolerance.
    if not np.allclose(out_f32, ref_f32, rtol=2e-2, atol=3e-2):
        raise AssertionError(f"Pallas output mismatch vs reference, max abs err={err:e}")

    print("KERNEL_OK")
</pallas_src>

<mosaic_0001>
module attributes {stable_mosaic.version = 11 : i64} {
  func.func @kernel(%arg0: i32, %arg1: memref<1x256x128xbf16, #tpu.memory_space<vmem>>, %arg2: memref<128x128xbf16, #tpu.memory_space<vmem>>, %arg3: memref<1x128xf32, #tpu.memory_space<vmem>>, %arg4: memref<1x128xf32, #tpu.memory_space<vmem>>, %arg5: memref<1x128xf32, #tpu.memory_space<vmem>>, %arg6: memref<9x128x128xbf16, #tpu.memory_space<vmem>>, %arg7: memref<1x128xf32, #tpu.memory_space<vmem>>, %arg8: memref<1x128xf32, #tpu.memory_space<vmem>>, %arg9: memref<1x128xf32, #tpu.memory_space<vmem>>, %arg10: memref<1x256x128xbf16, #tpu.memory_space<vmem>>) attributes {dimension_semantics = [#tpu.dimension_semantics<parallel>], iteration_bounds = array<i64: 2>, scalar_prefetch = 0 : i64, scratch_operands = 0 : i64, tpu.core_type = #tpu.core_type<tc>, window_params = [{transform_indices = @transform_0, window_bounds = array<i64: 1, 256, 128>}, {pipeline_mode = #tpu.pipeline_mode<synchronous>, transform_indices = @transform_1, window_bounds = array<i64: 128, 128>}, {pipeline_mode = #tpu.pipeline_mode<synchronous>, transform_indices = @transform_2, window_bounds = array<i64: 1, 128>}, {pipeline_mode = #tpu.pipeline_mode<synchronous>, transform_indices = @transform_3, window_bounds = array<i64: 1, 128>}, {pipeline_mode = #tpu.pipeline_mode<synchronous>, transform_indices = @transform_4, window_bounds = array<i64: 1, 128>}, {pipeline_mode = #tpu.pipeline_mode<synchronous>, transform_indices = @transform_5, window_bounds = array<i64: 9, 128, 128>}, {pipeline_mode = #tpu.pipeline_mode<synchronous>, transform_indices = @transform_6, window_bounds = array<i64: 1, 128>}, {pipeline_mode = #tpu.pipeline_mode<synchronous>, transform_indices = @transform_7, window_bounds = array<i64: 1, 128>}, {pipeline_mode = #tpu.pipeline_mode<synchronous>, transform_indices = @transform_8, window_bounds = array<i64: 1, 128>}, {transform_indices = @transform_9, window_bounds = array<i64: 1, 256, 128>}]} {
    %0 = tpu.iota {dimensions = array<i32: 0>} : vector<256x1xi32>
    %c16_i32 = arith.constant 16 : i32
    %c0_i32 = arith.constant 0 : i32
    %1 = arith.cmpi eq, %c16_i32, %c0_i32 : i32
    %c1_i32 = arith.constant 1 : i32
    %2 = arith.select %1, %c1_i32, %c16_i32 : i32
    %3 = vector.broadcast %2 : i32 to vector<256x1xi32>
    %4 = arith.remsi %0, %3 : vector<256x1xi32>
    %c0_i32_0 = arith.constant 0 : i32
    %5 = vector.broadcast %c0_i32_0 : i32 to vector<256x1xi32>
    %6 = arith.cmpi ne, %4, %5 : vector<256x1xi32>
    %c0_i32_1 = arith.constant 0 : i32
    %7 = vector.broadcast %c0_i32_1 : i32 to vector<256x1xi32>
    %8 = arith.cmpi slt, %4, %7 : vector<256x1xi32>
    %c0_i32_2 = arith.constant 0 : i32
    %9 = arith.cmpi slt, %2, %c0_i32_2 : i32
    %10 = vector.broadcast %9 : i1 to vector<256x1xi1>
    %11 = vector.broadcast %10 : vector<256x1xi1> to vector<256x1xi1>
    %12 = arith.xori %8, %11 : vector<256x1xi1>
    %13 = arith.andi %12, %6 : vector<256x1xi1>
    %14 = vector.broadcast %2 : i32 to vector<256x1xi32>
    %15 = arith.addi %4, %14 : vector<256x1xi32>
    %16 = arith.select %13, %15, %4 : vector<256x1xi1>, vector<256x1xi32>
    %c1_i32_3 = arith.constant 1 : i32
    %17 = vector.broadcast %c1_i32_3 : i32 to vector<256x1xi32>
    %18 = arith.cmpi sge, %16, %17 : vector<256x1xi32>
    %c14_i32 = arith.constant 14 : i32
    %19 = vector.broadcast %c14_i32 : i32 to vector<256x1xi32>
    %20 = arith.cmpi sle, %16, %19 : vector<256x1xi32>
    %c0 = arith.constant 0 : index
    %c0_4 = arith.constant 0 : index
    %c0_5 = arith.constant 0 : index
    %21 = vector.load %arg1[%c0, %c0_4, %c0_5] : memref<1x256x128xbf16, #tpu.memory_space<vmem>>, vector<1x256x128xbf16>
    %22 = vector.shape_cast %21 : vector<1x256x128xbf16> to vector<256x128xbf16>
    %c0_6 = arith.constant 0 : index
    %c0_7 = arith.constant 0 : index
    %23 = vector.load %arg2[%c0_6, %c0_7] : memref<128x128xbf16, #tpu.memory_space<vmem>>, vector<128x128xbf16>
    %cst = arith.constant dense<0.000000e+00> : vector<256x128xf32>
    %24 = tpu.matmul %22, %23, %cst {dimension_numbers = #tpu.dot_dimension_numbers<[1], [0], [0], [1], [0, 0, 1, 1], [], []>} : vector<256x128xbf16>, vector<128x128xbf16>, vector<256x128xf32> -> vector<256x128xf32>
    %c0_8 = arith.constant 0 : index
    %c0_9 = arith.constant 0 : index
    %25 = vector.load %arg3[%c0_8, %c0_9] : memref<1x128xf32, #tpu.memory_space<vmem>>, vector<1x128xf32>
    %26 = vector.broadcast %25 : vector<1x128xf32> to vector<256x128xf32>
    %27 = arith.addf %24, %26 : vector<256x128xf32>
    %c0_10 = arith.constant 0 : index
    %c0_11 = arith.constant 0 : index
    %28 = vector.load %arg4[%c0_10, %c0_11] : memref<1x128xf32, #tpu.memory_space<vmem>>, vector<1x128xf32>
    %c0_12 = arith.constant 0 : index
    %c0_13 = arith.constant 0 : index
    %29 = vector.load %arg5[%c0_12, %c0_13] : memref<1x128xf32, #tpu.memory_space<vmem>>, vector<1x128xf32>
    %cst_14 = arith.constant dense<0.000000e+00> : vector<128xf32>
    %30 = vector.multi_reduction <add>, %27, %cst_14 [0] : vector<256x128xf32> to vector<128xf32>
    %31 = vector.shape_cast %30 : vector<128xf32> to vector<1x128xf32>
    %cst_15 = arith.constant 3.906250e-03 : f32
    %32 = vector.broadcast %cst_15 : f32 to vector<1x128xf32>
    %33 = arith.mulf %31, %32 : vector<1x128xf32>
    %34 = vector.broadcast %33 : vector<1x128xf32> to vector<256x128xf32>
    %35 = arith.subf %27, %34 : vector<256x128xf32>
    %36 = arith.mulf %35, %35 : vector<256x128xf32>
    %cst_16 = arith.constant dense<0.000000e+00> : vector<128xf32>
    %37 = vector.multi_reduction <add>, %36, %cst_16 [0] : vector<256x128xf32> to vector<128xf32>
    %38 = vector.shape_cast %37 : vector<128xf32> to vector<1x128xf32>
    %cst_17 = arith.constant 3.906250e-03 : f32
    %39 = vector.broadcast %cst_17 : f32 to vector<1x128xf32>
    %40 = arith.mulf %38, %39 : vector<1x128xf32>
    %cst_18 = arith.constant 9.99999974E-6 : f32
    %41 = vector.broadcast %cst_18 : f32 to vector<1x128xf32>
    %42 = arith.addf %40, %41 : vector<1x128xf32>
    %43 = math.rsqrt %42 : vector<1x128xf32>
    %44 = vector.broadcast %43 : vector<1x128xf32> to vector<256x128xf32>
    %45 = arith.mulf %35, %44 : vector<256x128xf32>
    %46 = vector.broadcast %28 : vector<1x128xf32> to vector<256x128xf32>
    %47 = arith.mulf %45, %46 : vector<256x128xf32>
    %48 = vector.broadcast %29 : vector<1x128xf32> to vector<256x128xf32>
    %49 = arith.addf %47, %48 : vector<256x128xf32>
    %cst_19 = arith.constant 0.000000e+00 : f32
    %50 = vector.broadcast %cst_19 : f32 to vector<256x128xf32>
    %51 = arith.cmpf oge, %49, %50 : vector<256x128xf32>
    %cst_20 = arith.constant 1.000000e-01 : f32
    %52 = vector.broadcast %cst_20 : f32 to vector<256x128xf32>
    %53 = arith.mulf %52, %49 : vector<256x128xf32>
    %54 = arith.select %51, %49, %53 : vector<256x128xi1>, vector<256x128xf32>
    %55 = arith.truncf %54 : vector<256x128xf32> to vector<256x128xbf16>
    %cst_21 = arith.constant 0.000000e+00 : bf16
    %56 = vector.broadcast %cst_21 : bf16 to vector<16x128xbf16>
    %57 = tpu.concatenate %56, %55, %56 in 0 : vector<16x128xbf16>, vector<256x128xbf16>, vector<16x128xbf16> -> vector<288x128xbf16>
    %cst_22 = arith.constant 0.000000e+00 : f32
    %58 = vector.broadcast %cst_22 : f32 to vector<256x128xf32>
    %59 = vector.extract_strided_slice %57 {offsets = [0, 0], sizes = [256, 128], strides = [1, 1]} : vector<288x128xbf16> to vector<256x128xbf16>
    %c1 = arith.constant 1 : index
    %c0_23 = arith.constant 0 : index
    %c0_24 = arith.constant 0 : index
    %60 = vector.load %arg6[%c1, %c0_23, %c0_24] : memref<9x128x128xbf16, #tpu.memory_space<vmem>>, vector<1x128x128xbf16>
    %61 = vector.shape_cast %60 : vector<1x128x128xbf16> to vector<128x128xbf16>
    %cst_25 = arith.constant dense<0.000000e+00> : vector<256x128xf32>
    %62 = tpu.matmul %59, %61, %cst_25 {dimension_numbers = #tpu.dot_dimension_numbers<[1], [0], [0], [1], [0, 0, 1, 1], [], []>} : vector<256x128xbf16>, vector<128x128xbf16>, vector<256x128xf32> -> vector<256x128xf32>
    %63 = arith.addf %58, %62 : vector<256x128xf32>
    %64 = vector.extract_strided_slice %57 {offsets = [16, 0], sizes = [256, 128], strides = [1, 1]} : vector<288x128xbf16> to vector<256x128xbf16>
    %c4 = arith.constant 4 : index
    %c0_26 = arith.constant 0 : index
    %c0_27 = arith.constant 0 : index
    %65 = vector.load %arg6[%c4, %c0_26, %c0_27] : memref<9x128x128xbf16, #tpu.memory_space<vmem>>, vector<1x128x128xbf16>
    %66 = vector.shape_cast %65 : vector<1x128x128xbf16> to vector<128x128xbf16>
    %cst_28 = arith.constant dense<0.000000e+00> : vector<256x128xf32>
    %67 = tpu.matmul %64, %66, %cst_28 {dimension_numbers = #tpu.dot_dimension_numbers<[1], [0], [0], [1], [0, 0, 1, 1], [], []>} : vector<256x128xbf16>, vector<128x128xbf16>, vector<256x128xf32> -> vector<256x128xf32>
    %68 = arith.addf %63, %67 : vector<256x128xf32>
    %69 = vector.extract_strided_slice %57 {offsets = [32, 0], sizes = [256, 128], strides = [1, 1]} : vector<288x128xbf16> to vector<256x128xbf16>
    %c7 = arith.constant 7 : index
    %c0_29 = arith.constant 0 : index
    %c0_30 = arith.constant 0 : index
    %70 = vector.load %arg6[%c7, %c0_29, %c0_30] : memref<9x128x128xbf16, #tpu.memory_space<vmem>>, vector<1x128x128xbf16>
    %71 = vector.shape_cast %70 : vector<1x128x128xbf16> to vector<128x128xbf16>
    %cst_31 = arith.constant dense<0.000000e+00> : vector<256x128xf32>
    %72 = tpu.matmul %69, %71, %cst_31 {dimension_numbers = #tpu.dot_dimension_numbers<[1], [0], [0], [1], [0, 0, 1, 1], [], []>} : vector<256x128xbf16>, vector<128x128xbf16>, vector<256x128xf32> -> vector<256x128xf32>
    %73 = arith.addf %68, %72 : vector<256x128xf32>
    %cst_32 = arith.constant 0.000000e+00 : f32
    %74 = vector.broadcast %cst_32 : f32 to vector<256x128xf32>
    %75 = vector.extract_strided_slice %57 {offsets = [0, 0], sizes = [256, 128], strides = [1, 1]} : vector<288x128xbf16> to vector<256x128xbf16>
    %c0_33 = arith.constant 0 : index
    %c0_34 = arith.constant 0 : index
    %c0_35 = arith.constant 0 : index
    %76 = vector.load %arg6[%c0_33, %c0_34, %c0_35] : memref<9x128x128xbf16, #tpu.memory_space<vmem>>, vector<1x128x128xbf16>
    %77 = vector.shape_cast %76 : vector<1x128x128xbf16> to vector<128x128xbf16>
    %cst_36 = arith.constant dense<0.000000e+00> : vector<256x128xf32>
    %78 = tpu.matmul %75, %77, %cst_36 {dimension_numbers = #tpu.dot_dimension_numbers<[1], [0], [0], [1], [0, 0, 1, 1], [], []>} : vector<256x128xbf16>, vector<128x128xbf16>, vector<256x128xf32> -> vector<256x128xf32>
    %79 = arith.addf %74, %78 : vector<256x128xf32>
    %80 = vector.extract_strided_slice %57 {offsets = [16, 0], sizes = [256, 128], strides = [1, 1]} : vector<288x128xbf16> to vector<256x128xbf16>
    %c3 = arith.constant 3 : index
    %c0_37 = arith.constant 0 : index
    %c0_38 = arith.constant 0 : index
    %81 = vector.load %arg6[%c3, %c0_37, %c0_38] : memref<9x128x128xbf16, #tpu.memory_space<vmem>>, vector<1x128x128xbf16>
    %82 = vector.shape_cast %81 : vector<1x128x128xbf16> to vector<128x128xbf16>
    %cst_39 = arith.constant dense<0.000000e+00> : vector<256x128xf32>
    %83 = tpu.matmul %80, %82, %cst_39 {dimension_numbers = #tpu.dot_dimension_numbers<[1], [0], [0], [1], [0, 0, 1, 1], [], []>} : vector<256x128xbf16>, vector<128x128xbf16>, vector<256x128xf32> -> vector<256x128xf32>
    %84 = arith.addf %79, %83 : vector<256x128xf32>
    %85 = vector.extract_strided_slice %57 {offsets = [32, 0], sizes = [256, 128], strides = [1, 1]} : vector<288x128xbf16> to vector<256x128xbf16>
    %c6 = arith.constant 6 : index
    %c0_40 = arith.constant 0 : index
    %c0_41 = arith.constant 0 : index
    %86 = vector.load %arg6[%c6, %c0_40, %c0_41] : memref<9x128x128xbf16, #tpu.memory_space<vmem>>, vector<1x128x128xbf16>
    %87 = vector.shape_cast %86 : vector<1x128x128xbf16> to vector<128x128xbf16>
    %cst_42 = arith.constant dense<0.000000e+00> : vector<256x128xf32>
    %88 = tpu.matmul %85, %87, %cst_42 {dimension_numbers = #tpu.dot_dimension_numbers<[1], [0], [0], [1], [0, 0, 1, 1], [], []>} : vector<256x128xbf16>, vector<128x128xbf16>, vector<256x128xf32> -> vector<256x128xf32>
    %89 = arith.addf %84, %88 : vector<256x128xf32>
    %c1_i32_43 = arith.constant 1 : i32
    %90 = tpu.dynamic_rotate %89 by %c1_i32_43 dim 0 : vector<256x128xf32>, i32 -> vector<256x128xf32>
    %cst_44 = arith.constant 0.000000e+00 : f32
    %91 = vector.shape_cast %18 : vector<256x1xi1> to vector<256x1xi1>
    %92 = vector.broadcast %91 : vector<256x1xi1> to vector<256x128xi1>
    %93 = vector.broadcast %cst_44 : f32 to vector<256x128xf32>
    %94 = arith.select %92, %90, %93 : vector<256x128xi1>, vector<256x128xf32>
    %95 = arith.addf %73, %94 : vector<256x128xf32>
    %cst_45 = arith.constant 0.000000e+00 : f32
    %96 = vector.broadcast %cst_45 : f32 to vector<256x128xf32>
    %97 = vector.extract_strided_slice %57 {offsets = [0, 0], sizes = [256, 128], strides = [1, 1]} : vector<288x128xbf16> to vector<256x128xbf16>
    %c2 = arith.constant 2 : index
    %c0_46 = arith.constant 0 : index
    %c0_47 = arith.constant 0 : index
    %98 = vector.load %arg6[%c2, %c0_46, %c0_47] : memref<9x128x128xbf16, #tpu.memory_space<vmem>>, vector<1x128x128xbf16>
    %99 = vector.shape_cast %98 : vector<1x128x128xbf16> to vector<128x128xbf16>
    %cst_48 = arith.constant dense<0.000000e+00> : vector<256x128xf32>
    %100 = tpu.matmul %97, %99, %cst_48 {dimension_numbers = #tpu.dot_dimension_numbers<[1], [0], [0], [1], [0, 0, 1, 1], [], []>} : vector<256x128xbf16>, vector<128x128xbf16>, vector<256x128xf32> -> vector<256x128xf32>
    %101 = arith.addf %96, %100 : vector<256x128xf32>
    %102 = vector.extract_strided_slice %57 {offsets = [16, 0], sizes = [256, 128], strides = [1, 1]} : vector<288x128xbf16> to vector<256x128xbf16>
    %c5 = arith.constant 5 : index
    %c0_49 = arith.constant 0 : index
    %c0_50 = arith.constant 0 : index
    %103 = vector.load %arg6[%c5, %c0_49, %c0_50] : memref<9x128x128xbf16, #tpu.memory_space<vmem>>, vector<1x128x128xbf16>
    %104 = vector.shape_cast %103 : vector<1x128x128xbf16> to vector<128x128xbf16>
    %cst_51 = arith.constant dense<0.000000e+00> : vector<256x128xf32>
    %105 = tpu.matmul %102, %104, %cst_51 {dimension_numbers = #tpu.dot_dimension_numbers<[1], [0], [0], [1], [0, 0, 1, 1], [], []>} : vector<256x128xbf16>, vector<128x128xbf16>, vector<256x128xf32> -> vector<256x128xf32>
    %106 = arith.addf %101, %105 : vector<256x128xf32>
    %107 = vector.extract_strided_slice %57 {offsets = [32, 0], sizes = [256, 128], strides = [1, 1]} : vector<288x128xbf16> to vector<256x128xbf16>
    %c8 = arith.constant 8 : index
    %c0_52 = arith.constant 0 : index
    %c0_53 = arith.constant 0 : index
    %108 = vector.load %arg6[%c8, %c0_52, %c0_53] : memref<9x128x128xbf16, #tpu.memory_space<vmem>>, vector<1x128x128xbf16>
    %109 = vector.shape_cast %108 : vector<1x128x128xbf16> to vector<128x128xbf16>
    %cst_54 = arith.constant dense<0.000000e+00> : vector<256x128xf32>
    %110 = tpu.matmul %107, %109, %cst_54 {dimension_numbers = #tpu.dot_dimension_numbers<[1], [0], [0], [1], [0, 0, 1, 1], [], []>} : vector<256x128xbf16>, vector<128x128xbf16>, vector<256x128xf32> -> vector<256x128xf32>
    %111 = arith.addf %106, %110 : vector<256x128xf32>
    %c255_i32 = arith.constant 255 : i32
    %112 = tpu.dynamic_rotate %111 by %c255_i32 dim 0 : vector<256x128xf32>, i32 -> vector<256x128xf32>
    %cst_55 = arith.constant 0.000000e+00 : f32
    %113 = vector.shape_cast %20 : vector<256x1xi1> to vector<256x1xi1>
    %114 = vector.broadcast %113 : vector<256x1xi1> to vector<256x128xi1>
    %115 = vector.broadcast %cst_55 : f32 to vector<256x128xf32>
    %116 = arith.select %114, %112, %115 : vector<256x128xi1>, vector<256x128xf32>
    %117 = arith.addf %95, %116 : vector<256x128xf32>
    %c0_56 = arith.constant 0 : index
    %c0_57 = arith.constant 0 : index
    %118 = vector.load %arg7[%c0_56, %c0_57] : memref<1x128xf32, #tpu.memory_space<vmem>>, vector<1x128xf32>
    %119 = vector.broadcast %118 : vector<1x128xf32> to vector<256x128xf32>
    %120 = arith.addf %117, %119 : vector<256x128xf32>
    %c0_58 = arith.constant 0 : index
    %c0_59 = arith.constant 0 : index
    %121 = vector.load %arg8[%c0_58, %c0_59] : memref<1x128xf32, #tpu.memory_space<vmem>>, vector<1x128xf32>
    %c0_60 = arith.constant 0 : index
    %c0_61 = arith.constant 0 : index
    %122 = vector.load %arg9[%c0_60, %c0_61] : memref<1x128xf32, #tpu.memory_space<vmem>>, vector<1x128xf32>
    %cst_62 = arith.constant dense<0.000000e+00> : vector<128xf32>
    %123 = vector.multi_reduction <add>, %120, %cst_62 [0] : vector<256x128xf32> to vector<128xf32>
    %124 = vector.shape_cast %123 : vector<128xf32> to vector<1x128xf32>
    %cst_63 = arith.constant 3.906250e-03 : f32
    %125 = vector.broadcast %cst_63 : f32 to vector<1x128xf32>
    %126 = arith.mulf %124, %125 : vector<1x128xf32>
    %127 = vector.broadcast %126 : vector<1x128xf32> to vector<256x128xf32>
    %128 = arith.subf %120, %127 : vector<256x128xf32>
    %129 = arith.mulf %128, %128 : vector<256x128xf32>
    %cst_64 = arith.constant dense<0.000000e+00> : vector<128xf32>
    %130 = vector.multi_reduction <add>, %129, %cst_64 [0] : vector<256x128xf32> to vector<128xf32>
    %131 = vector.shape_cast %130 : vector<128xf32> to vector<1x128xf32>
    %cst_65 = arith.constant 3.906250e-03 : f32
    %132 = vector.broadcast %cst_65 : f32 to vector<1x128xf32>
    %133 = arith.mulf %131, %132 : vector<1x128xf32>
    %cst_66 = arith.constant 9.99999974E-6 : f32
    %134 = vector.broadcast %cst_66 : f32 to vector<1x128xf32>
    %135 = arith.addf %133, %134 : vector<1x128xf32>
    %136 = math.rsqrt %135 : vector<1x128xf32>
    %137 = vector.broadcast %136 : vector<1x128xf32> to vector<256x128xf32>
    %138 = arith.mulf %128, %137 : vector<256x128xf32>
    %139 = vector.broadcast %121 : vector<1x128xf32> to vector<256x128xf32>
    %140 = arith.mulf %138, %139 : vector<256x128xf32>
    %141 = vector.broadcast %122 : vector<1x128xf32> to vector<256x128xf32>
    %142 = arith.addf %140, %141 : vector<256x128xf32>
    %cst_67 = arith.constant 0.000000e+00 : f32
    %143 = vector.broadcast %cst_67 : f32 to vector<256x128xf32>
    %144 = arith.cmpf oge, %142, %143 : vector<256x128xf32>
    %cst_68 = arith.constant 1.000000e-01 : f32
    %145 = vector.broadcast %cst_68 : f32 to vector<256x128xf32>
    %146 = arith.mulf %145, %142 : vector<256x128xf32>
    %147 = arith.select %144, %142, %146 : vector<256x128xi1>, vector<256x128xf32>
    %148 = arith.truncf %147 : vector<256x128xf32> to vector<256x128xbf16>
    %c0_69 = arith.constant 0 : index
    %c0_70 = arith.constant 0 : index
    %c0_71 = arith.constant 0 : index
    %149 = vector.load %arg10[%c0_69, %c0_70, %c0_71] : memref<1x256x128xbf16, #tpu.memory_space<vmem>>, vector<1x256x128xbf16>
    %150 = vector.shape_cast %149 : vector<1x256x128xbf16> to vector<256x128xbf16>
    %151 = vector.shape_cast %148 : vector<256x128xbf16> to vector<1x256x128xbf16>
    tpu.vector_store %arg10[%c0_69, %c0_70, %c0_71], %151 {strides = array<i32>} : memref<1x256x128xbf16, #tpu.memory_space<vmem>>, vector<1x256x128xbf16>,
    return
  }
  func.func @transform_0(%arg0: i32) -> (i32, i32, i32) {
    %c0_i32 = arith.constant 0 : i32
    %c0_i32_0 = arith.constant 0 : i32
    %c0_i32_1 = arith.constant 0 : i32
    return %arg0, %c0_i32, %c0_i32_0 : i32, i32, i32
  }
  func.func @transform_1(%arg0: i32) -> (i32, i32) {
    %c0_i32 = arith.constant 0 : i32
    %c0_i32_0 = arith.constant 0 : i32
    %c0_i32_1 = arith.constant 0 : i32
    return %c0_i32, %c0_i32_0 : i32, i32
  }
  func.func @transform_2(%arg0: i32) -> (i32, i32) {
    %c0_i32 = arith.constant 0 : i32
    %c0_i32_0 = arith.constant 0 : i32
    %c0_i32_1 = arith.constant 0 : i32
    return %c0_i32, %c0_i32_0 : i32, i32
  }
  func.func @transform_3(%arg0: i32) -> (i32, i32) {
    %c0_i32 = arith.constant 0 : i32
    %c0_i32_0 = arith.constant 0 : i32
    %c0_i32_1 = arith.constant 0 : i32
    return %c0_i32, %c0_i32_0 : i32, i32
  }
  func.func @transform_4(%arg0: i32) -> (i32, i32) {
    %c0_i32 = arith.constant 0 : i32
    %c0_i32_0 = arith.constant 0 : i32
    %c0_i32_1 = arith.constant 0 : i32
    return %c0_i32, %c0_i32_0 : i32, i32
  }
  func.func @transform_5(%arg0: i32) -> (i32, i32, i32) {
    %c0_i32 = arith.constant 0 : i32
    %c0_i32_0 = arith.constant 0 : i32
    %c0_i32_1 = arith.constant 0 : i32
    %c0_i32_2 = arith.constant 0 : i32
    return %c0_i32, %c0_i32_0, %c0_i32_1 : i32, i32, i32
  }
  func.func @transform_6(%arg0: i32) -> (i32, i32) {
    %c0_i32 = arith.constant 0 : i32
    %c0_i32_0 = arith.constant 0 : i32
    %c0_i32_1 = arith.constant 0 : i32
    return %c0_i32, %c0_i32_0 : i32, i32
  }
  func.func @transform_7(%arg0: i32) -> (i32, i32) {
    %c0_i32 = arith.constant 0 : i32
    %c0_i32_0 = arith.constant 0 : i32
    %c0_i32_1 = arith.constant 0 : i32
    return %c0_i32, %c0_i32_0 : i32, i32
  }
  func.func @transform_8(%arg0: i32) -> (i32, i32) {
    %c0_i32 = arith.constant 0 : i32
    %c0_i32_0 = arith.constant 0 : i32
    %c0_i32_1 = arith.constant 0 : i32
    return %c0_i32, %c0_i32_0 : i32, i32
  }
  func.func @transform_9(%arg0: i32) -> (i32, i32, i32) {
    %c0_i32 = arith.constant 0 : i32
    %c0_i32_0 = arith.constant 0 : i32
    %c0_i32_1 = arith.constant 0 : i32
    return %arg0, %c0_i32, %c0_i32_0 : i32, i32, i32
  }
}

</mosaic_0001>

<llo_original>
// kernel: vgg_block_forward.1
$region0: #{vgg_block_forward.1}
  #allocation0 [shape = 'u32[]', space=smem, size = 0x4, offset = 0x4, fixed_abs, tag = 'smem constant byte address 0x4 - core index']
  #allocation1 [shape = 'u32[144,128]{1,0:T(1,128)}', space=vmem, size = 0x12000, scoped, tag = 'internal scratch']
  %s0 = inlined_call_operand.vmem [shape: bf16[2,256,128], index: 0, kind: input, shape index: {}]
  %s1 = inlined_call_operand.vmem [shape: bf16[128,128], index: 1, kind: input, shape index: {}]
  %s2 = inlined_call_operand.vmem [shape: f32[1,128], index: 2, kind: input, shape index: {}]
  %s3 = inlined_call_operand.vmem [shape: f32[1,128], index: 3, kind: input, shape index: {}]
  %s4 = inlined_call_operand.vmem [shape: f32[1,128], index: 4, kind: input, shape index: {}]
  %s5 = inlined_call_operand.vmem [shape: bf16[9,128,128], index: 5, kind: input, shape index: {}]
  %s6 = inlined_call_operand.vmem [shape: f32[1,128], index: 6, kind: input, shape index: {}]
  %s7 = inlined_call_operand.vmem [shape: f32[1,128], index: 7, kind: input, shape index: {}]
  %s8 = inlined_call_operand.vmem [shape: f32[1,128], index: 8, kind: input, shape index: {}]
  %s9 = inlined_call_operand.vmem [shape: bf16[2,256,128], index: 9, kind: output, shape index: {}]
  %s10 = sld [smem:[#allocation0]]
  $region69: #{vgg_block_forward.1} parent=0
    _
  %s12 = ssub.s32 1, %s10
  %s13 = scalar_select 0, %s12, %s10
  loop: start=0, step=1, limit=4
  $region2: #{vgg_block_forward.1} parent=0 // loop_pre_header
    _
  $region3: #{vgg_block_forward.1} parent=0 // loop_header
    %s15 = sphi 0, %s19
    %p16 = scmp.ge.s32.totalorder %s15, 4
    %s25 = sphi 0, %s27
    %s28 = sphi 0, %s25
    %s29 = sphi 0, %s28
    %s45 = sphi 0, %s29
    %s49 = sphi 0, %s49
    %s51 = sphi 0, %s49
    %s52 = sphi 0, %s51
    %s66 = sphi 0, %s52
    %s70 = sphi 0, %s70
    %s72 = sphi 0, %s70
    %s73 = sphi 0, %s72
    %s87 = sphi 0, %s73
    %s91 = sphi 0, %s91
    %s93 = sphi 0, %s91
    %s94 = sphi 0, %s93
    %s108 = sphi 0, %s94
    %s112 = sphi 0, %s112
    %s114 = sphi 0, %s112
    %s115 = sphi 0, %s114
    %s129 = sphi 0, %s115
    %s133 = sphi 0, %s133
    %s135 = sphi 0, %s133
    %s136 = sphi 0, %s135
    %s150 = sphi 0, %s136
    %s154 = sphi 0, %s154
    %s156 = sphi 0, %s154
    %s157 = sphi 0, %s156
    %s171 = sphi 0, %s157
    %s175 = sphi 0, %s175
    %s177 = sphi 0, %s175
    %s178 = sphi 0, %s177
    %s192 = sphi 0, %s178
    %s196 = sphi 0, %s196
    %s198 = sphi 0, %s196
    %s199 = sphi 0, %s198
    %s213 = sphi 0, %s199
    %s219 = sphi 0, %s221
    %s222 = sphi 0, %s219
    %s223 = sphi 0, %s222
    %s239 = sphi 0, %s223
  $region4: #{vgg_block_forward.1} parent=0 // loop_header_branch
    %18 = sbr.rel (%p16) target = $region8
  $region5: #{vgg_block_forward.1} parent=0 // loop_body
    %s20 = ssub.s32 %s15, 1
    %s21 = ssub.s32 %s15, 2
    %s22 = sadd.s32 %s15, 1
    %s23 = ssub.s32 %s15, %s22
    %p24 = scmp.eq.s32.totalorder %s23, 0
    %s26 = sadd.s32 %s25, 1
    %s27 = scalar_select %p24, %s25, %s26
    %p30 = pneg %p24
    %p31 = scmp.eq.s32.totalorder %s15, 1
    %p32 = por %p30, %p31
    %p33 = scmp.ne.s32.totalorder %s25, %s28
    %p34 = scmp.eq.s32.totalorder %s15, 0
    %p35 = por %p33, %p34
    %p36 = scmp.ne.s32.totalorder %s25, %s28
    %p37 = scmp.eq.s32.totalorder %s20, 1
    %p38 = por %p36, %p37
    %p39 = scmp.ne.s32.totalorder %s28, %s29
    %p40 = scmp.eq.s32.totalorder %s20, 0
    %p41 = por %p39, %p40
    %p42 = scmp.ne.s32.totalorder %s28, %s29
    %p43 = scmp.eq.s32.totalorder %s21, 1
    %p44 = por %p42, %p43
    %p46 = scmp.ne.s32.totalorder %s29, %s45
    %p47 = scmp.eq.s32.totalorder %s21, 0
    %p48 = por %p46, %p47
    %s50 = sadd.s32 %s49, 1
    %p53 = scmp.eq.s32.totalorder %s15, 1
    %p54 = scmp.ne.s32.totalorder %s49, %s51
    %p55 = scmp.eq.s32.totalorder %s15, 0
    %p56 = por %p54, %p55
    %p57 = scmp.ne.s32.totalorder %s49, %s51
    %p58 = scmp.eq.s32.totalorder %s20, 1
    %p59 = por %p57, %p58
    %p60 = scmp.ne.s32.totalorder %s51, %s52
    %p61 = scmp.eq.s32.totalorder %s20, 0
    %p62 = por %p60, %p61
    %p63 = scmp.ne.s32.totalorder %s51, %s52
    %p64 = scmp.eq.s32.totalorder %s21, 1
    %p65 = por %p63, %p64
    %p67 = scmp.ne.s32.totalorder %s52, %s66
    %p68 = scmp.eq.s32.totalorder %s21, 0
    %p69 = por %p67, %p68
    %s71 = sadd.s32 %s70, 1
    %p74 = scmp.eq.s32.totalorder %s15, 1
    %p75 = scmp.ne.s32.totalorder %s70, %s72
    %p76 = scmp.eq.s32.totalorder %s15, 0
    %p77 = por %p75, %p76
    %p78 = scmp.ne.s32.totalorder %s70, %s72
    %p79 = scmp.eq.s32.totalorder %s20, 1
    %p80 = por %p78, %p79
    %p81 = scmp.ne.s32.totalorder %s72, %s73
    %p82 = scmp.eq.s32.totalorder %s20, 0
    %p83 = por %p81, %p82
    %p84 = scmp.ne.s32.totalorder %s72, %s73
    %p85 = scmp.eq.s32.totalorder %s21, 1
    %p86 = por %p84, %p85
    %p88 = scmp.ne.s32.totalorder %s73, %s87
    %p89 = scmp.eq.s32.totalorder %s21, 0
    %p90 = por %p88, %p89
    %s92 = sadd.s32 %s91, 1
    %p95 = scmp.eq.s32.totalorder %s15, 1
    %p96 = scmp.ne.s32.totalorder %s91, %s93
    %p97 = scmp.eq.s32.totalorder %s15, 0
    %p98 = por %p96, %p97
    %p99 = scmp.ne.s32.totalorder %s91, %s93
    %p100 = scmp.eq.s32.totalorder %s20, 1
    %p101 = por %p99, %p100
    %p102 = scmp.ne.s32.totalorder %s93, %s94
    %p103 = scmp.eq.s32.totalorder %s20, 0
    %p104 = por %p102, %p103
    %p105 = scmp.ne.s32.totalorder %s93, %s94
    %p106 = scmp.eq.s32.totalorder %s21, 1
    %p107 = por %p105, %p106
    %p109 = scmp.ne.s32.totalorder %s94, %s108
    %p110 = scmp.eq.s32.totalorder %s21, 0
    %p111 = por %p109, %p110
    %s113 = sadd.s32 %s112, 1
    %p116 = scmp.eq.s32.totalorder %s15, 1
    %p117 = scmp.ne.s32.totalorder %s112, %s114
    %p118 = scmp.eq.s32.totalorder %s15, 0
    %p119 = por %p117, %p118
    %p120 = scmp.ne.s32.totalorder %s112, %s114
    %p121 = scmp.eq.s32.totalorder %s20, 1
    %p122 = por %p120, %p121
    %p123 = scmp.ne.s32.totalorder %s114, %s115
    %p124 = scmp.eq.s32.totalorder %s20, 0
    %p125 = por %p123, %p124
    %p126 = scmp.ne.s32.totalorder %s114, %s115
    %p127 = scmp.eq.s32.totalorder %s21, 1
    %p128 = por %p126, %p127
    %p130 = scmp.ne.s32.totalorder %s115, %s129
    %p131 = scmp.eq.s32.totalorder %s21, 0
    %p132 = por %p130, %p131
    %s134 = sadd.s32 %s133, 1
    %p137 = scmp.eq.s32.totalorder %s15, 1
    %p138 = scmp.ne.s32.totalorder %s133, %s135
    %p139 = scmp.eq.s32.totalorder %s15, 0
    %p140 = por %p138, %p139
    %p141 = scmp.ne.s32.totalorder %s133, %s135
    %p142 = scmp.eq.s32.totalorder %s20, 1
    %p143 = por %p141, %p142
    %p144 = scmp.ne.s32.totalorder %s135, %s136
    %p145 = scmp.eq.s32.totalorder %s20, 0
    %p146 = por %p144, %p145
    %p147 = scmp.ne.s32.totalorder %s135, %s136
    %p148 = scmp.eq.s32.totalorder %s21, 1
    %p149 = por %p147, %p148
    %p151 = scmp.ne.s32.totalorder %s136, %s150
    %p152 = scmp.eq.s32.totalorder %s21, 0
    %p153 = por %p151, %p152
    %s155 = sadd.s32 %s154, 1
    %p158 = scmp.eq.s32.totalorder %s15, 1
    %p159 = scmp.ne.s32.totalorder %s154, %s156
    %p160 = scmp.eq.s32.totalorder %s15, 0
    %p161 = por %p159, %p160
    %p162 = scmp.ne.s32.totalorder %s154, %s156
    %p163 = scmp.eq.s32.totalorder %s20, 1
    %p164 = por %p162, %p163
    %p165 = scmp.ne.s32.totalorder %s156, %s157
    %p166 = scmp.eq.s32.totalorder %s20, 0
    %p167 = por %p165, %p166
    %p168 = scmp.ne.s32.totalorder %s156, %s157
    %p169 = scmp.eq.s32.totalorder %s21, 1
    %p170 = por %p168, %p169
    %p172 = scmp.ne.s32.totalorder %s157, %s171
    %p173 = scmp.eq.s32.totalorder %s21, 0
    %p174 = por %p172, %p173
    %s176 = sadd.s32 %s175, 1
    %p179 = scmp.eq.s32.totalorder %s15, 1
    %p180 = scmp.ne.s32.totalorder %s175, %s177
    %p181 = scmp.eq.s32.totalorder %s15, 0
    %p182 = por %p180, %p181
    %p183 = scmp.ne.s32.totalorder %s175, %s177
    %p184 = scmp.eq.s32.totalorder %s20, 1
    %p185 = por %p183, %p184
    %p186 = scmp.ne.s32.totalorder %s177, %s178
    %p187 = scmp.eq.s32.totalorder %s20, 0
    %p188 = por %p186, %p187
    %p189 = scmp.ne.s32.totalorder %s177, %s178
    %p190 = scmp.eq.s32.totalorder %s21, 1
    %p191 = por %p189, %p190
    %p193 = scmp.ne.s32.totalorder %s178, %s192
    %p194 = scmp.eq.s32.totalorder %s21, 0
    %p195 = por %p193, %p194
    %s197 = sadd.s32 %s196, 1
    %p200 = scmp.eq.s32.totalorder %s15, 1
    %p201 = scmp.ne.s32.totalorder %s196, %s198
    %p202 = scmp.eq.s32.totalorder %s15, 0
    %p203 = por %p201, %p202
    %p204 = scmp.ne.s32.totalorder %s196, %s198
    %p205 = scmp.eq.s32.totalorder %s20, 1
    %p206 = por %p204, %p205
    %p207 = scmp.ne.s32.totalorder %s198, %s199
    %p208 = scmp.eq.s32.totalorder %s20, 0
    %p209 = por %p207, %p208
    %p210 = scmp.ne.s32.totalorder %s198, %s199
    %p211 = scmp.eq.s32.totalorder %s21, 1
    %p212 = por %p210, %p211
    %p214 = scmp.ne.s32.totalorder %s199, %s213
    %p215 = scmp.eq.s32.totalorder %s21, 0
    %p216 = por %p214, %p215
    %s217 = ssub.s32 %s15, %s22
    %p218 = scmp.eq.s32.totalorder %s217, 0
    %s220 = sadd.s32 %s219, 1
    %s221 = scalar_select %p218, %s219, %s220
    %p224 = pneg %p218
    %p225 = scmp.eq.s32.totalorder %s15, 1
    %p226 = por %p224, %p225
    %p227 = scmp.ne.s32.totalorder %s219, %s222
    %p228 = scmp.eq.s32.totalorder %s15, 0
    %p229 = por %p227, %p228
    %p230 = scmp.ne.s32.totalorder %s219, %s222
    %p231 = scmp.eq.s32.totalorder %s20, 1
    %p232 = por %p230, %p231
    %p233 = scmp.ne.s32.totalorder %s222, %s223
    %p234 = scmp.eq.s32.totalorder %s20, 0
    %p235 = por %p233, %p234
    %p236 = scmp.ne.s32.totalorder %s222, %s223
    %p237 = scmp.eq.s32.totalorder %s21, 1
    %p238 = por %p236, %p237
    %p240 = scmp.ne.s32.totalorder %s223, %s239
    %p241 = scmp.eq.s32.totalorder %s21, 0
    %p242 = por %p240, %p241
    %p243 = scmp.le.s32.totalorder 1, %s15
    %p244 = scmp.lt.s32.totalorder %s15, 3
    %p245 = pnand %p243, %p244
    %p246 = pneg %p245
    // Predicated region
    $region9: #{vgg_block_forward.1} parent=5 // pred_check
      _
    $region10: #{vgg_block_forward.1} parent=5 // pred_check_branch
      %248 = sbr.rel (%p245) target = $region12
    $region11: #{vgg_block_forward.1} parent=5 // pred_region
      %s249 = ssub.s32 %s15, 1
      // Predicated region
      $region13: #{vgg_block_forward.1} parent=11 // pred_check
        %p250 = pneg %p62
      $region14: #{vgg_block_forward.1} parent=11 // pred_check_branch
        %252 = sbr.rel (%p250) target = $region16
      $region15: #{vgg_block_forward.1} parent=11 // pred_region
        _
      $region16: #{vgg_block_forward.1} parent=11 // pred_fallthru
        _
      // Predicated region
      $region17: #{vgg_block_forward.1} parent=11 // pred_check
        %p253 = pneg %p83
      $region18: #{vgg_block_forward.1} parent=11 // pred_check_branch
        %255 = sbr.rel (%p253) target = $region20
      $region19: #{vgg_block_forward.1} parent=11 // pred_region
        _
      $region20: #{vgg_block_forward.1} parent=11 // pred_fallthru
        _
      // Predicated region
      $region21: #{vgg_block_forward.1} parent=11 // pred_check
        %p256 = pneg %p104
      $region22: #{vgg_block_forward.1} parent=11 // pred_check_branch
        %258 = sbr.rel (%p256) target = $region24
      $region23: #{vgg_block_forward.1} parent=11 // pred_region
        _
      $region24: #{vgg_block_forward.1} parent=11 // pred_fallthru
        _
      // Predicated region
      $region25: #{vgg_block_forward.1} parent=11 // pred_check
        %p259 = pneg %p125
      $region26: #{vgg_block_forward.1} parent=11 // pred_check_branch
        %261 = sbr.rel (%p259) target = $region28
      $region27: #{vgg_block_forward.1} parent=11 // pred_region
        _
      $region28: #{vgg_block_forward.1} parent=11 // pred_fallthru
        _
      // Predicated region
      $region29: #{vgg_block_forward.1} parent=11 // pred_check
        %p262 = pneg %p146
      $region30: #{vgg_block_forward.1} parent=11 // pred_check_branch
        %264 = sbr.rel (%p262) target = $region32
      $region31: #{vgg_block_forward.1} parent=11 // pred_region
        _
      $region32: #{vgg_block_forward.1} parent=11 // pred_fallthru
        _
      // Predicated region
      $region33: #{vgg_block_forward.1} parent=11 // pred_check
        %p265 = pneg %p167
      $region34: #{vgg_block_forward.1} parent=11 // pred_check_branch
        %267 = sbr.rel (%p265) target = $region36
      $region35: #{vgg_block_forward.1} parent=11 // pred_region
        _
      $region36: #{vgg_block_forward.1} parent=11 // pred_fallthru
        _
      // Predicated region
      $region37: #{vgg_block_forward.1} parent=11 // pred_check
        %p268 = pneg %p188
      $region38: #{vgg_block_forward.1} parent=11 // pred_check_branch
        %270 = sbr.rel (%p268) target = $region40
      $region39: #{vgg_block_forward.1} parent=11 // pred_region
        _
      $region40: #{vgg_block_forward.1} parent=11 // pred_fallthru
        _
      // Predicated region
      $region41: #{vgg_block_forward.1} parent=11 // pred_check
        %p271 = pneg %p209
      $region42: #{vgg_block_forward.1} parent=11 // pred_check_branch
        %273 = sbr.rel (%p271) target = $region44
      $region43: #{vgg_block_forward.1} parent=11 // pred_region
        _
      $region44: #{vgg_block_forward.1} parent=11 // pred_fallthru
        _
    $region12: #{vgg_block_forward.1} parent=5 // pred_fallthru
      _
    %p274 = scmp.lt.s32.totalorder %s15, 2
    // Predicated region
    $region45: #{vgg_block_forward.1} parent=5 // pred_check
      %p275 = pneg %p274
    $region46: #{vgg_block_forward.1} parent=5 // pred_check_branch
      %277 = sbr.rel (%p275) target = $region48
    $region47: #{vgg_block_forward.1} parent=5 // pred_region
      // Predicated region
      $region49: #{vgg_block_forward.1} parent=47 // pred_check
        %p278 = pneg %p35
      $region50: #{vgg_block_forward.1} parent=47 // pred_check_branch
        %280 = sbr.rel (%p278) target = $region52
      $region51: #{vgg_block_forward.1} parent=47 // pred_region
        %p281 = scmp.lt.s32.totalorder %s15, 1
        %s282 = scalar_select %p281, %s15, 1
        %s283 = smul.addr %s282, 32
        %s284 = smul.addr %s283, 4
        %s285 = scalar_lea.vmem %s0, %s284
      $region52: #{vgg_block_forward.1} parent=47 // pred_fallthru
        _
    $region48: #{vgg_block_forward.1} parent=5 // pred_fallthru
      _
    %p286 = scmp.le.s32.totalorder 1, %s15
    %p287 = scmp.lt.s32.totalorder %s15, 3
    %p288 = pnand %p286, %p287
    %p289 = pneg %p288
    // Predicated region
    $region53: #{vgg_block_forward.1} parent=5 // pred_check
      _
    $region54: #{vgg_block_forward.1} parent=5 // pred_check_branch
      %291 = sbr.rel (%p288) target = $region56
    $region55: #{vgg_block_forward.1} parent=5 // pred_region
      %s292 = ssub.s32 %s15, 1
      %p293 = scmp.lt.s32.totalorder %s20, 1
      %s294 = scalar_select %p293, %s20, 1
      %s295 = smul.addr %s294, 32
      %s296 = smul.addr %s295, 4
      %s297 = scalar_lea.vmem %s0, %s296
      %p298 = pneg %p41
      %p299 = pneg %p38
      %p300 = pneg %p62
      %p301 = pneg %p59
      %p302 = pneg %p83
      %p303 = pneg %p80
      %p304 = pneg %p104
      %p305 = pneg %p101
      %p306 = pneg %p125
      %p307 = pneg %p122
      %p308 = pneg %p146
      %p309 = pneg %p143
      %p310 = pneg %p167
      %p311 = pneg %p164
      %p312 = pneg %p188
      %p313 = pneg %p185
      %p314 = pneg %p209
      %p315 = pneg %p206
      %p316 = pneg %p235
      %p317 = pneg %p232
      %p318 = scmp.lt.s32.totalorder %s20, 1
      %s319 = scalar_select %p318, %s20, 1
      %s320 = smul.addr %s319, 32
      %s321 = smul.addr %s320, 4
      %s322 = scalar_lea.vmem %s9, %s321
      %p323 = scmp.lt.s32.totalorder %s20, 1
      %s324 = scalar_select %p323, %s20, 1
      %s325 = smul.addr %s324, 32
      %s326 = smul.addr %s325, 4
      %s327 = scalar_lea.vmem %s0, %s326
      %p328 = scmp.lt.s32.totalorder %s20, 1
      %s329 = scalar_select %p328, %s20, 1
      %s330 = smul.addr %s329, 32
      %s331 = smul.addr %s330, 4
      %s332 = scalar_lea.vmem %s9, %s331
      %v334 = vlaneseq
      %v335 = vshrl.u32 %v334, 7
      %v336 = vadd.s32 %v335, 8
      %v337 = vadd.s32 %v335, 16
      %v338 = vadd.s32 %v335, 24
      %v339 = vadd.s32 %v335, 32
      %v340 = vadd.s32 %v335, 40
      %v341 = vadd.s32 %v335, 48
      %v342 = vadd.s32 %v335, 56
      %v343 = vadd.s32 %v335, 64
      %v344 = vadd.s32 %v335, 72
      %v345 = vadd.s32 %v335, 80
      %v346 = vadd.s32 %v335, 88
      %v347 = vadd.s32 %v335, 96
      %v348 = vadd.s32 %v335, 104
      %v349 = vadd.s32 %v335, 112
      %v350 = vadd.s32 %v335, 120
      %v351 = vadd.s32 %v335, 128
      %v352 = vadd.s32 %v335, 136
      %v353 = vadd.s32 %v335, 144
      %v354 = vadd.s32 %v335, 152
      %v355 = vadd.s32 %v335, 160
      %v356 = vadd.s32 %v335, 168
      %v357 = vadd.s32 %v335, 176
      %v358 = vadd.s32 %v335, 184
      %v359 = vadd.s32 %v335, 192
      %v360 = vadd.s32 %v335, 200
      %v361 = vadd.s32 %v335, 208
      %v362 = vadd.s32 %v335, 216
      %v363 = vadd.s32 %v335, 224
      %v364 = vadd.s32 %v335, 232
      %v365 = vadd.s32 %v335, 240
      %v366 = vadd.s32 %v335, 248
      %vm367 = vcmp.lt.s32.totalorder %v335, 0
      %v368 = vsub.s32 0, %v335
      %v369 = vsel %vm367, %v368, %v335
      %v370 = vshrl.u32 %v369, 4
      %v371 = vand.u32 %v369, 15
      %v372 = vsub.s32 0, %v371
      %v373 = vsel %vm367, %v372, %v371
      %vm374 = vcmp.lt.s32.totalorder %v336, 0
      %v375 = vsub.s32 0, %v336
      %v376 = vsel %vm374, %v375, %v336
      %v377 = vshrl.u32 %v376, 4
      %v378 = vand.u32 %v376, 15
      %v379 = vsub.s32 0, %v378
      %v380 = vsel %vm374, %v379, %v378
      %vm381 = vcmp.lt.s32.totalorder %v337, 0
      %v382 = vsub.s32 0, %v337
      %v383 = vsel %vm381, %v382, %v337
      %v384 = vshrl.u32 %v383, 4
      %v385 = vand.u32 %v383, 15
      %v386 = vsub.s32 0, %v385
      %v387 = vsel %vm381, %v386, %v385
      %vm388 = vcmp.lt.s32.totalorder %v338, 0
      %v389 = vsub.s32 0, %v338
      %v390 = vsel %vm388, %v389, %v338
      %v391 = vshrl.u32 %v390, 4
      %v392 = vand.u32 %v390, 15
      %v393 = vsub.s32 0, %v392
      %v394 = vsel %vm388, %v393, %v392
      %vm395 = vcmp.lt.s32.totalorder %v339, 0
      %v396 = vsub.s32 0, %v339
      %v397 = vsel %vm395, %v396, %v339
      %v398 = vshrl.u32 %v397, 4
      %v399 = vand.u32 %v397, 15
      %v400 = vsub.s32 0, %v399
      %v401 = vsel %vm395, %v400, %v399
      %vm402 = vcmp.lt.s32.totalorder %v340, 0
      %v403 = vsub.s32 0, %v340
      %v404 = vsel %vm402, %v403, %v340
      %v405 = vshrl.u32 %v404, 4
      %v406 = vand.u32 %v404, 15
      %v407 = vsub.s32 0, %v406
      %v408 = vsel %vm402, %v407, %v406
      %vm409 = vcmp.lt.s32.totalorder %v341, 0
      %v410 = vsub.s32 0, %v341
      %v411 = vsel %vm409, %v410, %v341
      %v412 = vshrl.u32 %v411, 4
      %v413 = vand.u32 %v411, 15
      %v414 = vsub.s32 0, %v413
      %v415 = vsel %vm409, %v414, %v413
      %vm416 = vcmp.lt.s32.totalorder %v342, 0
      %v417 = vsub.s32 0, %v342
      %v418 = vsel %vm416, %v417, %v342
      %v419 = vshrl.u32 %v418, 4
      %v420 = vand.u32 %v418, 15
      %v421 = vsub.s32 0, %v420
      %v422 = vsel %vm416, %v421, %v420
      %vm423 = vcmp.lt.s32.totalorder %v343, 0
      %v424 = vsub.s32 0, %v343
      %v425 = vsel %vm423, %v424, %v343
      %v426 = vshrl.u32 %v425, 4
      %v427 = vand.u32 %v425, 15
      %v428 = vsub.s32 0, %v427
      %v429 = vsel %vm423, %v428, %v427
      %vm430 = vcmp.lt.s32.totalorder %v344, 0
      %v431 = vsub.s32 0, %v344
      %v432 = vsel %vm430, %v431, %v344
      %v433 = vshrl.u32 %v432, 4
      %v434 = vand.u32 %v432, 15
      %v435 = vsub.s32 0, %v434
      %v436 = vsel %vm430, %v435, %v434
      %vm437 = vcmp.lt.s32.totalorder %v345, 0
      %v438 = vsub.s32 0, %v345
      %v439 = vsel %vm437, %v438, %v345
      %v440 = vshrl.u32 %v439, 4
      %v441 = vand.u32 %v439, 15
      %v442 = vsub.s32 0, %v441
      %v443 = vsel %vm437, %v442, %v441
      %vm444 = vcmp.lt.s32.totalorder %v346, 0
      %v445 = vsub.s32 0, %v346
      %v446 = vsel %vm444, %v445, %v346
      %v447 = vshrl.u32 %v446, 4
      %v448 = vand.u32 %v446, 15
      %v449 = vsub.s32 0, %v448
      %v450 = vsel %vm444, %v449, %v448
      %vm451 = vcmp.lt.s32.totalorder %v347, 0
      %v452 = vsub.s32 0, %v347
      %v453 = vsel %vm451, %v452, %v347
      %v454 = vshrl.u32 %v453, 4
      %v455 = vand.u32 %v453, 15
      %v456 = vsub.s32 0, %v455
      %v457 = vsel %vm451, %v456, %v455
      %vm458 = vcmp.lt.s32.totalorder %v348, 0
      %v459 = vsub.s32 0, %v348
      %v460 = vsel %vm458, %v459, %v348
      %v461 = vshrl.u32 %v460, 4
      %v462 = vand.u32 %v460, 15
      %v463 = vsub.s32 0, %v462
      %v464 = vsel %vm458, %v463, %v462
      %vm465 = vcmp.lt.s32.totalorder %v349, 0
      %v466 = vsub.s32 0, %v349
      %v467 = vsel %vm465, %v466, %v349
      %v468 = vshrl.u32 %v467, 4
      %v469 = vand.u32 %v467, 15
      %v470 = vsub.s32 0, %v469
      %v471 = vsel %vm465, %v470, %v469
      %vm472 = vcmp.lt.s32.totalorder %v350, 0
      %v473 = vsub.s32 0, %v350
      %v474 = vsel %vm472, %v473, %v350
      %v475 = vshrl.u32 %v474, 4
      %v476 = vand.u32 %v474, 15
      %v477 = vsub.s32 0, %v476
      %v478 = vsel %vm472, %v477, %v476
      %vm479 = vcmp.lt.s32.totalorder %v351, 0
      %v480 = vsub.s32 0, %v351
      %v481 = vsel %vm479, %v480, %v351
      %v482 = vshrl.u32 %v481, 4
      %v483 = vand.u32 %v481, 15
      %v484 = vsub.s32 0, %v483
      %v485 = vsel %vm479, %v484, %v483
      %vm486 = vcmp.lt.s32.totalorder %v352, 0
      %v487 = vsub.s32 0, %v352
      %v488 = vsel %vm486, %v487, %v352
      %v489 = vshrl.u32 %v488, 4
      %v490 = vand.u32 %v488, 15
      %v491 = vsub.s32 0, %v490
      %v492 = vsel %vm486, %v491, %v490
      %vm493 = vcmp.lt.s32.totalorder %v353, 0
      %v494 = vsub.s32 0, %v353
      %v495 = vsel %vm493, %v494, %v353
      %v496 = vshrl.u32 %v495, 4
      %v497 = vand.u32 %v495, 15
      %v498 = vsub.s32 0, %v497
      %v499 = vsel %vm493, %v498, %v497
      %vm500 = vcmp.lt.s32.totalorder %v354, 0
      %v501 = vsub.s32 0, %v354
      %v502 = vsel %vm500, %v501, %v354
      %v503 = vshrl.u32 %v502, 4
      %v504 = vand.u32 %v502, 15
      %v505 = vsub.s32 0, %v504
      %v506 = vsel %vm500, %v505, %v504
      %vm507 = vcmp.lt.s32.totalorder %v355, 0
      %v508 = vsub.s32 0, %v355
      %v509 = vsel %vm507, %v508, %v355
      %v510 = vshrl.u32 %v509, 4
      %v511 = vand.u32 %v509, 15
      %v512 = vsub.s32 0, %v511
      %v513 = vsel %vm507, %v512, %v511
      %vm514 = vcmp.lt.s32.totalorder %v356, 0
      %v515 = vsub.s32 0, %v356
      %v516 = vsel %vm514, %v515, %v356
      %v517 = vshrl.u32 %v516, 4
      %v518 = vand.u32 %v516, 15
      %v519 = vsub.s32 0, %v518
      %v520 = vsel %vm514, %v519, %v518
      %vm521 = vcmp.lt.s32.totalorder %v357, 0
      %v522 = vsub.s32 0, %v357
      %v523 = vsel %vm521, %v522, %v357
      %v524 = vshrl.u32 %v523, 4
      %v525 = vand.u32 %v523, 15
      %v526 = vsub.s32 0, %v525
      %v527 = vsel %vm521, %v526, %v525
      %vm528 = vcmp.lt.s32.totalorder %v358, 0
      %v529 = vsub.s32 0, %v358
      %v530 = vsel %vm528, %v529, %v358
      %v531 = vshrl.u32 %v530, 4
      %v532 = vand.u32 %v530, 15
      %v533 = vsub.s32 0, %v532
      %v534 = vsel %vm528, %v533, %v532
      %vm535 = vcmp.lt.s32.totalorder %v359, 0
      %v536 = vsub.s32 0, %v359
      %v537 = vsel %vm535, %v536, %v359
      %v538 = vshrl.u32 %v537, 4
      %v539 = vand.u32 %v537, 15
      %v540 = vsub.s32 0, %v539
      %v541 = vsel %vm535, %v540, %v539
      %vm542 = vcmp.lt.s32.totalorder %v360, 0
      %v543 = vsub.s32 0, %v360
      %v544 = vsel %vm542, %v543, %v360
      %v545 = vshrl.u32 %v544, 4
      %v546 = vand.u32 %v544, 15
      %v547 = vsub.s32 0, %v546
      %v548 = vsel %vm542, %v547, %v546
      %vm549 = vcmp.lt.s32.totalorder %v361, 0
      %v550 = vsub.s32 0, %v361
      %v551 = vsel %vm549, %v550, %v361
      %v552 = vshrl.u32 %v551, 4
      %v553 = vand.u32 %v551, 15
      %v554 = vsub.s32 0, %v553
      %v555 = vsel %vm549, %v554, %v553
      %vm556 = vcmp.lt.s32.totalorder %v362, 0
      %v557 = vsub.s32 0, %v362
      %v558 = vsel %vm556, %v557, %v362
      %v559 = vshrl.u32 %v558, 4
      %v560 = vand.u32 %v558, 15
      %v561 = vsub.s32 0, %v560
      %v562 = vsel %vm556, %v561, %v560
      %vm563 = vcmp.lt.s32.totalorder %v363, 0
      %v564 = vsub.s32 0, %v363
      %v565 = vsel %vm563, %v564, %v363
      %v566 = vshrl.u32 %v565, 4
      %v567 = vand.u32 %v565, 15
      %v568 = vsub.s32 0, %v567
      %v569 = vsel %vm563, %v568, %v567
      %vm570 = vcmp.lt.s32.totalorder %v364, 0
      %v571 = vsub.s32 0, %v364
      %v572 = vsel %vm570, %v571, %v364
      %v573 = vshrl.u32 %v572, 4
      %v574 = vand.u32 %v572, 15
      %v575 = vsub.s32 0, %v574
      %v576 = vsel %vm570, %v575, %v574
      %vm577 = vcmp.lt.s32.totalorder %v365, 0
      %v578 = vsub.s32 0, %v365
      %v579 = vsel %vm577, %v578, %v365
      %v580 = vshrl.u32 %v579, 4
      %v581 = vand.u32 %v579, 15
      %v582 = vsub.s32 0, %v581
      %v583 = vsel %vm577, %v582, %v581
      %vm584 = vcmp.lt.s32.totalorder %v366, 0
      %v585 = vsub.s32 0, %v366
      %v586 = vsel %vm584, %v585, %v366
      %v587 = vshrl.u32 %v586, 4
      %v588 = vand.u32 %v586, 15
      %v589 = vsub.s32 0, %v588
      %v590 = vsel %vm584, %v589, %v588
      %vm591 = vcmp.ne.s32.totalorder %v373, 0
      %vm592 = vcmp.ne.s32.totalorder %v380, 0
      %vm593 = vcmp.ne.s32.totalorder %v387, 0
      %vm594 = vcmp.ne.s32.totalorder %v394, 0
      %vm595 = vcmp.ne.s32.totalorder %v401, 0
      %vm596 = vcmp.ne.s32.totalorder %v408, 0
      %vm597 = vcmp.ne.s32.totalorder %v415, 0
      %vm598 = vcmp.ne.s32.totalorder %v422, 0
      %vm599 = vcmp.ne.s32.totalorder %v429, 0
      %vm600 = vcmp.ne.s32.totalorder %v436, 0
      %vm601 = vcmp.ne.s32.totalorder %v443, 0
      %vm602 = vcmp.ne.s32.totalorder %v450, 0
      %vm603 = vcmp.ne.s32.totalorder %v457, 0
      %vm604 = vcmp.ne.s32.totalorder %v464, 0
      %vm605 = vcmp.ne.s32.totalorder %v471, 0
      %vm606 = vcmp.ne.s32.totalorder %v478, 0
      %vm607 = vcmp.ne.s32.totalorder %v485, 0
      %vm608 = vcmp.ne.s32.totalorder %v492, 0
      %vm609 = vcmp.ne.s32.totalorder %v499, 0
      %vm610 = vcmp.ne.s32.totalorder %v506, 0
      %vm611 = vcmp.ne.s32.totalorder %v513, 0
      %vm612 = vcmp.ne.s32.totalorder %v520, 0
      %vm613 = vcmp.ne.s32.totalorder %v527, 0
      %vm614 = vcmp.ne.s32.totalorder %v534, 0
      %vm615 = vcmp.ne.s32.totalorder %v541, 0
      %vm616 = vcmp.ne.s32.totalorder %v548, 0
      %vm617 = vcmp.ne.s32.totalorder %v555, 0
      %vm618 = vcmp.ne.s32.totalorder %v562, 0
      %vm619 = vcmp.ne.s32.totalorder %v569, 0
      %vm620 = vcmp.ne.s32.totalorder %v576, 0
      %vm621 = vcmp.ne.s32.totalorder %v583, 0
      %vm622 = vcmp.ne.s32.totalorder %v590, 0
      %vm623 = vcmp.lt.s32.totalorder %v373, 0
      %vm624 = vcmp.lt.s32.totalorder %v380, 0
      %vm625 = vcmp.lt.s32.totalorder %v387, 0
      %vm626 = vcmp.lt.s32.totalorder %v394, 0
      %vm627 = vcmp.lt.s32.totalorder %v401, 0
      %vm628 = vcmp.lt.s32.totalorder %v408, 0
      %vm629 = vcmp.lt.s32.totalorder %v415, 0
      %vm630 = vcmp.lt.s32.totalorder %v422, 0
      %vm631 = vcmp.lt.s32.totalorder %v429, 0
      %vm632 = vcmp.lt.s32.totalorder %v436, 0
      %vm633 = vcmp.lt.s32.totalorder %v443, 0
      %vm634 = vcmp.lt.s32.totalorder %v450, 0
      %vm635 = vcmp.lt.s32.totalorder %v457, 0
      %vm636 = vcmp.lt.s32.totalorder %v464, 0
      %vm637 = vcmp.lt.s32.totalorder %v471, 0
      %vm638 = vcmp.lt.s32.totalorder %v478, 0
      %vm639 = vcmp.lt.s32.totalorder %v485, 0
      %vm640 = vcmp.lt.s32.totalorder %v492, 0
      %vm641 = vcmp.lt.s32.totalorder %v499, 0
      %vm642 = vcmp.lt.s32.totalorder %v506, 0
      %vm643 = vcmp.lt.s32.totalorder %v513, 0
      %vm644 = vcmp.lt.s32.totalorder %v520, 0
      %vm645 = vcmp.lt.s32.totalorder %v527, 0
      %vm646 = vcmp.lt.s32.totalorder %v534, 0
      %vm647 = vcmp.lt.s32.totalorder %v541, 0
      %vm648 = vcmp.lt.s32.totalorder %v548, 0
      %vm649 = vcmp.lt.s32.totalorder %v555, 0
      %vm650 = vcmp.lt.s32.totalorder %v562, 0
      %vm651 = vcmp.lt.s32.totalorder %v569, 0
      %vm652 = vcmp.lt.s32.totalorder %v576, 0
      %vm653 = vcmp.lt.s32.totalorder %v583, 0
      %vm654 = vcmp.lt.s32.totalorder %v590, 0
      %vm655 = vmand %vm623, %vm591
      %vm656 = vmand %vm624, %vm592
      %vm657 = vmand %vm625, %vm593
      %vm658 = vmand %vm626, %vm594
      %vm659 = vmand %vm627, %vm595
      %vm660 = vmand %vm628, %vm596
      %vm661 = vmand %vm629, %vm597
      %vm662 = vmand %vm630, %vm598
      %vm663 = vmand %vm631, %vm599
      %vm664 = vmand %vm632, %vm600
      %vm665 = vmand %vm633, %vm601
      %vm666 = vmand %vm634, %vm602
      %vm667 = vmand %vm635, %vm603
      %vm668 = vmand %vm636, %vm604
      %vm669 = vmand %vm637, %vm605
      %vm670 = vmand %vm638, %vm606
      %vm671 = vmand %vm639, %vm607
      %vm672 = vmand %vm640, %vm608
      %vm673 = vmand %vm641, %vm609
      %vm674 = vmand %vm642, %vm610
      %vm675 = vmand %vm643, %vm611
      %vm676 = vmand %vm644, %vm612
      %vm677 = vmand %vm645, %vm613
      %vm678 = vmand %vm646, %vm614
      %vm679 = vmand %vm647, %vm615
      %vm680 = vmand %vm648, %vm616
      %vm681 = vmand %vm649, %vm617
      %vm682 = vmand %vm650, %vm618
      %vm683 = vmand %vm651, %vm619
      %vm684 = vmand %vm652, %vm620
      %vm685 = vmand %vm653, %vm621
      %vm686 = vmand %vm654, %vm622
      %v687 = vadd.s32 %v373, 16
      %v688 = vadd.s32 %v380, 16
      %v689 = vadd.s32 %v387, 16
      %v690 = vadd.s32 %v394, 16
      %v691 = vadd.s32 %v401, 16
      %v692 = vadd.s32 %v408, 16
      %v693 = vadd.s32 %v415, 16
      %v694 = vadd.s32 %v422, 16
      %v695 = vadd.s32 %v429, 16
      %v696 = vadd.s32 %v436, 16
      %v697 = vadd.s32 %v443, 16
      %v698 = vadd.s32 %v450, 16
      %v699 = vadd.s32 %v457, 16
      %v700 = vadd.s32 %v464, 16
      %v701 = vadd.s32 %v471, 16
      %v702 = vadd.s32 %v478, 16
      %v703 = vadd.s32 %v485, 16
      %v704 = vadd.s32 %v492, 16
      %v705 = vadd.s32 %v499, 16
      %v706 = vadd.s32 %v506, 16
      %v707 = vadd.s32 %v513, 16
      %v708 = vadd.s32 %v520, 16
      %v709 = vadd.s32 %v527, 16
      %v710 = vadd.s32 %v534, 16
      %v711 = vadd.s32 %v541, 16
      %v712 = vadd.s32 %v548, 16
      %v713 = vadd.s32 %v555, 16
      %v714 = vadd.s32 %v562, 16
      %v715 = vadd.s32 %v569, 16
      %v716 = vadd.s32 %v576, 16
      %v717 = vadd.s32 %v583, 16
      %v718 = vadd.s32 %v590, 16
      %v719 = vsel %vm655, %v687, %v373
      %v720 = vsel %vm656, %v688, %v380
      %v721 = vsel %vm657, %v689, %v387
      %v722 = vsel %vm658, %v690, %v394
      %v723 = vsel %vm659, %v691, %v401
      %v724 = vsel %vm660, %v692, %v408
      %v725 = vsel %vm661, %v693, %v415
      %v726 = vsel %vm662, %v694, %v422
      %v727 = vsel %vm663, %v695, %v429
      %v728 = vsel %vm664, %v696, %v436
      %v729 = vsel %vm665, %v697, %v443
      %v730 = vsel %vm666, %v698, %v450
      %v731 = vsel %vm667, %v699, %v457
      %v732 = vsel %vm668, %v700, %v464
      %v733 = vsel %vm669, %v701, %v471
      %v734 = vsel %vm670, %v702, %v478
      %v735 = vsel %vm671, %v703, %v485
      %v736 = vsel %vm672, %v704, %v492
      %v737 = vsel %vm673, %v705, %v499
      %v738 = vsel %vm674, %v706, %v506
      %v739 = vsel %vm675, %v707, %v513
      %v740 = vsel %vm676, %v708, %v520
      %v741 = vsel %vm677, %v709, %v527
      %v742 = vsel %vm678, %v710, %v534
      %v743 = vsel %vm679, %v711, %v541
      %v744 = vsel %vm680, %v712, %v548
      %v745 = vsel %vm681, %v713, %v555
      %v746 = vsel %vm682, %v714, %v562
      %v747 = vsel %vm683, %v715, %v569
      %v748 = vsel %vm684, %v716, %v576
      %v749 = vsel %vm685, %v717, %v583
      %v750 = vsel %vm686, %v718, %v590
      %vm751 = vcmp.ge.s32.totalorder %v719, 1
      %vm752 = vcmp.ge.s32.totalorder %v720, 1
      %vm753 = vcmp.ge.s32.totalorder %v721, 1
      %vm754 = vcmp.ge.s32.totalorder %v722, 1
      %vm755 = vcmp.ge.s32.totalorder %v723, 1
      %vm756 = vcmp.ge.s32.totalorder %v724, 1
      %vm757 = vcmp.ge.s32.totalorder %v725, 1
      %vm758 = vcmp.ge.s32.totalorder %v726, 1
      %vm759 = vcmp.ge.s32.totalorder %v727, 1
      %vm760 = vcmp.ge.s32.totalorder %v728, 1
      %vm761 = vcmp.ge.s32.totalorder %v729, 1
      %vm762 = vcmp.ge.s32.totalorder %v730, 1
      %vm763 = vcmp.ge.s32.totalorder %v731, 1
      %vm764 = vcmp.ge.s32.totalorder %v732, 1
      %vm765 = vcmp.ge.s32.totalorder %v733, 1
      %vm766 = vcmp.ge.s32.totalorder %v734, 1
      %vm767 = vcmp.ge.s32.totalorder %v735, 1
      %vm768 = vcmp.ge.s32.totalorder %v736, 1
      %vm769 = vcmp.ge.s32.totalorder %v737, 1
      %vm770 = vcmp.ge.s32.totalorder %v738, 1
      %vm771 = vcmp.ge.s32.totalorder %v739, 1
      %vm772 = vcmp.ge.s32.totalorder %v740, 1
      %vm773 = vcmp.ge.s32.totalorder %v741, 1
      %vm774 = vcmp.ge.s32.totalorder %v742, 1
      %vm775 = vcmp.ge.s32.totalorder %v743, 1
      %vm776 = vcmp.ge.s32.totalorder %v744, 1
      %vm777 = vcmp.ge.s32.totalorder %v745, 1
      %vm778 = vcmp.ge.s32.totalorder %v746, 1
      %vm779 = vcmp.ge.s32.totalorder %v747, 1
      %vm780 = vcmp.ge.s32.totalorder %v748, 1
      %vm781 = vcmp.ge.s32.totalorder %v749, 1
      %vm782 = vcmp.ge.s32.totalorder %v750, 1
      %vm783 = vcmp.le.s32.totalorder %v719, 14
      %vm784 = vcmp.le.s32.totalorder %v720, 14
      %vm785 = vcmp.le.s32.totalorder %v721, 14
      %vm786 = vcmp.le.s32.totalorder %v722, 14
      %vm787 = vcmp.le.s32.totalorder %v723, 14
      %vm788 = vcmp.le.s32.totalorder %v724, 14
      %vm789 = vcmp.le.s32.totalorder %v725, 14
      %vm790 = vcmp.le.s32.totalorder %v726, 14
      %vm791 = vcmp.le.s32.totalorder %v727, 14
      %vm792 = vcmp.le.s32.totalorder %v728, 14
      %vm793 = vcmp.le.s32.totalorder %v729, 14
      %vm794 = vcmp.le.s32.totalorder %v730, 14
      %vm795 = vcmp.le.s32.totalorder %v731, 14
      %vm796 = vcmp.le.s32.totalorder %v732, 14
      %vm797 = vcmp.le.s32.totalorder %v733, 14
      %vm798 = vcmp.le.s32.totalorder %v734, 14
      %vm799 = vcmp.le.s32.totalorder %v735, 14
      %vm800 = vcmp.le.s32.totalorder %v736, 14
      %vm801 = vcmp.le.s32.totalorder %v737, 14
      %vm802 = vcmp.le.s32.totalorder %v738, 14
      %vm803 = vcmp.le.s32.totalorder %v739, 14
      %vm804 = vcmp.le.s32.totalorder %v740, 14
      %vm805 = vcmp.le.s32.totalorder %v741, 14
      %vm806 = vcmp.le.s32.totalorder %v742, 14
      %vm807 = vcmp.le.s32.totalorder %v743, 14
      %vm808 = vcmp.le.s32.totalorder %v744, 14
      %vm809 = vcmp.le.s32.totalorder %v745, 14
      %vm810 = vcmp.le.s32.totalorder %v746, 14
      %vm811 = vcmp.le.s32.totalorder %v747, 14
      %vm812 = vcmp.le.s32.totalorder %v748, 14
      %vm813 = vcmp.le.s32.totalorder %v749, 14
      %vm814 = vcmp.le.s32.totalorder %v750, 14
      %v815 = vld [vmem:[%s327] sm:$0xf]
      %v816 = vld [vmem:[%s327 + $0x4] sm:$0xf]
      %v817 = vld [vmem:[%s327 + $0x8] sm:$0xf]
      %v818 = vld [vmem:[%s327 + $0xc] sm:$0xf]
      %v819 = vld [vmem:[%s327 + $0x10] sm:$0xf]
      %v820 = vld [vmem:[%s327 + $0x14] sm:$0xf]
      %v821 = vld [vmem:[%s327 + $0x18] sm:$0xf]
      %v822 = vld [vmem:[%s327 + $0x1c] sm:$0xf]
      %v823 = vld [vmem:[%s327 + $0x20] sm:$0xf]
      %v824 = vld [vmem:[%s327 + $0x24] sm:$0xf]
      %v825 = vld [vmem:[%s327 + $0x28] sm:$0xf]
      %v826 = vld [vmem:[%s327 + $0x2c] sm:$0xf]
      %v827 = vld [vmem:[%s327 + $0x30] sm:$0xf]
      %v828 = vld [vmem:[%s327 + $0x34] sm:$0xf]
      %v829 = vld [vmem:[%s327 + $0x38] sm:$0xf]
      %v830 = vld [vmem:[%s327 + $0x3c] sm:$0xf]
      %v831 = vld [vmem:[%s327 + $0x40] sm:$0xf]
      %v832 = vld [vmem:[%s327 + $0x44] sm:$0xf]
      %v833 = vld [vmem:[%s327 + $0x48] sm:$0xf]
      %v834 = vld [vmem:[%s327 + $0x4c] sm:$0xf]
      %v835 = vld [vmem:[%s327 + $0x50] sm:$0xf]
      %v836 = vld [vmem:[%s327 + $0x54] sm:$0xf]
      %v837 = vld [vmem:[%s327 + $0x58] sm:$0xf]
      %v838 = vld [vmem:[%s327 + $0x5c] sm:$0xf]
      %v839 = vld [vmem:[%s327 + $0x60] sm:$0xf]
      %v840 = vld [vmem:[%s327 + $0x64] sm:$0xf]
      %v841 = vld [vmem:[%s327 + $0x68] sm:$0xf]
      %v842 = vld [vmem:[%s327 + $0x6c] sm:$0xf]
      %v843 = vld [vmem:[%s327 + $0x70] sm:$0xf]
      %v844 = vld [vmem:[%s327 + $0x74] sm:$0xf]
      %v845 = vld [vmem:[%s327 + $0x78] sm:$0xf]
      %v846 = vld [vmem:[%s327 + $0x7c] sm:$0xf]
      %v847 = vld [vmem:[%s1] sm:$0xf]
      %v848 = vld [vmem:[%s1 + $0x4] sm:$0xf]
      %v849 = vld [vmem:[%s1 + $0x8] sm:$0xf]
      %v850 = vld [vmem:[%s1 + $0xc] sm:$0xf]
      %v851 = vld [vmem:[%s1 + $0x10] sm:$0xf]
      %v852 = vld [vmem:[%s1 + $0x14] sm:$0xf]
      %v853 = vld [vmem:[%s1 + $0x18] sm:$0xf]
      %v854 = vld [vmem:[%s1 + $0x1c] sm:$0xf]
      %v855 = vld [vmem:[%s1 + $0x20] sm:$0xf]
      %v856 = vld [vmem:[%s1 + $0x24] sm:$0xf]
      %v857 = vld [vmem:[%s1 + $0x28] sm:$0xf]
      %v858 = vld [vmem:[%s1 + $0x2c] sm:$0xf]
      %v859 = vld [vmem:[%s1 + $0x30] sm:$0xf]
      %v860 = vld [vmem:[%s1 + $0x34] sm:$0xf]
      %v861 = vld [vmem:[%s1 + $0x38] sm:$0xf]
      %v862 = vld [vmem:[%s1 + $0x3c] sm:$0xf]
      %v863 = vld [vmem:[%s2] sm:$0x1]
      %v865 = vlaneseq
      %v866 = vshrl.u32 %v865, 7
      %v867 = vsub.s32 0, %v866
      %v868 = vrot.slane %v863, %v867
      %v902 = vunpack.c.l.b16 %v815
      %v903 = vunpack.c.l.b16 %v816
      %v904 = vunpack.c.l.b16 %v817
      %v905 = vunpack.c.l.b16 %v818
      %v906 = vunpack.c.l.b16 %v819
      %v907 = vunpack.c.l.b16 %v820
      %v908 = vunpack.c.l.b16 %v821
      %v909 = vunpack.c.l.b16 %v822
      %v910 = vunpack.c.l.b16 %v823
      %v911 = vunpack.c.l.b16 %v824
      %v912 = vunpack.c.l.b16 %v825
      %v913 = vunpack.c.l.b16 %v826
      %v914 = vunpack.c.l.b16 %v827
      %v915 = vunpack.c.l.b16 %v828
      %v916 = vunpack.c.l.b16 %v829
      %v917 = vunpack.c.l.b16 %v830
      %v918 = vunpack.c.l.b16 %v831
      %v919 = vunpack.c.l.b16 %v832
      %v920 = vunpack.c.l.b16 %v833
      %v921 = vunpack.c.l.b16 %v834
      %v922 = vunpack.c.l.b16 %v835
      %v923 = vunpack.c.l.b16 %v836
      %v924 = vunpack.c.l.b16 %v837
      %v925 = vunpack.c.l.b16 %v838
      %v926 = vunpack.c.l.b16 %v839
      %v927 = vunpack.c.l.b16 %v840
      %v928 = vunpack.c.l.b16 %v841
      %v929 = vunpack.c.l.b16 %v842
      %v930 = vunpack.c.l.b16 %v843
      %v931 = vunpack.c.l.b16 %v844
      %v932 = vunpack.c.l.b16 %v845
      %v933 = vunpack.c.l.b16 %v846
      %v934 = vpack.c.b16 %v903, %v902
      %v935 = vpack.c.b16 %v905, %v904
      %v936 = vpack.c.b16 %v907, %v906
      %v937 = vpack.c.b16 %v909, %v908
      %v938 = vpack.c.b16 %v911, %v910
      %v939 = vpack.c.b16 %v913, %v912
      %v940 = vpack.c.b16 %v915, %v914
      %v941 = vpack.c.b16 %v917, %v916
      %v942 = vpack.c.b16 %v919, %v918
      %v943 = vpack.c.b16 %v921, %v920
      %v944 = vpack.c.b16 %v923, %v922
      %v945 = vpack.c.b16 %v925, %v924
      %v946 = vpack.c.b16 %v927, %v926
      %v947 = vpack.c.b16 %v929, %v928
      %v948 = vpack.c.b16 %v931, %v930
      %v949 = vpack.c.b16 %v933, %v932
      %v982 = vunpack.c.l.b16 %v847
      %v983 = vunpack.c.l.b16 %v848
      %v984 = vunpack.c.l.b16 %v849
      %v985 = vunpack.c.l.b16 %v850
      %v986 = vunpack.c.l.b16 %v851
      %v987 = vunpack.c.l.b16 %v852
      %v988 = vunpack.c.l.b16 %v853
      %v989 = vunpack.c.l.b16 %v854
      %v990 = vunpack.c.l.b16 %v855
      %v991 = vunpack.c.l.b16 %v856
      %v992 = vunpack.c.l.b16 %v857
      %v993 = vunpack.c.l.b16 %v858
      %v994 = vunpack.c.l.b16 %v859
      %v995 = vunpack.c.l.b16 %v860
      %v996 = vunpack.c.l.b16 %v861
      %v997 = vunpack.c.l.b16 %v862
      %v998 = vpack.c.b16 %v983, %v982
      %v999 = vpack.c.b16 %v985, %v984
      %v1000 = vpack.c.b16 %v987, %v986
      %v1001 = vpack.c.b16 %v989, %v988
      %v1002 = vpack.c.b16 %v991, %v990
      %v1003 = vpack.c.b16 %v993, %v992
      %v1004 = vpack.c.b16 %v995, %v994
      %v1005 = vpack.c.b16 %v997, %v996
      %1014 = vmatprep.subr.bf16.mxu0 0
      %1015 = vmatpush1.bf16.msra.mxu0 %v998
      %1016 = vmatprep.subr.bf16.mxu0 0
      %1017 = vmatpush1.bf16.msra.mxu0 %v999
      %1018 = vmatprep.subr.bf16.mxu0 0
      %1019 = vmatpush1.bf16.msra.mxu0 %v1000
      %1020 = vmatprep.subr.bf16.mxu0 0
      %1021 = vmatpush1.bf16.msra.mxu0 %v1001
      %1022 = vmatprep.subr.bf16.mxu0 0
      %1023 = vmatpush1.bf16.msra.mxu0 %v1002
      %1024 = vmatprep.subr.bf16.mxu0 0
      %1025 = vmatpush1.bf16.msra.mxu0 %v1003
      %1026 = vmatprep.subr.bf16.mxu0 0
      %1027 = vmatpush1.bf16.msra.mxu0 %v1004
      %1028 = vmatprep.subr.bf16.mxu0 0
      %1029 = vmatpush1.bf16.msra.mxu0 %v1005
      %1030 = vmatprep.subr.bf16.mxu0 0
      %1031 = vmatpush1.bf16.msra.mxu0 0
      %1032 = vmatprep.subr.bf16.mxu0 0
      %1033 = vmatpush1.bf16.msra.mxu0 0
      %1034 = vmatprep.subr.bf16.mxu0 0
      %1035 = vmatpush1.bf16.msra.mxu0 0
      %1036 = vmatprep.subr.bf16.mxu0 0
      %1037 = vmatpush1.bf16.msra.mxu0 0
      %1038 = vmatprep.subr.bf16.mxu0 0
      %1039 = vmatpush1.bf16.msra.mxu0 0
      %1040 = vmatprep.subr.bf16.mxu0 0
      %1041 = vmatpush1.bf16.msra.mxu0 0
      %1042 = vmatprep.subr.bf16.mxu0 0
      %1043 = vmatpush1.bf16.msra.mxu0 0
      %1044 = vmatprep.subr.bf16.mxu0 0
      %1045 = vmatpush1.bf16.msra.mxu0 0
      %1046 = vmatprep.mubr.bf16.mxu0 0
      %1047 = vmatmul.mubr.bf16.gmra.mrb[0].mxu0 %v934
      %v1048 = vpop.f32.mrb[0].mxu0
      %v1049 = vadd.f32 %v868, %v1048
      %v1050 = vpop.f32.mrb[0].mxu0
      %v1051 = vpop.f32.mrb[0].mxu0
      %v1052 = vadd.f32 %v868, %v1051
      %v1053 = vpop.f32.mrb[0].mxu0
      %1054 = vmatprep.mubr.bf16.mxu0 0
      %1055 = vmatmul.mubr.bf16.gmra.mrb[0].mxu0 %v935
      %v1056 = vpop.f32.mrb[0].mxu0
      %v1057 = vadd.f32 %v868, %v1056
      %v1058 = vpop.f32.mrb[0].mxu0
      %v1059 = vpop.f32.mrb[0].mxu0
      %v1060 = vadd.f32 %v868, %v1059
      %v1061 = vpop.f32.mrb[0].mxu0
      %1062 = vmatprep.mubr.bf16.mxu0 0
      %1063 = vmatmul.mubr.bf16.gmra.mrb[0].mxu0 %v936
      %v1064 = vpop.f32.mrb[0].mxu0
      %v1065 = vadd.f32 %v868, %v1064
      %v1066 = vpop.f32.mrb[0].mxu0
      %v1067 = vpop.f32.mrb[0].mxu0
      %v1068 = vadd.f32 %v868, %v1067
      %v1069 = vpop.f32.mrb[0].mxu0
      %1070 = vmatprep.mubr.bf16.mxu0 0
      %1071 = vmatmul.mubr.bf16.gmra.mrb[0].mxu0 %v937
      %v1072 = vpop.f32.mrb[0].mxu0
      %v1073 = vadd.f32 %v868, %v1072
      %v1074 = vpop.f32.mrb[0].mxu0
      %v1075 = vpop.f32.mrb[0].mxu0
      %v1076 = vadd.f32 %v868, %v1075
      %v1077 = vpop.f32.mrb[0].mxu0
      %1078 = vmatprep.mubr.bf16.mxu0 0
      %1079 = vmatmul.mubr.bf16.gmra.mrb[0].mxu0 %v938
      %v1080 = vpop.f32.mrb[0].mxu0
      %v1081 = vadd.f32 %v868, %v1080
      %v1082 = vpop.f32.mrb[0].mxu0
      %v1083 = vpop.f32.mrb[0].mxu0
      %v1084 = vadd.f32 %v868, %v1083
      %v1085 = vpop.f32.mrb[0].mxu0
      %1086 = vmatprep.mubr.bf16.mxu0 0
      %1087 = vmatmul.mubr.bf16.gmra.mrb[0].mxu0 %v939
      %v1088 = vpop.f32.mrb[0].mxu0
      %v1089 = vadd.f32 %v868, %v1088
      %v1090 = vpop.f32.mrb[0].mxu0
      %v1091 = vpop.f32.mrb[0].mxu0
      %v1092 = vadd.f32 %v868, %v1091
      %v1093 = vpop.f32.mrb[0].mxu0
      %1094 = vmatprep.mubr.bf16.mxu0 0
      %1095 = vmatmul.mubr.bf16.gmra.mrb[0].mxu0 %v940
      %v1096 = vpop.f32.mrb[0].mxu0
      %v1097 = vadd.f32 %v868, %v1096
      %v1098 = vpop.f32.mrb[0].mxu0
      %v1099 = vpop.f32.mrb[0].mxu0
      %v1100 = vadd.f32 %v868, %v1099
      %v1101 = vpop.f32.mrb[0].mxu0
      %1102 = vmatprep.mubr.bf16.mxu0 0
      %1103 = vmatmul.mubr.bf16.gmra.mrb[0].mxu0 %v941
      %v1104 = vpop.f32.mrb[0].mxu0
      %v1105 = vadd.f32 %v868, %v1104
      %v1106 = vpop.f32.mrb[0].mxu0
      %v1107 = vpop.f32.mrb[0].mxu0
      %v1108 = vadd.f32 %v868, %v1107
      %v1109 = vpop.f32.mrb[0].mxu0
      %1110 = vmatprep.mubr.bf16.mxu0 0
      %1111 = vmatmul.mubr.bf16.gmra.mrb[0].mxu0 %v942
      %v1112 = vpop.f32.mrb[0].mxu0
      %v1113 = vadd.f32 %v868, %v1112
      %v1114 = vpop.f32.mrb[0].mxu0
      %v1115 = vpop.f32.mrb[0].mxu0
      %v1116 = vadd.f32 %v868, %v1115
      %v1117 = vpop.f32.mrb[0].mxu0
      %1118 = vmatprep.mubr.bf16.mxu0 0
      %1119 = vmatmul.mubr.bf16.gmra.mrb[0].mxu0 %v943
      %v1120 = vpop.f32.mrb[0].mxu0
      %v1121 = vadd.f32 %v868, %v1120
      %v1122 = vpop.f32.mrb[0].mxu0
      %v1123 = vpop.f32.mrb[0].mxu0
      %v1124 = vadd.f32 %v868, %v1123
      %v1125 = vpop.f32.mrb[0].mxu0
      %1126 = vmatprep.mubr.bf16.mxu0 0
      %1127 = vmatmul.mubr.bf16.gmra.mrb[0].mxu0 %v944
      %v1128 = vpop.f32.mrb[0].mxu0
      %v1129 = vadd.f32 %v868, %v1128
      %v1130 = vpop.f32.mrb[0].mxu0
      %v1131 = vpop.f32.mrb[0].mxu0
      %v1132 = vadd.f32 %v868, %v1131
      %v1133 = vpop.f32.mrb[0].mxu0
      %1134 = vmatprep.mubr.bf16.mxu0 0
      %1135 = vmatmul.mubr.bf16.gmra.mrb[0].mxu0 %v945
      %v1136 = vpop.f32.mrb[0].mxu0
      %v1137 = vadd.f32 %v868, %v1136
      %v1138 = vpop.f32.mrb[0].mxu0
      %v1139 = vpop.f32.mrb[0].mxu0
      %v1140 = vadd.f32 %v868, %v1139
      %v1141 = vpop.f32.mrb[0].mxu0
      %1142 = vmatprep.mubr.bf16.mxu0 0
      %1143 = vmatmul.mubr.bf16.gmra.mrb[0].mxu0 %v946
      %v1144 = vpop.f32.mrb[0].mxu0
      %v1145 = vadd.f32 %v868, %v1144
      %v1146 = vpop.f32.mrb[0].mxu0
      %v1147 = vpop.f32.mrb[0].mxu0
      %v1148 = vadd.f32 %v868, %v1147
      %v1149 = vpop.f32.mrb[0].mxu0
      %1150 = vmatprep.mubr.bf16.mxu0 0
      %1151 = vmatmul.mubr.bf16.gmra.mrb[0].mxu0 %v947
      %v1152 = vpop.f32.mrb[0].mxu0
      %v1153 = vadd.f32 %v868, %v1152
      %v1154 = vpop.f32.mrb[0].mxu0
      %v1155 = vpop.f32.mrb[0].mxu0
      %v1156 = vadd.f32 %v868, %v1155
      %v1157 = vpop.f32.mrb[0].mxu0
      %1158 = vmatprep.mubr.bf16.mxu0 0
      %1159 = vmatmul.mubr.bf16.gmra.mrb[0].mxu0 %v948
      %v1160 = vpop.f32.mrb[0].mxu0
      %v1161 = vadd.f32 %v868, %v1160
      %v1162 = vpop.f32.mrb[0].mxu0
      %v1163 = vpop.f32.mrb[0].mxu0
      %v1164 = vadd.f32 %v868, %v1163
      %v1165 = vpop.f32.mrb[0].mxu0
      %1166 = vmatprep.mubr.bf16.mxu0 0
      %1167 = vmatmul.mubr.bf16.gmra.mrb[0].mxu0 %v949
      %v1168 = vpop.f32.mrb[0].mxu0
      %v1169 = vadd.f32 %v868, %v1168
      %v1170 = vpop.f32.mrb[0].mxu0
      %v1171 = vpop.f32.mrb[0].mxu0
      %v1172 = vadd.f32 %v868, %v1171
      %v1173 = vpop.f32.mrb[0].mxu0
      %1174 = vdwg.mxu0
      %v1175 = vld [vmem:[%s3] sm:$0x1]
      %v1176 = vld [vmem:[%s4] sm:$0x1]
      %v1177 = vadd.f32 %v1049, %v1052
      %v1178 = vadd.f32 %v1177, %v1057
      %v1179 = vadd.f32 %v1178, %v1060
      %v1180 = vadd.f32 %v1179, %v1065
      %v1181 = vadd.f32 %v1180, %v1068
      %v1182 = vadd.f32 %v1181, %v1073
      %v1183 = vadd.f32 %v1182, %v1076
      %v1184 = vadd.f32 %v1183, %v1081
      %v1185 = vadd.f32 %v1184, %v1084
      %v1186 = vadd.f32 %v1185, %v1089
      %v1187 = vadd.f32 %v1186, %v1092
      %v1188 = vadd.f32 %v1187, %v1097
      %v1189 = vadd.f32 %v1188, %v1100
      %v1190 = vadd.f32 %v1189, %v1105
      %v1191 = vadd.f32 %v1190, %v1108
      %v1192 = vadd.f32 %v1191, %v1113
      %v1193 = vadd.f32 %v1192, %v1116
      %v1194 = vadd.f32 %v1193, %v1121
      %v1195 = vadd.f32 %v1194, %v1124
      %v1196 = vadd.f32 %v1195, %v1129
      %v1197 = vadd.f32 %v1196, %v1132
      %v1198 = vadd.f32 %v1197, %v1137
      %v1199 = vadd.f32 %v1198, %v1140
      %v1200 = vadd.f32 %v1199, %v1145
      %v1201 = vadd.f32 %v1200, %v1148
      %v1202 = vadd.f32 %v1201, %v1153
      %v1203 = vadd.f32 %v1202, %v1156
      %v1204 = vadd.f32 %v1203, %v1161
      %v1205 = vadd.f32 %v1204, %v1164
      %v1206 = vadd.f32 %v1205, %v1169
      %v1207 = vadd.f32 %v1206, %v1172
      %v1208 = vrot.slane %v1207, 4
      %v1209 = vadd.f32 %v1207, %v1208
      %v1210 = vrot.slane %v1209, 2
      %v1211 = vadd.f32 %v1209, %v1210
      %v1212 = vrot.slane %v1211, 1
      %v1213 = vadd.f32 %v1211, %v1212
      %v1214 = vmul.f32 %v1213, 0.00390625
      %v1215 = vsub.f32 %v1049, %v1214
      %v1216 = vsub.f32 %v1052, %v1214
      %v1217 = vsub.f32 %v1057, %v1214
      %v1218 = vsub.f32 %v1060, %v1214
      %v1219 = vsub.f32 %v1065, %v1214
      %v1220 = vsub.f32 %v1068, %v1214
      %v1221 = vsub.f32 %v1073, %v1214
      %v1222 = vsub.f32 %v1076, %v1214
      %v1223 = vsub.f32 %v1081, %v1214
      %v1224 = vsub.f32 %v1084, %v1214
      %v1225 = vsub.f32 %v1089, %v1214
      %v1226 = vsub.f32 %v1092, %v1214
      %v1227 = vsub.f32 %v1097, %v1214
      %v1228 = vsub.f32 %v1100, %v1214
      %v1229 = vsub.f32 %v1105, %v1214
      %v1230 = vsub.f32 %v1108, %v1214
      %v1231 = vsub.f32 %v1113, %v1214
      %v1232 = vsub.f32 %v1116, %v1214
      %v1233 = vsub.f32 %v1121, %v1214
      %v1234 = vsub.f32 %v1124, %v1214
      %v1235 = vsub.f32 %v1129, %v1214
      %v1236 = vsub.f32 %v1132, %v1214
      %v1237 = vsub.f32 %v1137, %v1214
      %v1238 = vsub.f32 %v1140, %v1214
      %v1239 = vsub.f32 %v1145, %v1214
      %v1240 = vsub.f32 %v1148, %v1214
      %v1241 = vsub.f32 %v1153, %v1214
      %v1242 = vsub.f32 %v1156, %v1214
      %v1243 = vsub.f32 %v1161, %v1214
      %v1244 = vsub.f32 %v1164, %v1214
      %v1245 = vsub.f32 %v1169, %v1214
      %v1246 = vsub.f32 %v1172, %v1214
      %v1247 = vmul.f32 %v1215, %v1215
      %v1248 = vmul.f32 %v1216, %v1216
      %v1249 = vmul.f32 %v1217, %v1217
      %v1250 = vmul.f32 %v1218, %v1218
      %v1251 = vmul.f32 %v1219, %v1219
      %v1252 = vmul.f32 %v1220, %v1220
      %v1253 = vmul.f32 %v1221, %v1221
      %v1254 = vmul.f32 %v1222, %v1222
      %v1255 = vmul.f32 %v1223, %v1223
      %v1256 = vmul.f32 %v1224, %v1224
      %v1257 = vmul.f32 %v1225, %v1225
      %v1258 = vmul.f32 %v1226, %v1226
      %v1259 = vmul.f32 %v1227, %v1227
      %v1260 = vmul.f32 %v1228, %v1228
      %v1261 = vmul.f32 %v1229, %v1229
      %v1262 = vmul.f32 %v1230, %v1230
      %v1263 = vmul.f32 %v1231, %v1231
      %v1264 = vmul.f32 %v1232, %v1232
      %v1265 = vmul.f32 %v1233, %v1233
      %v1266 = vmul.f32 %v1234, %v1234
      %v1267 = vmul.f32 %v1235, %v1235
      %v1268 = vmul.f32 %v1236, %v1236
      %v1269 = vmul.f32 %v1237, %v1237
      %v1270 = vmul.f32 %v1238, %v1238
      %v1271 = vmul.f32 %v1239, %v1239
      %v1272 = vmul.f32 %v1240, %v1240
      %v1273 = vmul.f32 %v1241, %v1241
      %v1274 = vmul.f32 %v1242, %v1242
      %v1275 = vmul.f32 %v1243, %v1243
      %v1276 = vmul.f32 %v1244, %v1244
      %v1277 = vmul.f32 %v1245, %v1245
      %v1278 = vmul.f32 %v1246, %v1246
      %v1279 = vadd.f32 %v1247, %v1248
      %v1280 = vadd.f32 %v1279, %v1249
      %v1281 = vadd.f32 %v1280, %v1250
      %v1282 = vadd.f32 %v1281, %v1251
      %v1283 = vadd.f32 %v1282, %v1252
      %v1284 = vadd.f32 %v1283, %v1253
      %v1285 = vadd.f32 %v1284, %v1254
      %v1286 = vadd.f32 %v1285, %v1255
      %v1287 = vadd.f32 %v1286, %v1256
      %v1288 = vadd.f32 %v1287, %v1257
      %v1289 = vadd.f32 %v1288, %v1258
      %v1290 = vadd.f32 %v1289, %v1259
      %v1291 = vadd.f32 %v1290, %v1260
      %v1292 = vadd.f32 %v1291, %v1261
      %v1293 = vadd.f32 %v1292, %v1262
      %v1294 = vadd.f32 %v1293, %v1263
      %v1295 = vadd.f32 %v1294, %v1264
      %v1296 = vadd.f32 %v1295, %v1265
      %v1297 = vadd.f32 %v1296, %v1266
      %v1298 = vadd.f32 %v1297, %v1267
      %v1299 = vadd.f32 %v1298, %v1268
      %v1300 = vadd.f32 %v1299, %v1269
      %v1301 = vadd.f32 %v1300, %v1270
      %v1302 = vadd.f32 %v1301, %v1271
      %v1303 = vadd.f32 %v1302, %v1272
      %v1304 = vadd.f32 %v1303, %v1273
      %v1305 = vadd.f32 %v1304, %v1274
      %v1306 = vadd.f32 %v1305, %v1275
      %v1307 = vadd.f32 %v1306, %v1276
      %v1308 = vadd.f32 %v1307, %v1277
      %v1309 = vadd.f32 %v1308, %v1278
      %v1310 = vrot.slane %v1309, 4
      %v1311 = vadd.f32 %v1309, %v1310
      %v1312 = vrot.slane %v1311, 2
      %v1313 = vadd.f32 %v1311, %v1312
      %v1314 = vrot.slane %v1313, 1
      %v1315 = vadd.f32 %v1313, %v1314
      %v1316 = vmul.f32 %v1315, 0.00390625
      %v1317 = vadd.f32 %v1316, 1e-05
      %v1318 = vrsqrt.pop %v1317
      %v1319 = vmul.f32 %v1215, %v1318
      %v1320 = vmul.f32 %v1216, %v1318
      %v1321 = vmul.f32 %v1217, %v1318
      %v1322 = vmul.f32 %v1218, %v1318
      %v1323 = vmul.f32 %v1219, %v1318
      %v1324 = vmul.f32 %v1220, %v1318
      %v1325 = vmul.f32 %v1221, %v1318
      %v1326 = vmul.f32 %v1222, %v1318
      %v1327 = vmul.f32 %v1223, %v1318
      %v1328 = vmul.f32 %v1224, %v1318
      %v1329 = vmul.f32 %v1225, %v1318
      %v1330 = vmul.f32 %v1226, %v1318
      %v1331 = vmul.f32 %v1227, %v1318
      %v1332 = vmul.f32 %v1228, %v1318
      %v1333 = vmul.f32 %v1229, %v1318
      %v1334 = vmul.f32 %v1230, %v1318
      %v1335 = vmul.f32 %v1231, %v1318
      %v1336 = vmul.f32 %v1232, %v1318
      %v1337 = vmul.f32 %v1233, %v1318
      %v1338 = vmul.f32 %v1234, %v1318
      %v1339 = vmul.f32 %v1235, %v1318
      %v1340 = vmul.f32 %v1236, %v1318
      %v1341 = vmul.f32 %v1237, %v1318
      %v1342 = vmul.f32 %v1238, %v1318
      %v1343 = vmul.f32 %v1239, %v1318
      %v1344 = vmul.f32 %v1240, %v1318
      %v1345 = vmul.f32 %v1241, %v1318
      %v1346 = vmul.f32 %v1242, %v1318
      %v1347 = vmul.f32 %v1243, %v1318
      %v1348 = vmul.f32 %v1244, %v1318
      %v1349 = vmul.f32 %v1245, %v1318
      %v1350 = vmul.f32 %v1246, %v1318
      %v1352 = vlaneseq
      %v1353 = vshrl.u32 %v1352, 7
      %v1354 = vsub.s32 0, %v1353
      %v1355 = vrot.slane %v1175, %v1354
      %v1357 = vmul.f32 %v1319, %v1355
      %v1358 = vmul.f32 %v1320, %v1355
      %v1359 = vmul.f32 %v1321, %v1355
      %v1360 = vmul.f32 %v1322, %v1355
      %v1361 = vmul.f32 %v1323, %v1355
      %v1362 = vmul.f32 %v1324, %v1355
      %v1363 = vmul.f32 %v1325, %v1355
      %v1364 = vmul.f32 %v1326, %v1355
      %v1365 = vmul.f32 %v1327, %v1355
      %v1366 = vmul.f32 %v1328, %v1355
      %v1367 = vmul.f32 %v1329, %v1355
      %v1368 = vmul.f32 %v1330, %v1355
      %v1369 = vmul.f32 %v1331, %v1355
      %v1370 = vmul.f32 %v1332, %v1355
      %v1371 = vmul.f32 %v1333, %v1355
      %v1372 = vmul.f32 %v1334, %v1355
      %v1373 = vmul.f32 %v1335, %v1355
      %v1374 = vmul.f32 %v1336, %v1355
      %v1375 = vmul.f32 %v1337, %v1355
      %v1376 = vmul.f32 %v1338, %v1355
      %v1377 = vmul.f32 %v1339, %v1355
      %v1378 = vmul.f32 %v1340, %v1355
      %v1379 = vmul.f32 %v1341, %v1355
      %v1380 = vmul.f32 %v1342, %v1355
      %v1381 = vmul.f32 %v1343, %v1355
      %v1382 = vmul.f32 %v1344, %v1355
      %v1383 = vmul.f32 %v1345, %v1355
      %v1384 = vmul.f32 %v1346, %v1355
      %v1385 = vmul.f32 %v1347, %v1355
      %v1386 = vmul.f32 %v1348, %v1355
      %v1387 = vmul.f32 %v1349, %v1355
      %v1388 = vmul.f32 %v1350, %v1355
      %v1390 = vlaneseq
      %v1391 = vshrl.u32 %v1390, 7
      %v1392 = vsub.s32 0, %v1391
      %v1393 = vrot.slane %v1176, %v1392
      %v1395 = vadd.f32 %v1357, %v1393
      %v1396 = vadd.f32 %v1358, %v1393
      %v1397 = vadd.f32 %v1359, %v1393
      %v1398 = vadd.f32 %v1360, %v1393
      %v1399 = vadd.f32 %v1361, %v1393
      %v1400 = vadd.f32 %v1362, %v1393
      %v1401 = vadd.f32 %v1363, %v1393
      %v1402 = vadd.f32 %v1364, %v1393
      %v1403 = vadd.f32 %v1365, %v1393
      %v1404 = vadd.f32 %v1366, %v1393
      %v1405 = vadd.f32 %v1367, %v1393
      %v1406 = vadd.f32 %v1368, %v1393
      %v1407 = vadd.f32 %v1369, %v1393
      %v1408 = vadd.f32 %v1370, %v1393
      %v1409 = vadd.f32 %v1371, %v1393
      %v1410 = vadd.f32 %v1372, %v1393
      %v1411 = vadd.f32 %v1373, %v1393
      %v1412 = vadd.f32 %v1374, %v1393
      %v1413 = vadd.f32 %v1375, %v1393
      %v1414 = vadd.f32 %v1376, %v1393
      %v1415 = vadd.f32 %v1377, %v1393
      %v1416 = vadd.f32 %v1378, %v1393
      %v1417 = vadd.f32 %v1379, %v1393
      %v1418 = vadd.f32 %v1380, %v1393
      %v1419 = vadd.f32 %v1381, %v1393
      %v1420 = vadd.f32 %v1382, %v1393
      %v1421 = vadd.f32 %v1383, %v1393
      %v1422 = vadd.f32 %v1384, %v1393
      %v1423 = vadd.f32 %v1385, %v1393
      %v1424 = vadd.f32 %v1386, %v1393
      %v1425 = vadd.f32 %v1387, %v1393
      %v1426 = vadd.f32 %v1388, %v1393
      %vm1427 = vcmp.ge.f32.partialorder %v1395, 0.0
      %vm1428 = vcmp.ge.f32.partialorder %v1396, 0.0
      %vm1429 = vcmp.ge.f32.partialorder %v1397, 0.0
      %vm1430 = vcmp.ge.f32.partialorder %v1398, 0.0
      %vm1431 = vcmp.ge.f32.partialorder %v1399, 0.0
      %vm1432 = vcmp.ge.f32.partialorder %v1400, 0.0
      %vm1433 = vcmp.ge.f32.partialorder %v1401, 0.0
      %vm1434 = vcmp.ge.f32.partialorder %v1402, 0.0
      %vm1435 = vcmp.ge.f32.partialorder %v1403, 0.0
      %vm1436 = vcmp.ge.f32.partialorder %v1404, 0.0
      %vm1437 = vcmp.ge.f32.partialorder %v1405, 0.0
      %vm1438 = vcmp.ge.f32.partialorder %v1406, 0.0
      %vm1439 = vcmp.ge.f32.partialorder %v1407, 0.0
      %vm1440 = vcmp.ge.f32.partialorder %v1408, 0.0
      %vm1441 = vcmp.ge.f32.partialorder %v1409, 0.0
      %vm1442 = vcmp.ge.f32.partialorder %v1410, 0.0
      %vm1443 = vcmp.ge.f32.partialorder %v1411, 0.0
      %vm1444 = vcmp.ge.f32.partialorder %v1412, 0.0
      %vm1445 = vcmp.ge.f32.partialorder %v1413, 0.0
      %vm1446 = vcmp.ge.f32.partialorder %v1414, 0.0
      %vm1447 = vcmp.ge.f32.partialorder %v1415, 0.0
      %vm1448 = vcmp.ge.f32.partialorder %v1416, 0.0
      %vm1449 = vcmp.ge.f32.partialorder %v1417, 0.0
      %vm1450 = vcmp.ge.f32.partialorder %v1418, 0.0
      %vm1451 = vcmp.ge.f32.partialorder %v1419, 0.0
      %vm1452 = vcmp.ge.f32.partialorder %v1420, 0.0
      %vm1453 = vcmp.ge.f32.partialorder %v1421, 0.0
      %vm1454 = vcmp.ge.f32.partialorder %v1422, 0.0
      %vm1455 = vcmp.ge.f32.partialorder %v1423, 0.0
      %vm1456 = vcmp.ge.f32.partialorder %v1424, 0.0
      %vm1457 = vcmp.ge.f32.partialorder %v1425, 0.0
      %vm1458 = vcmp.ge.f32.partialorder %v1426, 0.0
      %v1459 = vmul.f32 %v1395, 0.1
      %v1460 = vmul.f32 %v1396, 0.1
      %v1461 = vmul.f32 %v1397, 0.1
      %v1462 = vmul.f32 %v1398, 0.1
      %v1463 = vmul.f32 %v1399, 0.1
      %v1464 = vmul.f32 %v1400, 0.1
      %v1465 = vmul.f32 %v1401, 0.1
      %v1466 = vmul.f32 %v1402, 0.1
      %v1467 = vmul.f32 %v1403, 0.1
      %v1468 = vmul.f32 %v1404, 0.1
      %v1469 = vmul.f32 %v1405, 0.1
      %v1470 = vmul.f32 %v1406, 0.1
      %v1471 = vmul.f32 %v1407, 0.1
      %v1472 = vmul.f32 %v1408, 0.1
      %v1473 = vmul.f32 %v1409, 0.1
      %v1474 = vmul.f32 %v1410, 0.1
      %v1475 = vmul.f32 %v1411, 0.1
      %v1476 = vmul.f32 %v1412, 0.1
      %v1477 = vmul.f32 %v1413, 0.1
      %v1478 = vmul.f32 %v1414, 0.1
      %v1479 = vmul.f32 %v1415, 0.1
      %v1480 = vmul.f32 %v1416, 0.1
      %v1481 = vmul.f32 %v1417, 0.1
      %v1482 = vmul.f32 %v1418, 0.1
      %v1483 = vmul.f32 %v1419, 0.1
      %v1484 = vmul.f32 %v1420, 0.1
      %v1485 = vmul.f32 %v1421, 0.1
      %v1486 = vmul.f32 %v1422, 0.1
      %v1487 = vmul.f32 %v1423, 0.1
      %v1488 = vmul.f32 %v1424, 0.1
      %v1489 = vmul.f32 %v1425, 0.1
      %v1490 = vmul.f32 %v1426, 0.1
      %v1491 = vsel %vm1427, %v1395, %v1459
      %v1492 = vsel %vm1428, %v1396, %v1460
      %v1493 = vsel %vm1429, %v1397, %v1461
      %v1494 = vsel %vm1430, %v1398, %v1462
      %v1495 = vsel %vm1431, %v1399, %v1463
      %v1496 = vsel %vm1432, %v1400, %v1464
      %v1497 = vsel %vm1433, %v1401, %v1465
      %v1498 = vsel %vm1434, %v1402, %v1466
      %v1499 = vsel %vm1435, %v1403, %v1467
      %v1500 = vsel %vm1436, %v1404, %v1468
      %v1501 = vsel %vm1437, %v1405, %v1469
      %v1502 = vsel %vm1438, %v1406, %v1470
      %v1503 = vsel %vm1439, %v1407, %v1471
      %v1504 = vsel %vm1440, %v1408, %v1472
      %v1505 = vsel %vm1441, %v1409, %v1473
      %v1506 = vsel %vm1442, %v1410, %v1474
      %v1507 = vsel %vm1443, %v1411, %v1475
      %v1508 = vsel %vm1444, %v1412, %v1476
      %v1509 = vsel %vm1445, %v1413, %v1477
      %v1510 = vsel %vm1446, %v1414, %v1478
      %v1511 = vsel %vm1447, %v1415, %v1479
      %v1512 = vsel %vm1448, %v1416, %v1480
      %v1513 = vsel %vm1449, %v1417, %v1481
      %v1514 = vsel %vm1450, %v1418, %v1482
      %v1515 = vsel %vm1451, %v1419, %v1483
      %v1516 = vsel %vm1452, %v1420, %v1484
      %v1517 = vsel %vm1453, %v1421, %v1485
      %v1518 = vsel %vm1454, %v1422, %v1486
      %v1519 = vsel %vm1455, %v1423, %v1487
      %v1520 = vsel %vm1456, %v1424, %v1488
      %v1521 = vsel %vm1457, %v1425, %v1489
      %v1522 = vsel %vm1458, %v1426, %v1490
      %v1523 = vpack.c.bf16 %v1492, %v1491
      %v1524 = vpack.c.bf16 %v1494, %v1493
      %v1525 = vpack.c.bf16 %v1496, %v1495
      %v1526 = vpack.c.bf16 %v1498, %v1497
      %v1527 = vpack.c.bf16 %v1500, %v1499
      %v1528 = vpack.c.bf16 %v1502, %v1501
      %v1529 = vpack.c.bf16 %v1504, %v1503
      %v1530 = vpack.c.bf16 %v1506, %v1505
      %v1531 = vpack.c.bf16 %v1508, %v1507
      %v1532 = vpack.c.bf16 %v1510, %v1509
      %v1533 = vpack.c.bf16 %v1512, %v1511
      %v1534 = vpack.c.bf16 %v1514, %v1513
      %v1535 = vpack.c.bf16 %v1516, %v1515
      %v1536 = vpack.c.bf16 %v1518, %v1517
      %v1537 = vpack.c.bf16 %v1520, %v1519
      %v1538 = vpack.c.bf16 %v1522, %v1521
      %s1539 = scalar_lea.vmem %s5, 64
      %v1540 = vld [vmem:[%s1539] sm:$0xf]
      %v1541 = vld [vmem:[%s1539 + $0x4] sm:$0xf]
      %v1542 = vld [vmem:[%s1539 + $0x8] sm:$0xf]
      %v1543 = vld [vmem:[%s1539 + $0xc] sm:$0xf]
      %v1544 = vld [vmem:[%s1539 + $0x10] sm:$0xf]
      %v1545 = vld [vmem:[%s1539 + $0x14] sm:$0xf]
      %v1546 = vld [vmem:[%s1539 + $0x18] sm:$0xf]
      %v1547 = vld [vmem:[%s1539 + $0x1c] sm:$0xf]
      %v1548 = vld [vmem:[%s1539 + $0x20] sm:$0xf]
      %v1549 = vld [vmem:[%s1539 + $0x24] sm:$0xf]
      %v1550 = vld [vmem:[%s1539 + $0x28] sm:$0xf]
      %v1551 = vld [vmem:[%s1539 + $0x2c] sm:$0xf]
      %v1552 = vld [vmem:[%s1539 + $0x30] sm:$0xf]
      %v1553 = vld [vmem:[%s1539 + $0x34] sm:$0xf]
      %v1554 = vld [vmem:[%s1539 + $0x38] sm:$0xf]
      %v1555 = vld [vmem:[%s1539 + $0x3c] sm:$0xf]
      %s1556 = scalar_lea.vmem %s5, 256
      %v1557 = vld [vmem:[%s1556] sm:$0xf]
      %v1558 = vld [vmem:[%s1556 + $0x4] sm:$0xf]
      %v1559 = vld [vmem:[%s1556 + $0x8] sm:$0xf]
      %v1560 = vld [vmem:[%s1556 + $0xc] sm:$0xf]
      %v1561 = vld [vmem:[%s1556 + $0x10] sm:$0xf]
      %v1562 = vld [vmem:[%s1556 + $0x14] sm:$0xf]
      %v1563 = vld [vmem:[%s1556 + $0x18] sm:$0xf]
      %v1564 = vld [vmem:[%s1556 + $0x1c] sm:$0xf]
      %v1565 = vld [vmem:[%s1556 + $0x20] sm:$0xf]
      %v1566 = vld [vmem:[%s1556 + $0x24] sm:$0xf]
      %v1567 = vld [vmem:[%s1556 + $0x28] sm:$0xf]
      %v1568 = vld [vmem:[%s1556 + $0x2c] sm:$0xf]
      %v1569 = vld [vmem:[%s1556 + $0x30] sm:$0xf]
      %v1570 = vld [vmem:[%s1556 + $0x34] sm:$0xf]
      %v1571 = vld [vmem:[%s1556 + $0x38] sm:$0xf]
      %v1572 = vld [vmem:[%s1556 + $0x3c] sm:$0xf]
      %v1589 = vunpack.c.l.b16 %v1557
      %v1590 = vunpack.c.l.b16 %v1558
      %v1591 = vunpack.c.l.b16 %v1559
      %v1592 = vunpack.c.l.b16 %v1560
      %v1593 = vunpack.c.l.b16 %v1561
      %v1594 = vunpack.c.l.b16 %v1562
      %v1595 = vunpack.c.l.b16 %v1563
      %v1596 = vunpack.c.l.b16 %v1564
      %v1597 = vunpack.c.l.b16 %v1565
      %v1598 = vunpack.c.l.b16 %v1566
      %v1599 = vunpack.c.l.b16 %v1567
      %v1600 = vunpack.c.l.b16 %v1568
      %v1601 = vunpack.c.l.b16 %v1569
      %v1602 = vunpack.c.l.b16 %v1570
      %v1603 = vunpack.c.l.b16 %v1571
      %v1604 = vunpack.c.l.b16 %v1572
      %v1605 = vpack.c.b16 %v1590, %v1589
      %v1606 = vpack.c.b16 %v1592, %v1591
      %v1607 = vpack.c.b16 %v1594, %v1593
      %v1608 = vpack.c.b16 %v1596, %v1595
      %v1609 = vpack.c.b16 %v1598, %v1597
      %v1610 = vpack.c.b16 %v1600, %v1599
      %v1611 = vpack.c.b16 %v1602, %v1601
      %v1612 = vpack.c.b16 %v1604, %v1603
      %1621 = vmatprep.subr.bf16.mxu0 0
      %1622 = vmatpush1.bf16.msra.mxu0 %v1605
      %1623 = vmatprep.subr.bf16.mxu0 0
      %1624 = vmatpush1.bf16.msra.mxu0 %v1606
      %1625 = vmatprep.subr.bf16.mxu0 0
      %1626 = vmatpush1.bf16.msra.mxu0 %v1607
      %1627 = vmatprep.subr.bf16.mxu0 0
      %1628 = vmatpush1.bf16.msra.mxu0 %v1608
      %1629 = vmatprep.subr.bf16.mxu0 0
      %1630 = vmatpush1.bf16.msra.mxu0 %v1609
      %1631 = vmatprep.subr.bf16.mxu0 0
      %1632 = vmatpush1.bf16.msra.mxu0 %v1610
      %1633 = vmatprep.subr.bf16.mxu0 0
      %1634 = vmatpush1.bf16.msra.mxu0 %v1611
      %1635 = vmatprep.subr.bf16.mxu0 0
      %1636 = vmatpush1.bf16.msra.mxu0 %v1612
      %1637 = vmatprep.subr.bf16.mxu0 0
      %1638 = vmatpush1.bf16.msra.mxu0 0
      %1639 = vmatprep.subr.bf16.mxu0 0
      %1640 = vmatpush1.bf16.msra.mxu0 0
      %1641 = vmatprep.subr.bf16.mxu0 0
      %1642 = vmatpush1.bf16.msra.mxu0 0
      %1643 = vmatprep.subr.bf16.mxu0 0
      %1644 = vmatpush1.bf16.msra.mxu0 0
      %1645 = vmatprep.subr.bf16.mxu0 0
      %1646 = vmatpush1.bf16.msra.mxu0 0
      %1647 = vmatprep.subr.bf16.mxu0 0
      %1648 = vmatpush1.bf16.msra.mxu0 0
      %1649 = vmatprep.subr.bf16.mxu0 0
      %1650 = vmatpush1.bf16.msra.mxu0 0
      %1651 = vmatprep.subr.bf16.mxu0 0
      %1652 = vmatpush1.bf16.msra.mxu0 0
      %1653 = vmatprep.mubr.bf16.mxu0 0
      %1654 = vmatmul.mubr.bf16.gmra.mrb[0].mxu0 %v1523
      %v1655 = vpop.f32.mrb[0].mxu0
      %v1656 = vadd.f32 0.0, %v1655
      %v1657 = vpop.f32.mrb[0].mxu0
      %v1658 = vpop.f32.mrb[0].mxu0
      %v1659 = vadd.f32 0.0, %v1658
      %v1660 = vpop.f32.mrb[0].mxu0
      %1661 = vmatprep.mubr.bf16.mxu0 0
      %1662 = vmatmul.mubr.bf16.gmra.mrb[0].mxu0 %v1524
      %v1663 = vpop.f32.mrb[0].mxu0
      %v1664 = vadd.f32 0.0, %v1663
      %v1665 = vpop.f32.mrb[0].mxu0
      %v1666 = vpop.f32.mrb[0].mxu0
      %v1667 = vadd.f32 0.0, %v1666
      %v1668 = vpop.f32.mrb[0].mxu0
      %1669 = vmatprep.mubr.bf16.mxu0 0
      %1670 = vmatmul.mubr.bf16.gmra.mrb[0].mxu0 %v1525
      %v1671 = vpop.f32.mrb[0].mxu0
      %v1672 = vadd.f32 0.0, %v1671
      %v1673 = vpop.f32.mrb[0].mxu0
      %v1674 = vpop.f32.mrb[0].mxu0
      %v1675 = vadd.f32 0.0, %v1674
      %v1676 = vpop.f32.mrb[0].mxu0
      %1677 = vmatprep.mubr.bf16.mxu0 0
      %1678 = vmatmul.mubr.bf16.gmra.mrb[0].mxu0 %v1526
      %v1679 = vpop.f32.mrb[0].mxu0
      %v1680 = vadd.f32 0.0, %v1679
      %v1681 = vpop.f32.mrb[0].mxu0
      %v1682 = vpop.f32.mrb[0].mxu0
      %v1683 = vadd.f32 0.0, %v1682
      %v1684 = vpop.f32.mrb[0].mxu0
      %1685 = vmatprep.mubr.bf16.mxu0 0
      %1686 = vmatmul.mubr.bf16.gmra.mrb[0].mxu0 %v1527
      %v1687 = vpop.f32.mrb[0].mxu0
      %v1688 = vadd.f32 0.0, %v1687
      %v1689 = vpop.f32.mrb[0].mxu0
      %v1690 = vpop.f32.mrb[0].mxu0
      %v1691 = vadd.f32 0.0, %v1690
      %v1692 = vpop.f32.mrb[0].mxu0
      %1693 = vmatprep.mubr.bf16.mxu0 0
      %1694 = vmatmul.mubr.bf16.gmra.mrb[0].mxu0 %v1528
      %v1695 = vpop.f32.mrb[0].mxu0
      %v1696 = vadd.f32 0.0, %v1695
      %v1697 = vpop.f32.mrb[0].mxu0
      %v1698 = vpop.f32.mrb[0].mxu0
      %v1699 = vadd.f32 0.0, %v1698
      %v1700 = vpop.f32.mrb[0].mxu0
      %1701 = vmatprep.mubr.bf16.mxu0 0
      %1702 = vmatmul.mubr.bf16.gmra.mrb[0].mxu0 %v1529
      %v1703 = vpop.f32.mrb[0].mxu0
      %v1704 = vadd.f32 0.0, %v1703
      %v1705 = vpop.f32.mrb[0].mxu0
      %v1706 = vpop.f32.mrb[0].mxu0
      %v1707 = vadd.f32 0.0, %v1706
      %v1708 = vpop.f32.mrb[0].mxu0
      %1709 = vmatprep.mubr.bf16.mxu0 0
      %1710 = vmatmul.mubr.bf16.gmra.mrb[0].mxu0 %v1530
      %v1711 = vpop.f32.mrb[0].mxu0
      %v1712 = vadd.f32 0.0, %v1711
      %v1713 = vpop.f32.mrb[0].mxu0
      %v1714 = vpop.f32.mrb[0].mxu0
      %v1715 = vadd.f32 0.0, %v1714
      %v1716 = vpop.f32.mrb[0].mxu0
      %1717 = vmatprep.mubr.bf16.mxu0 0
      %1718 = vmatmul.mubr.bf16.gmra.mrb[0].mxu0 %v1531
      %v1719 = vpop.f32.mrb[0].mxu0
      %v1720 = vadd.f32 0.0, %v1719
      %v1721 = vpop.f32.mrb[0].mxu0
      %v1722 = vpop.f32.mrb[0].mxu0
      %v1723 = vadd.f32 0.0, %v1722
      %v1724 = vpop.f32.mrb[0].mxu0
      %1725 = vmatprep.mubr.bf16.mxu0 0
      %1726 = vmatmul.mubr.bf16.gmra.mrb[0].mxu0 %v1532
      %v1727 = vpop.f32.mrb[0].mxu0
      %v1728 = vadd.f32 0.0, %v1727
      %v1729 = vpop.f32.mrb[0].mxu0
      %v1730 = vpop.f32.mrb[0].mxu0
      %v1731 = vadd.f32 0.0, %v1730
      %v1732 = vpop.f32.mrb[0].mxu0
      %1733 = vmatprep.mubr.bf16.mxu0 0
      %1734 = vmatmul.mubr.bf16.gmra.mrb[0].mxu0 %v1533
      %v1735 = vpop.f32.mrb[0].mxu0
      %v1736 = vadd.f32 0.0, %v1735
      %v1737 = vpop.f32.mrb[0].mxu0
      %v1738 = vpop.f32.mrb[0].mxu0
      %v1739 = vadd.f32 0.0, %v1738
      %v1740 = vpop.f32.mrb[0].mxu0
      %1741 = vmatprep.mubr.bf16.mxu0 0
      %1742 = vmatmul.mubr.bf16.gmra.mrb[0].mxu0 %v1534
      %v1743 = vpop.f32.mrb[0].mxu0
      %v1744 = vadd.f32 0.0, %v1743
      %v1745 = vpop.f32.mrb[0].mxu0
      %v1746 = vpop.f32.mrb[0].mxu0
      %v1747 = vadd.f32 0.0, %v1746
      %v1748 = vpop.f32.mrb[0].mxu0
      %1749 = vmatprep.mubr.bf16.mxu0 0
      %1750 = vmatmul.mubr.bf16.gmra.mrb[0].mxu0 %v1535
      %v1751 = vpop.f32.mrb[0].mxu0
      %v1752 = vadd.f32 0.0, %v1751
      %v1753 = vpop.f32.mrb[0].mxu0
      %v1754 = vpop.f32.mrb[0].mxu0
      %v1755 = vadd.f32 0.0, %v1754
      %v1756 = vpop.f32.mrb[0].mxu0
      %1757 = vmatprep.mubr.bf16.mxu0 0
      %1758 = vmatmul.mubr.bf16.gmra.mrb[0].mxu0 %v1536
      %v1759 = vpop.f32.mrb[0].mxu0
      %v1760 = vadd.f32 0.0, %v1759
      %v1761 = vpop.f32.mrb[0].mxu0
      %v1762 = vpop.f32.mrb[0].mxu0
      %v1763 = vadd.f32 0.0, %v1762
      %v1764 = vpop.f32.mrb[0].mxu0
      %1765 = vmatprep.mubr.bf16.mxu0 0
      %1766 = vmatmul.mubr.bf16.gmra.mrb[0].mxu0 %v1537
      %v1767 = vpop.f32.mrb[0].mxu0
      %v1768 = vadd.f32 0.0, %v1767
      %v1769 = vpop.f32.mrb[0].mxu0
      %v1770 = vpop.f32.mrb[0].mxu0
      %v1771 = vadd.f32 0.0, %v1770
      %v1772 = vpop.f32.mrb[0].mxu0
      %1773 = vmatprep.mubr.bf16.mxu0 0
      %1774 = vmatmul.mubr.bf16.gmra.mrb[0].mxu0 %v1538
      %v1775 = vpop.f32.mrb[0].mxu0
      %v1776 = vadd.f32 0.0, %v1775
      %v1777 = vpop.f32.mrb[0].mxu0
      %v1778 = vpop.f32.mrb[0].mxu0
      %v1779 = vadd.f32 0.0, %v1778
      %v1780 = vpop.f32.mrb[0].mxu0
      %1781 = vdwg.mxu0
      %v1798 = vunpack.c.l.b16 %v1540
      %v1799 = vunpack.c.l.b16 %v1541
      %v1800 = vunpack.c.l.b16 %v1542
      %v1801 = vunpack.c.l.b16 %v1543
      %v1802 = vunpack.c.l.b16 %v1544
      %v1803 = vunpack.c.l.b16 %v1545
      %v1804 = vunpack.c.l.b16 %v1546
      %v1805 = vunpack.c.l.b16 %v1547
      %v1806 = vunpack.c.l.b16 %v1548
      %v1807 = vunpack.c.l.b16 %v1549
      %v1808 = vunpack.c.l.b16 %v1550
      %v1809 = vunpack.c.l.b16 %v1551
      %v1810 = vunpack.c.l.b16 %v1552
      %v1811 = vunpack.c.l.b16 %v1553
      %v1812 = vunpack.c.l.b16 %v1554
      %v1813 = vunpack.c.l.b16 %v1555
      %v1814 = vpack.c.b16 %v1799, %v1798
      %v1815 = vpack.c.b16 %v1801, %v1800
      %v1816 = vpack.c.b16 %v1803, %v1802
      %v1817 = vpack.c.b16 %v1805, %v1804
      %v1818 = vpack.c.b16 %v1807, %v1806
      %v1819 = vpack.c.b16 %v1809, %v1808
      %v1820 = vpack.c.b16 %v1811, %v1810
      %v1821 = vpack.c.b16 %v1813, %v1812
      %1830 = vmatprep.subr.bf16.mxu0 0
      %1831 = vmatpush1.bf16.msra.mxu0 %v1814
      %1832 = vmatprep.subr.bf16.mxu0 0
      %1833 = vmatpush1.bf16.msra.mxu0 %v1815
      %1834 = vmatprep.subr.bf16.mxu0 0
      %1835 = vmatpush1.bf16.msra.mxu0 %v1816
      %1836 = vmatprep.subr.bf16.mxu0 0
      %1837 = vmatpush1.bf16.msra.mxu0 %v1817
      %1838 = vmatprep.subr.bf16.mxu0 0
      %1839 = vmatpush1.bf16.msra.mxu0 %v1818
      %1840 = vmatprep.subr.bf16.mxu0 0
      %1841 = vmatpush1.bf16.msra.mxu0 %v1819
      %1842 = vmatprep.subr.bf16.mxu0 0
      %1843 = vmatpush1.bf16.msra.mxu0 %v1820
      %1844 = vmatprep.subr.bf16.mxu0 0
      %1845 = vmatpush1.bf16.msra.mxu0 %v1821
      %1846 = vmatprep.subr.bf16.mxu0 0
      %1847 = vmatpush1.bf16.msra.mxu0 0
      %1848 = vmatprep.subr.bf16.mxu0 0
      %1849 = vmatpush1.bf16.msra.mxu0 0
      %1850 = vmatprep.subr.bf16.mxu0 0
      %1851 = vmatpush1.bf16.msra.mxu0 0
      %1852 = vmatprep.subr.bf16.mxu0 0
      %1853 = vmatpush1.bf16.msra.mxu0 0
      %1854 = vmatprep.subr.bf16.mxu0 0
      %1855 = vmatpush1.bf16.msra.mxu0 0
      %1856 = vmatprep.subr.bf16.mxu0 0
      %1857 = vmatpush1.bf16.msra.mxu0 0
      %1858 = vmatprep.subr.bf16.mxu0 0
      %1859 = vmatpush1.bf16.msra.mxu0 0
      %1860 = vmatprep.subr.bf16.mxu0 0
      %1861 = vmatpush1.bf16.msra.mxu0 0
      %1862 = vmatprep.mubr.bf16.mxu0 0
      %1863 = vmatmul.mubr.bf16.gmra.mrb[0].mxu0 0
      %v1864 = vpop.f32.mrb[0].mxu0
      %v1865 = vadd.f32 %v1656, %v1864
      %v1866 = vpop.f32.mrb[0].mxu0
      %v1867 = vpop.f32.mrb[0].mxu0
      %v1868 = vadd.f32 %v1659, %v1867
      %v1869 = vpop.f32.mrb[0].mxu0
      %1870 = vmatprep.mubr.bf16.mxu0 0
      %1871 = vmatmul.mubr.bf16.gmra.mrb[0].mxu0 %v1523
      %v1872 = vpop.f32.mrb[0].mxu0
      %v1873 = vadd.f32 %v1664, %v1872
      %v1874 = vpop.f32.mrb[0].mxu0
      %v1875 = vpop.f32.mrb[0].mxu0
      %v1876 = vadd.f32 %v1667, %v1875
      %v1877 = vpop.f32.mrb[0].mxu0
      %1878 = vmatprep.mubr.bf16.mxu0 0
      %1879 = vmatmul.mubr.bf16.gmra.mrb[0].mxu0 %v1524
      %v1880 = vpop.f32.mrb[0].mxu0
      %v1881 = vadd.f32 %v1672, %v1880
      %v1882 = vpop.f32.mrb[0].mxu0
      %v1883 = vpop.f32.mrb[0].mxu0
      %v1884 = vadd.f32 %v1675, %v1883
      %v1885 = vpop.f32.mrb[0].mxu0
      %1886 = vmatprep.mubr.bf16.mxu0 0
      %1887 = vmatmul.mubr.bf16.gmra.mrb[0].mxu0 %v1525
      %v1888 = vpop.f32.mrb[0].mxu0
      %v1889 = vadd.f32 %v1680, %v1888
      %v1890 = vpop.f32.mrb[0].mxu0
      %v1891 = vpop.f32.mrb[0].mxu0
      %v1892 = vadd.f32 %v1683, %v1891
      %v1893 = vpop.f32.mrb[0].mxu0
      %1894 = vmatprep.mubr.bf16.mxu0 0
      %1895 = vmatmul.mubr.bf16.gmra.mrb[0].mxu0 %v1526
      %v1896 = vpop.f32.mrb[0].mxu0
      %v1897 = vadd.f32 %v1688, %v1896
      %v1898 = vpop.f32.mrb[0].mxu0
      %v1899 = vpop.f32.mrb[0].mxu0
      %v1900 = vadd.f32 %v1691, %v1899
      %v1901 = vpop.f32.mrb[0].mxu0
      %1902 = vmatprep.mubr.bf16.mxu0 0
      %1903 = vmatmul.mubr.bf16.gmra.mrb[0].mxu0 %v1527
      %v1904 = vpop.f32.mrb[0].mxu0
      %v1905 = vadd.f32 %v1696, %v1904
      %v1906 = vpop.f32.mrb[0].mxu0
      %v1907 = vpop.f32.mrb[0].mxu0
      %v1908 = vadd.f32 %v1699, %v1907
      %v1909 = vpop.f32.mrb[0].mxu0
      %1910 = vmatprep.mubr.bf16.mxu0 0
      %1911 = vmatmul.mubr.bf16.gmra.mrb[0].mxu0 %v1528
      %v1912 = vpop.f32.mrb[0].mxu0
      %v1913 = vadd.f32 %v1704, %v1912
      %v1914 = vpop.f32.mrb[0].mxu0
      %v1915 = vpop.f32.mrb[0].mxu0
      %v1916 = vadd.f32 %v1707, %v1915
      %v1917 = vpop.f32.mrb[0].mxu0
      %1918 = vmatprep.mubr.bf16.mxu0 0
      %1919 = vmatmul.mubr.bf16.gmra.mrb[0].mxu0 %v1529
      %v1920 = vpop.f32.mrb[0].mxu0
      %v1921 = vadd.f32 %v1712, %v1920
      %v1922 = vpop.f32.mrb[0].mxu0
      %v1923 = vpop.f32.mrb[0].mxu0
      %v1924 = vadd.f32 %v1715, %v1923
      %v1925 = vpop.f32.mrb[0].mxu0
      %1926 = vmatprep.mubr.bf16.mxu0 0
      %1927 = vmatmul.mubr.bf16.gmra.mrb[0].mxu0 %v1530
      %v1928 = vpop.f32.mrb[0].mxu0
      %v1929 = vadd.f32 %v1720, %v1928
      %v1930 = vpop.f32.mrb[0].mxu0
      %v1931 = vpop.f32.mrb[0].mxu0
      %v1932 = vadd.f32 %v1723, %v1931
      %v1933 = vpop.f32.mrb[0].mxu0
      %1934 = vmatprep.mubr.bf16.mxu0 0
      %1935 = vmatmul.mubr.bf16.gmra.mrb[0].mxu0 %v1531
      %v1936 = vpop.f32.mrb[0].mxu0
      %v1937 = vadd.f32 %v1728, %v1936
      %v1938 = vpop.f32.mrb[0].mxu0
      %v1939 = vpop.f32.mrb[0].mxu0
      %v1940 = vadd.f32 %v1731, %v1939
      %v1941 = vpop.f32.mrb[0].mxu0
      %1942 = vmatprep.mubr.bf16.mxu0 0
      %1943 = vmatmul.mubr.bf16.gmra.mrb[0].mxu0 %v1532
      %v1944 = vpop.f32.mrb[0].mxu0
      %v1945 = vadd.f32 %v1736, %v1944
      %v1946 = vpop.f32.mrb[0].mxu0
      %v1947 = vpop.f32.mrb[0].mxu0
      %v1948 = vadd.f32 %v1739, %v1947
      %v1949 = vpop.f32.mrb[0].mxu0
      %1950 = vmatprep.mubr.bf16.mxu0 0
      %1951 = vmatmul.mubr.bf16.gmra.mrb[0].mxu0 %v1533
      %v1952 = vpop.f32.mrb[0].mxu0
      %v1953 = vadd.f32 %v1744, %v1952
      %v1954 = vpop.f32.mrb[0].mxu0
      %v1955 = vpop.f32.mrb[0].mxu0
      %v1956 = vadd.f32 %v1747, %v1955
      %v1957 = vpop.f32.mrb[0].mxu0
      %1958 = vmatprep.mubr.bf16.mxu0 0
      %1959 = vmatmul.mubr.bf16.gmra.mrb[0].mxu0 %v1534
      %v1960 = vpop.f32.mrb[0].mxu0
      %v1961 = vadd.f32 %v1752, %v1960
      %v1962 = vpop.f32.mrb[0].mxu0
      %v1963 = vpop.f32.mrb[0].mxu0
      %v1964 = vadd.f32 %v1755, %v1963
      %v1965 = vpop.f32.mrb[0].mxu0
      %1966 = vmatprep.mubr.bf16.mxu0 0
      %1967 = vmatmul.mubr.bf16.gmra.mrb[0].mxu0 %v1535
      %v1968 = vpop.f32.mrb[0].mxu0
      %v1969 = vadd.f32 %v1760, %v1968
      %v1970 = vpop.f32.mrb[0].mxu0
      %v1971 = vpop.f32.mrb[0].mxu0
      %v1972 = vadd.f32 %v1763, %v1971
      %v1973 = vpop.f32.mrb[0].mxu0
      %1974 = vmatprep.mubr.bf16.mxu0 0
      %1975 = vmatmul.mubr.bf16.gmra.mrb[0].mxu0 %v1536
      %v1976 = vpop.f32.mrb[0].mxu0
      %v1977 = vadd.f32 %v1768, %v1976
      %v1978 = vpop.f32.mrb[0].mxu0
      %v1979 = vpop.f32.mrb[0].mxu0
      %v1980 = vadd.f32 %v1771, %v1979
      %v1981 = vpop.f32.mrb[0].mxu0
      %1982 = vmatprep.mubr.bf16.mxu0 0
      %1983 = vmatmul.mubr.bf16.gmra.mrb[0].mxu0 %v1537
      %v1984 = vpop.f32.mrb[0].mxu0
      %v1985 = vadd.f32 %v1776, %v1984
      %v1986 = vpop.f32.mrb[0].mxu0
      %v1987 = vpop.f32.mrb[0].mxu0
      %v1988 = vadd.f32 %v1779, %v1987
      %v1989 = vpop.f32.mrb[0].mxu0
      %1990 = vdwg.mxu0
      %s1991 = scalar_lea.vmem %s5, 448
      %v1992 = vld [vmem:[%s1991] sm:$0xf]
      %v1993 = vld [vmem:[%s1991 + $0x4] sm:$0xf]
      %v1994 = vld [vmem:[%s1991 + $0x8] sm:$0xf]
      %v1995 = vld [vmem:[%s1991 + $0xc] sm:$0xf]
      %v1996 = vld [vmem:[%s1991 + $0x10] sm:$0xf]
      %v1997 = vld [vmem:[%s1991 + $0x14] sm:$0xf]
      %v1998 = vld [vmem:[%s1991 + $0x18] sm:$0xf]
      %v1999 = vld [vmem:[%s1991 + $0x1c] sm:$0xf]
      %v2000 = vld [vmem:[%s1991 + $0x20] sm:$0xf]
      %v2001 = vld [vmem:[%s1991 + $0x24] sm:$0xf]
      %v2002 = vld [vmem:[%s1991 + $0x28] sm:$0xf]
      %v2003 = vld [vmem:[%s1991 + $0x2c] sm:$0xf]
      %v2004 = vld [vmem:[%s1991 + $0x30] sm:$0xf]
      %v2005 = vld [vmem:[%s1991 + $0x34] sm:$0xf]
      %v2006 = vld [vmem:[%s1991 + $0x38] sm:$0xf]
      %v2007 = vld [vmem:[%s1991 + $0x3c] sm:$0xf]
      %v2024 = vunpack.c.l.b16 %v1992
      %v2025 = vunpack.c.l.b16 %v1993
      %v2026 = vunpack.c.l.b16 %v1994
      %v2027 = vunpack.c.l.b16 %v1995
      %v2028 = vunpack.c.l.b16 %v1996
      %v2029 = vunpack.c.l.b16 %v1997
      %v2030 = vunpack.c.l.b16 %v1998
      %v2031 = vunpack.c.l.b16 %v1999
      %v2032 = vunpack.c.l.b16 %v2000
      %v2033 = vunpack.c.l.b16 %v2001
      %v2034 = vunpack.c.l.b16 %v2002
      %v2035 = vunpack.c.l.b16 %v2003
      %v2036 = vunpack.c.l.b16 %v2004
      %v2037 = vunpack.c.l.b16 %v2005
      %v2038 = vunpack.c.l.b16 %v2006
      %v2039 = vunpack.c.l.b16 %v2007
      %v2040 = vpack.c.b16 %v2025, %v2024
      %v2041 = vpack.c.b16 %v2027, %v2026
      %v2042 = vpack.c.b16 %v2029, %v2028
      %v2043 = vpack.c.b16 %v2031, %v2030
      %v2044 = vpack.c.b16 %v2033, %v2032
      %v2045 = vpack.c.b16 %v2035, %v2034
      %v2046 = vpack.c.b16 %v2037, %v2036
      %v2047 = vpack.c.b16 %v2039, %v2038
      %2056 = vmatprep.subr.bf16.mxu0 0
      %2057 = vmatpush1.bf16.msra.mxu0 %v2040
      %2058 = vmatprep.subr.bf16.mxu0 0
      %2059 = vmatpush1.bf16.msra.mxu0 %v2041
      %2060 = vmatprep.subr.bf16.mxu0 0
      %2061 = vmatpush1.bf16.msra.mxu0 %v2042
      %2062 = vmatprep.subr.bf16.mxu0 0
      %2063 = vmatpush1.bf16.msra.mxu0 %v2043
      %2064 = vmatprep.subr.bf16.mxu0 0
      %2065 = vmatpush1.bf16.msra.mxu0 %v2044
      %2066 = vmatprep.subr.bf16.mxu0 0
      %2067 = vmatpush1.bf16.msra.mxu0 %v2045
      %2068 = vmatprep.subr.bf16.mxu0 0
      %2069 = vmatpush1.bf16.msra.mxu0 %v2046
      %2070 = vmatprep.subr.bf16.mxu0 0
      %2071 = vmatpush1.bf16.msra.mxu0 %v2047
      %2072 = vmatprep.subr.bf16.mxu0 0
      %2073 = vmatpush1.bf16.msra.mxu0 0
      %2074 = vmatprep.subr.bf16.mxu0 0
      %2075 = vmatpush1.bf16.msra.mxu0 0
      %2076 = vmatprep.subr.bf16.mxu0 0
      %2077 = vmatpush1.bf16.msra.mxu0 0
      %2078 = vmatprep.subr.bf16.mxu0 0
      %2079 = vmatpush1.bf16.msra.mxu0 0
      %2080 = vmatprep.subr.bf16.mxu0 0
      %2081 = vmatpush1.bf16.msra.mxu0 0
      %2082 = vmatprep.subr.bf16.mxu0 0
      %2083 = vmatpush1.bf16.msra.mxu0 0
      %2084 = vmatprep.subr.bf16.mxu0 0
      %2085 = vmatpush1.bf16.msra.mxu0 0
      %2086 = vmatprep.subr.bf16.mxu0 0
      %2087 = vmatpush1.bf16.msra.mxu0 0
      %2088 = vmatprep.mubr.bf16.mxu0 0
      %2089 = vmatmul.mubr.bf16.gmra.mrb[0].mxu0 %v1524
      %v2090 = vpop.f32.mrb[0].mxu0
      %v2091 = vadd.f32 0.0, %v2090
      %v2092 = vpop.f32.mrb[0].mxu0
      %v2093 = vpop.f32.mrb[0].mxu0
      %v2094 = vadd.f32 0.0, %v2093
      %v2095 = vpop.f32.mrb[0].mxu0
      %2096 = vmatprep.mubr.bf16.mxu0 0
      %2097 = vmatmul.mubr.bf16.gmra.mrb[0].mxu0 %v1525
      %v2098 = vpop.f32.mrb[0].mxu0
      %v2099 = vadd.f32 0.0, %v2098
      %v2100 = vpop.f32.mrb[0].mxu0
      %v2101 = vpop.f32.mrb[0].mxu0
      %v2102 = vadd.f32 0.0, %v2101
      %v2103 = vpop.f32.mrb[0].mxu0
      %2104 = vmatprep.mubr.bf16.mxu0 0
      %2105 = vmatmul.mubr.bf16.gmra.mrb[0].mxu0 %v1526
      %v2106 = vpop.f32.mrb[0].mxu0
      %v2107 = vadd.f32 0.0, %v2106
      %v2108 = vpop.f32.mrb[0].mxu0
      %v2109 = vpop.f32.mrb[0].mxu0
      %v2110 = vadd.f32 0.0, %v2109
      %v2111 = vpop.f32.mrb[0].mxu0
      %2112 = vmatprep.mubr.bf16.mxu0 0
      %2113 = vmatmul.mubr.bf16.gmra.mrb[0].mxu0 %v1527
      %v2114 = vpop.f32.mrb[0].mxu0
      %v2115 = vadd.f32 0.0, %v2114
      %v2116 = vpop.f32.mrb[0].mxu0
      %v2117 = vpop.f32.mrb[0].mxu0
      %v2118 = vadd.f32 0.0, %v2117
      %v2119 = vpop.f32.mrb[0].mxu0
      %2120 = vmatprep.mubr.bf16.mxu0 0
      %2121 = vmatmul.mubr.bf16.gmra.mrb[0].mxu0 %v1528
      %v2122 = vpop.f32.mrb[0].mxu0
      %v2123 = vadd.f32 0.0, %v2122
      %v2124 = vpop.f32.mrb[0].mxu0
      %v2125 = vpop.f32.mrb[0].mxu0
      %v2126 = vadd.f32 0.0, %v2125
      %v2127 = vpop.f32.mrb[0].mxu0
      %2128 = vmatprep.mubr.bf16.mxu0 0
      %2129 = vmatmul.mubr.bf16.gmra.mrb[0].mxu0 %v1529
      %v2130 = vpop.f32.mrb[0].mxu0
      %v2131 = vadd.f32 0.0, %v2130
      %v2132 = vpop.f32.mrb[0].mxu0
      %v2133 = vpop.f32.mrb[0].mxu0
      %v2134 = vadd.f32 0.0, %v2133
      %v2135 = vpop.f32.mrb[0].mxu0
      %2136 = vmatprep.mubr.bf16.mxu0 0
      %2137 = vmatmul.mubr.bf16.gmra.mrb[0].mxu0 %v1530
      %v2138 = vpop.f32.mrb[0].mxu0
      %v2139 = vadd.f32 0.0, %v2138
      %v2140 = vpop.f32.mrb[0].mxu0
      %v2141 = vpop.f32.mrb[0].mxu0
      %v2142 = vadd.f32 0.0, %v2141
      %v2143 = vpop.f32.mrb[0].mxu0
      %2144 = vmatprep.mubr.bf16.mxu0 0
      %2145 = vmatmul.mubr.bf16.gmra.mrb[0].mxu0 %v1531
      %v2146 = vpop.f32.mrb[0].mxu0
      %v2147 = vadd.f32 0.0, %v2146
      %v2148 = vpop.f32.mrb[0].mxu0
      %v2149 = vpop.f32.mrb[0].mxu0
      %v2150 = vadd.f32 0.0, %v2149
      %v2151 = vpop.f32.mrb[0].mxu0
      %2152 = vmatprep.mubr.bf16.mxu0 0
      %2153 = vmatmul.mubr.bf16.gmra.mrb[0].mxu0 %v1532
      %v2154 = vpop.f32.mrb[0].mxu0
      %v2155 = vadd.f32 0.0, %v2154
      %v2156 = vpop.f32.mrb[0].mxu0
      %v2157 = vpop.f32.mrb[0].mxu0
      %v2158 = vadd.f32 0.0, %v2157
      %v2159 = vpop.f32.mrb[0].mxu0
      %2160 = vmatprep.mubr.bf16.mxu0 0
      %2161 = vmatmul.mubr.bf16.gmra.mrb[0].mxu0 %v1533
      %v2162 = vpop.f32.mrb[0].mxu0
      %v2163 = vadd.f32 0.0, %v2162
      %v2164 = vpop.f32.mrb[0].mxu0
      %v2165 = vpop.f32.mrb[0].mxu0
      %v2166 = vadd.f32 0.0, %v2165
      %v2167 = vpop.f32.mrb[0].mxu0
      %2168 = vmatprep.mubr.bf16.mxu0 0
      %2169 = vmatmul.mubr.bf16.gmra.mrb[0].mxu0 %v1534
      %v2170 = vpop.f32.mrb[0].mxu0
      %v2171 = vadd.f32 0.0, %v2170
      %v2172 = vpop.f32.mrb[0].mxu0
      %v2173 = vpop.f32.mrb[0].mxu0
      %v2174 = vadd.f32 0.0, %v2173
      %v2175 = vpop.f32.mrb[0].mxu0
      %2176 = vmatprep.mubr.bf16.mxu0 0
      %2177 = vmatmul.mubr.bf16.gmra.mrb[0].mxu0 %v1535
      %v2178 = vpop.f32.mrb[0].mxu0
      %v2179 = vadd.f32 0.0, %v2178
      %v2180 = vpop.f32.mrb[0].mxu0
      %v2181 = vpop.f32.mrb[0].mxu0
      %v2182 = vadd.f32 0.0, %v2181
      %v2183 = vpop.f32.mrb[0].mxu0
      %2184 = vmatprep.mubr.bf16.mxu0 0
      %2185 = vmatmul.mubr.bf16.gmra.mrb[0].mxu0 %v1536
      %v2186 = vpop.f32.mrb[0].mxu0
      %v2187 = vadd.f32 0.0, %v2186
      %v2188 = vpop.f32.mrb[0].mxu0
      %v2189 = vpop.f32.mrb[0].mxu0
      %v2190 = vadd.f32 0.0, %v2189
      %v2191 = vpop.f32.mrb[0].mxu0
      %2192 = vmatprep.mubr.bf16.mxu0 0
      %2193 = vmatmul.mubr.bf16.gmra.mrb[0].mxu0 %v1537
      %v2194 = vpop.f32.mrb[0].mxu0
      %v2195 = vadd.f32 0.0, %v2194
      %v2196 = vpop.f32.mrb[0].mxu0
      %v2197 = vpop.f32.mrb[0].mxu0
      %v2198 = vadd.f32 0.0, %v2197
      %v2199 = vpop.f32.mrb[0].mxu0
      %2200 = vmatprep.mubr.bf16.mxu0 0
      %2201 = vmatmul.mubr.bf16.gmra.mrb[0].mxu0 %v1538
      %v2202 = vpop.f32.mrb[0].mxu0
      %v2203 = vadd.f32 0.0, %v2202
      %v2204 = vpop.f32.mrb[0].mxu0
      %v2205 = vpop.f32.mrb[0].mxu0
      %v2206 = vadd.f32 0.0, %v2205
      %v2207 = vpop.f32.mrb[0].mxu0
      %2208 = vmatprep.mubr.bf16.mxu0 0
      %2209 = vmatmul.mubr.bf16.gmra.mrb[0].mxu0 0
      %v2210 = vpop.f32.mrb[0].mxu0
      %v2211 = vadd.f32 0.0, %v2210
      %v2212 = vpop.f32.mrb[0].mxu0
      %v2213 = vpop.f32.mrb[0].mxu0
      %v2214 = vadd.f32 0.0, %v2213
      %v2215 = vpop.f32.mrb[0].mxu0
      %2216 = vdwg.mxu0
      %v2217 = vadd.f32 %v1865, %v2091
      %v2218 = vadd.f32 %v1868, %v2094
      %v2219 = vadd.f32 %v1873, %v2099
      %v2220 = vadd.f32 %v1876, %v2102
      %v2221 = vadd.f32 %v1881, %v2107
      %v2222 = vadd.f32 %v1884, %v2110
      %v2223 = vadd.f32 %v1889, %v2115
      %v2224 = vadd.f32 %v1892, %v2118
      %v2225 = vadd.f32 %v1897, %v2123
      %v2226 = vadd.f32 %v1900, %v2126
      %v2227 = vadd.f32 %v1905, %v2131
      %v2228 = vadd.f32 %v1908, %v2134
      %v2229 = vadd.f32 %v1913, %v2139
      %v2230 = vadd.f32 %v1916, %v2142
      %v2231 = vadd.f32 %v1921, %v2147
      %v2232 = vadd.f32 %v1924, %v2150
      %v2233 = vadd.f32 %v1929, %v2155
      %v2234 = vadd.f32 %v1932, %v2158
      %v2235 = vadd.f32 %v1937, %v2163
      %v2236 = vadd.f32 %v1940, %v2166
      %v2237 = vadd.f32 %v1945, %v2171
      %v2238 = vadd.f32 %v1948, %v2174
      %v2239 = vadd.f32 %v1953, %v2179
      %v2240 = vadd.f32 %v1956, %v2182
      %v2241 = vadd.f32 %v1961, %v2187
      %v2242 = vadd.f32 %v1964, %v2190
      %v2243 = vadd.f32 %v1969, %v2195
      %v2244 = vadd.f32 %v1972, %v2198
      %v2245 = vadd.f32 %v1977, %v2203
      %v2246 = vadd.f32 %v1980, %v2206
      %v2247 = vadd.f32 %v1985, %v2211
      %v2248 = vadd.f32 %v1988, %v2214
      %v2249 = vld [vmem:[%s5] sm:$0xf]
      %v2250 = vld [vmem:[%s5 + $0x4] sm:$0xf]
      %v2251 = vld [vmem:[%s5 + $0x8] sm:$0xf]
      %v2252 = vld [vmem:[%s5 + $0xc] sm:$0xf]
      %v2253 = vld [vmem:[%s5 + $0x10] sm:$0xf]
      %v2254 = vld [vmem:[%s5 + $0x14] sm:$0xf]
      %v2255 = vld [vmem:[%s5 + $0x18] sm:$0xf]
      %v2256 = vld [vmem:[%s5 + $0x1c] sm:$0xf]
      %v2257 = vld [vmem:[%s5 + $0x20] sm:$0xf]
      %v2258 = vld [vmem:[%s5 + $0x24] sm:$0xf]
      %v2259 = vld [vmem:[%s5 + $0x28] sm:$0xf]
      %v2260 = vld [vmem:[%s5 + $0x2c] sm:$0xf]
      %v2261 = vld [vmem:[%s5 + $0x30] sm:$0xf]
      %v2262 = vld [vmem:[%s5 + $0x34] sm:$0xf]
      %v2263 = vld [vmem:[%s5 + $0x38] sm:$0xf]
      %v2264 = vld [vmem:[%s5 + $0x3c] sm:$0xf]
      %s2265 = scalar_lea.vmem %s5, 192
      %v2266 = vld [vmem:[%s2265] sm:$0xf]
      %v2267 = vld [vmem:[%s2265 + $0x4] sm:$0xf]
      %v2268 = vld [vmem:[%s2265 + $0x8] sm:$0xf]
      %v2269 = vld [vmem:[%s2265 + $0xc] sm:$0xf]
      %v2270 = vld [vmem:[%s2265 + $0x10] sm:$0xf]
      %v2271 = vld [vmem:[%s2265 + $0x14] sm:$0xf]
      %v2272 = vld [vmem:[%s2265 + $0x18] sm:$0xf]
      %v2273 = vld [vmem:[%s2265 + $0x1c] sm:$0xf]
      %v2274 = vld [vmem:[%s2265 + $0x20] sm:$0xf]
      %v2275 = vld [vmem:[%s2265 + $0x24] sm:$0xf]
      %v2276 = vld [vmem:[%s2265 + $0x28] sm:$0xf]
      %v2277 = vld [vmem:[%s2265 + $0x2c] sm:$0xf]
      %v2278 = vld [vmem:[%s2265 + $0x30] sm:$0xf]
      %v2279 = vld [vmem:[%s2265 + $0x34] sm:$0xf]
      %v2280 = vld [vmem:[%s2265 + $0x38] sm:$0xf]
      %v2281 = vld [vmem:[%s2265 + $0x3c] sm:$0xf]
      %v2298 = vunpack.c.l.b16 %v2266
      %v2299 = vunpack.c.l.b16 %v2267
      %v2300 = vunpack.c.l.b16 %v2268
      %v2301 = vunpack.c.l.b16 %v2269
      %v2302 = vunpack.c.l.b16 %v2270
      %v2303 = vunpack.c.l.b16 %v2271
      %v2304 = vunpack.c.l.b16 %v2272
      %v2305 = vunpack.c.l.b16 %v2273
      %v2306 = vunpack.c.l.b16 %v2274
      %v2307 = vunpack.c.l.b16 %v2275
      %v2308 = vunpack.c.l.b16 %v2276
      %v2309 = vunpack.c.l.b16 %v2277
      %v2310 = vunpack.c.l.b16 %v2278
      %v2311 = vunpack.c.l.b16 %v2279
      %v2312 = vunpack.c.l.b16 %v2280
      %v2313 = vunpack.c.l.b16 %v2281
      %v2314 = vpack.c.b16 %v2299, %v2298
      %v2315 = vpack.c.b16 %v2301, %v2300
      %v2316 = vpack.c.b16 %v2303, %v2302
      %v2317 = vpack.c.b16 %v2305, %v2304
      %v2318 = vpack.c.b16 %v2307, %v2306
      %v2319 = vpack.c.b16 %v2309, %v2308
      %v2320 = vpack.c.b16 %v2311, %v2310
      %v2321 = vpack.c.b16 %v2313, %v2312
      %2330 = vmatprep.subr.bf16.mxu0 0
      %2331 = vmatpush1.bf16.msra.mxu0 %v2314
      %2332 = vmatprep.subr.bf16.mxu0 0
      %2333 = vmatpush1.bf16.msra.mxu0 %v2315
      %2334 = vmatprep.subr.bf16.mxu0 0
      %2335 = vmatpush1.bf16.msra.mxu0 %v2316
      %2336 = vmatprep.subr.bf16.mxu0 0
      %2337 = vmatpush1.bf16.msra.mxu0 %v2317
      %2338 = vmatprep.subr.bf16.mxu0 0
      %2339 = vmatpush1.bf16.msra.mxu0 %v2318
      %2340 = vmatprep.subr.bf16.mxu0 0
      %2341 = vmatpush1.bf16.msra.mxu0 %v2319
      %2342 = vmatprep.subr.bf16.mxu0 0
      %2343 = vmatpush1.bf16.msra.mxu0 %v2320
      %2344 = vmatprep.subr.bf16.mxu0 0
      %2345 = vmatpush1.bf16.msra.mxu0 %v2321
      %2346 = vmatprep.subr.bf16.mxu0 0
      %2347 = vmatpush1.bf16.msra.mxu0 0
      %2348 = vmatprep.subr.bf16.mxu0 0
      %2349 = vmatpush1.bf16.msra.mxu0 0
      %2350 = vmatprep.subr.bf16.mxu0 0
      %2351 = vmatpush1.bf16.msra.mxu0 0
      %2352 = vmatprep.subr.bf16.mxu0 0
      %2353 = vmatpush1.bf16.msra.mxu0 0
      %2354 = vmatprep.subr.bf16.mxu0 0
      %2355 = vmatpush1.bf16.msra.mxu0 0
      %2356 = vmatprep.subr.bf16.mxu0 0
      %2357 = vmatpush1.bf16.msra.mxu0 0
      %2358 = vmatprep.subr.bf16.mxu0 0
      %2359 = vmatpush1.bf16.msra.mxu0 0
      %2360 = vmatprep.subr.bf16.mxu0 0
      %2361 = vmatpush1.bf16.msra.mxu0 0
      %2362 = vmatprep.mubr.bf16.mxu0 0
      %2363 = vmatmul.mubr.bf16.gmra.mrb[0].mxu0 %v1523
      %v2364 = vpop.f32.mrb[0].mxu0
      %v2365 = vadd.f32 0.0, %v2364
      %v2366 = vpop.f32.mrb[0].mxu0
      %v2367 = vpop.f32.mrb[0].mxu0
      %v2368 = vadd.f32 0.0, %v2367
      %v2369 = vpop.f32.mrb[0].mxu0
      %2370 = vmatprep.mubr.bf16.mxu0 0
      %2371 = vmatmul.mubr.bf16.gmra.mrb[0].mxu0 %v1524
      %v2372 = vpop.f32.mrb[0].mxu0
      %v2373 = vadd.f32 0.0, %v2372
      %v2374 = vpop.f32.mrb[0].mxu0
      %v2375 = vpop.f32.mrb[0].mxu0
      %v2376 = vadd.f32 0.0, %v2375
      %v2377 = vpop.f32.mrb[0].mxu0
      %2378 = vmatprep.mubr.bf16.mxu0 0
      %2379 = vmatmul.mubr.bf16.gmra.mrb[0].mxu0 %v1525
      %v2380 = vpop.f32.mrb[0].mxu0
      %v2381 = vadd.f32 0.0, %v2380
      %v2382 = vpop.f32.mrb[0].mxu0
      %v2383 = vpop.f32.mrb[0].mxu0
      %v2384 = vadd.f32 0.0, %v2383
      %v2385 = vpop.f32.mrb[0].mxu0
      %2386 = vmatprep.mubr.bf16.mxu0 0
      %2387 = vmatmul.mubr.bf16.gmra.mrb[0].mxu0 %v1526
      %v2388 = vpop.f32.mrb[0].mxu0
      %v2389 = vadd.f32 0.0, %v2388
      %v2390 = vpop.f32.mrb[0].mxu0
      %v2391 = vpop.f32.mrb[0].mxu0
      %v2392 = vadd.f32 0.0, %v2391
      %v2393 = vpop.f32.mrb[0].mxu0
      %2394 = vmatprep.mubr.bf16.mxu0 0
      %2395 = vmatmul.mubr.bf16.gmra.mrb[0].mxu0 %v1527
      %v2396 = vpop.f32.mrb[0].mxu0
      %v2397 = vadd.f32 0.0, %v2396
      %v2398 = vpop.f32.mrb[0].mxu0
      %v2399 = vpop.f32.mrb[0].mxu0
      %v2400 = vadd.f32 0.0, %v2399
      %v2401 = vpop.f32.mrb[0].mxu0
      %2402 = vmatprep.mubr.bf16.mxu0 0
      %2403 = vmatmul.mubr.bf16.gmra.mrb[0].mxu0 %v1528
      %v2404 = vpop.f32.mrb[0].mxu0
      %v2405 = vadd.f32 0.0, %v2404
      %v2406 = vpop.f32.mrb[0].mxu0
      %v2407 = vpop.f32.mrb[0].mxu0
      %v2408 = vadd.f32 0.0, %v2407
      %v2409 = vpop.f32.mrb[0].mxu0
      %2410 = vmatprep.mubr.bf16.mxu0 0
      %2411 = vmatmul.mubr.bf16.gmra.mrb[0].mxu0 %v1529
      %v2412 = vpop.f32.mrb[0].mxu0
      %v2413 = vadd.f32 0.0, %v2412
      %v2414 = vpop.f32.mrb[0].mxu0
      %v2415 = vpop.f32.mrb[0].mxu0
      %v2416 = vadd.f32 0.0, %v2415
      %v2417 = vpop.f32.mrb[0].mxu0
      %2418 = vmatprep.mubr.bf16.mxu0 0
      %2419 = vmatmul.mubr.bf16.gmra.mrb[0].mxu0 %v1530
      %v2420 = vpop.f32.mrb[0].mxu0
      %v2421 = vadd.f32 0.0, %v2420
      %v2422 = vpop.f32.mrb[0].mxu0
      %v2423 = vpop.f32.mrb[0].mxu0
      %v2424 = vadd.f32 0.0, %v2423
      %v2425 = vpop.f32.mrb[0].mxu0
      %2426 = vmatprep.mubr.bf16.mxu0 0
      %2427 = vmatmul.mubr.bf16.gmra.mrb[0].mxu0 %v1531
      %v2428 = vpop.f32.mrb[0].mxu0
      %v2429 = vadd.f32 0.0, %v2428
      %v2430 = vpop.f32.mrb[0].mxu0
      %v2431 = vpop.f32.mrb[0].mxu0
      %v2432 = vadd.f32 0.0, %v2431
      %v2433 = vpop.f32.mrb[0].mxu0
      %2434 = vmatprep.mubr.bf16.mxu0 0
      %2435 = vmatmul.mubr.bf16.gmra.mrb[0].mxu0 %v1532
      %v2436 = vpop.f32.mrb[0].mxu0
      %v2437 = vadd.f32 0.0, %v2436
      %v2438 = vpop.f32.mrb[0].mxu0
      %v2439 = vpop.f32.mrb[0].mxu0
      %v2440 = vadd.f32 0.0, %v2439
      %v2441 = vpop.f32.mrb[0].mxu0
      %2442 = vmatprep.mubr.bf16.mxu0 0
      %2443 = vmatmul.mubr.bf16.gmra.mrb[0].mxu0 %v1533
      %v2444 = vpop.f32.mrb[0].mxu0
      %v2445 = vadd.f32 0.0, %v2444
      %v2446 = vpop.f32.mrb[0].mxu0
      %v2447 = vpop.f32.mrb[0].mxu0
      %v2448 = vadd.f32 0.0, %v2447
      %v2449 = vpop.f32.mrb[0].mxu0
      %2450 = vmatprep.mubr.bf16.mxu0 0
      %2451 = vmatmul.mubr.bf16.gmra.mrb[0].mxu0 %v1534
      %v2452 = vpop.f32.mrb[0].mxu0
      %v2453 = vadd.f32 0.0, %v2452
      %v2454 = vpop.f32.mrb[0].mxu0
      %v2455 = vpop.f32.mrb[0].mxu0
      %v2456 = vadd.f32 0.0, %v2455
      %v2457 = vpop.f32.mrb[0].mxu0
      %2458 = vmatprep.mubr.bf16.mxu0 0
      %2459 = vmatmul.mubr.bf16.gmra.mrb[0].mxu0 %v1535
      %v2460 = vpop.f32.mrb[0].mxu0
      %v2461 = vadd.f32 0.0, %v2460
      %v2462 = vpop.f32.mrb[0].mxu0
      %v2463 = vpop.f32.mrb[0].mxu0
      %v2464 = vadd.f32 0.0, %v2463
      %v2465 = vpop.f32.mrb[0].mxu0
      %2466 = vmatprep.mubr.bf16.mxu0 0
      %2467 = vmatmul.mubr.bf16.gmra.mrb[0].mxu0 %v1536
      %v2468 = vpop.f32.mrb[0].mxu0
      %v2469 = vadd.f32 0.0, %v2468
      %v2470 = vpop.f32.mrb[0].mxu0
      %v2471 = vpop.f32.mrb[0].mxu0
      %v2472 = vadd.f32 0.0, %v2471
      %v2473 = vpop.f32.mrb[0].mxu0
      %2474 = vmatprep.mubr.bf16.mxu0 0
      %2475 = vmatmul.mubr.bf16.gmra.mrb[0].mxu0 %v1537
      %v2476 = vpop.f32.mrb[0].mxu0
      %v2477 = vadd.f32 0.0, %v2476
      %v2478 = vpop.f32.mrb[0].mxu0
      %v2479 = vpop.f32.mrb[0].mxu0
      %v2480 = vadd.f32 0.0, %v2479
      %v2481 = vpop.f32.mrb[0].mxu0
      %2482 = vmatprep.mubr.bf16.mxu0 0
      %2483 = vmatmul.mubr.bf16.gmra.mrb[0].mxu0 %v1538
      %v2484 = vpop.f32.mrb[0].mxu0
      %v2485 = vadd.f32 0.0, %v2484
      %v2486 = vpop.f32.mrb[0].mxu0
      %v2487 = vpop.f32.mrb[0].mxu0
      %v2488 = vadd.f32 0.0, %v2487
      %v2489 = vpop.f32.mrb[0].mxu0
      %2490 = vdwg.mxu0
      %v2507 = vunpack.c.l.b16 %v2249
      %v2508 = vunpack.c.l.b16 %v2250
      %v2509 = vunpack.c.l.b16 %v2251
      %v2510 = vunpack.c.l.b16 %v2252
      %v2511 = vunpack.c.l.b16 %v2253
      %v2512 = vunpack.c.l.b16 %v2254
      %v2513 = vunpack.c.l.b16 %v2255
      %v2514 = vunpack.c.l.b16 %v2256
      %v2515 = vunpack.c.l.b16 %v2257
      %v2516 = vunpack.c.l.b16 %v2258
      %v2517 = vunpack.c.l.b16 %v2259
      %v2518 = vunpack.c.l.b16 %v2260
      %v2519 = vunpack.c.l.b16 %v2261
      %v2520 = vunpack.c.l.b16 %v2262
      %v2521 = vunpack.c.l.b16 %v2263
      %v2522 = vunpack.c.l.b16 %v2264
      %v2523 = vpack.c.b16 %v2508, %v2507
      %v2524 = vpack.c.b16 %v2510, %v2509
      %v2525 = vpack.c.b16 %v2512, %v2511
      %v2526 = vpack.c.b16 %v2514, %v2513
      %v2527 = vpack.c.b16 %v2516, %v2515
      %v2528 = vpack.c.b16 %v2518, %v2517
      %v2529 = vpack.c.b16 %v2520, %v2519
      %v2530 = vpack.c.b16 %v2522, %v2521
      %2539 = vmatprep.subr.bf16.mxu0 0
      %2540 = vmatpush1.bf16.msra.mxu0 %v2523
      %2541 = vmatprep.subr.bf16.mxu0 0
      %2542 = vmatpush1.bf16.msra.mxu0 %v2524
      %2543 = vmatprep.subr.bf16.mxu0 0
      %2544 = vmatpush1.bf16.msra.mxu0 %v2525
      %2545 = vmatprep.subr.bf16.mxu0 0
      %2546 = vmatpush1.bf16.msra.mxu0 %v2526
      %2547 = vmatprep.subr.bf16.mxu0 0
      %2548 = vmatpush1.bf16.msra.mxu0 %v2527
      %2549 = vmatprep.subr.bf16.mxu0 0
      %2550 = vmatpush1.bf16.msra.mxu0 %v2528
      %2551 = vmatprep.subr.bf16.mxu0 0
      %2552 = vmatpush1.bf16.msra.mxu0 %v2529
      %2553 = vmatprep.subr.bf16.mxu0 0
      %2554 = vmatpush1.bf16.msra.mxu0 %v2530
      %2555 = vmatprep.subr.bf16.mxu0 0
      %2556 = vmatpush1.bf16.msra.mxu0 0
      %2557 = vmatprep.subr.bf16.mxu0 0
      %2558 = vmatpush1.bf16.msra.mxu0 0
      %2559 = vmatprep.subr.bf16.mxu0 0
      %2560 = vmatpush1.bf16.msra.mxu0 0
      %2561 = vmatprep.subr.bf16.mxu0 0
      %2562 = vmatpush1.bf16.msra.mxu0 0
      %2563 = vmatprep.subr.bf16.mxu0 0
      %2564 = vmatpush1.bf16.msra.mxu0 0
      %2565 = vmatprep.subr.bf16.mxu0 0
      %2566 = vmatpush1.bf16.msra.mxu0 0
      %2567 = vmatprep.subr.bf16.mxu0 0
      %2568 = vmatpush1.bf16.msra.mxu0 0
      %2569 = vmatprep.subr.bf16.mxu0 0
      %2570 = vmatpush1.bf16.msra.mxu0 0
      %2571 = vmatprep.mubr.bf16.mxu0 0
      %2572 = vmatmul.mubr.bf16.gmra.mrb[0].mxu0 0
      %v2573 = vpop.f32.mrb[0].mxu0
      %v2574 = vadd.f32 %v2365, %v2573
      %v2575 = vpop.f32.mrb[0].mxu0
      %v2576 = vpop.f32.mrb[0].mxu0
      %v2577 = vadd.f32 %v2368, %v2576
      %v2578 = vpop.f32.mrb[0].mxu0
      %2579 = vmatprep.mubr.bf16.mxu0 0
      %2580 = vmatmul.mubr.bf16.gmra.mrb[0].mxu0 %v1523
      %v2581 = vpop.f32.mrb[0].mxu0
      %v2582 = vadd.f32 %v2373, %v2581
      %v2583 = vpop.f32.mrb[0].mxu0
      %v2584 = vpop.f32.mrb[0].mxu0
      %v2585 = vadd.f32 %v2376, %v2584
      %v2586 = vpop.f32.mrb[0].mxu0
      %2587 = vmatprep.mubr.bf16.mxu0 0
      %2588 = vmatmul.mubr.bf16.gmra.mrb[0].mxu0 %v1524
      %v2589 = vpop.f32.mrb[0].mxu0
      %v2590 = vadd.f32 %v2381, %v2589
      %v2591 = vpop.f32.mrb[0].mxu0
      %v2592 = vpop.f32.mrb[0].mxu0
      %v2593 = vadd.f32 %v2384, %v2592
      %v2594 = vpop.f32.mrb[0].mxu0
      %2595 = vmatprep.mubr.bf16.mxu0 0
      %2596 = vmatmul.mubr.bf16.gmra.mrb[0].mxu0 %v1525
      %v2597 = vpop.f32.mrb[0].mxu0
      %v2598 = vadd.f32 %v2389, %v2597
      %v2599 = vpop.f32.mrb[0].mxu0
      %v2600 = vpop.f32.mrb[0].mxu0
      %v2601 = vadd.f32 %v2392, %v2600
      %v2602 = vpop.f32.mrb[0].mxu0
      %2603 = vmatprep.mubr.bf16.mxu0 0
      %2604 = vmatmul.mubr.bf16.gmra.mrb[0].mxu0 %v1526
      %v2605 = vpop.f32.mrb[0].mxu0
      %v2606 = vadd.f32 %v2397, %v2605
      %v2607 = vpop.f32.mrb[0].mxu0
      %v2608 = vpop.f32.mrb[0].mxu0
      %v2609 = vadd.f32 %v2400, %v2608
      %v2610 = vpop.f32.mrb[0].mxu0
      %2611 = vmatprep.mubr.bf16.mxu0 0
      %2612 = vmatmul.mubr.bf16.gmra.mrb[0].mxu0 %v1527
      %v2613 = vpop.f32.mrb[0].mxu0
      %v2614 = vadd.f32 %v2405, %v2613
      %v2615 = vpop.f32.mrb[0].mxu0
      %v2616 = vpop.f32.mrb[0].mxu0
      %v2617 = vadd.f32 %v2408, %v2616
      %v2618 = vpop.f32.mrb[0].mxu0
      %2619 = vmatprep.mubr.bf16.mxu0 0
      %2620 = vmatmul.mubr.bf16.gmra.mrb[0].mxu0 %v1528
      %v2621 = vpop.f32.mrb[0].mxu0
      %v2622 = vadd.f32 %v2413, %v2621
      %v2623 = vpop.f32.mrb[0].mxu0
      %v2624 = vpop.f32.mrb[0].mxu0
      %v2625 = vadd.f32 %v2416, %v2624
      %v2626 = vpop.f32.mrb[0].mxu0
      %2627 = vmatprep.mubr.bf16.mxu0 0
      %2628 = vmatmul.mubr.bf16.gmra.mrb[0].mxu0 %v1529
      %v2629 = vpop.f32.mrb[0].mxu0
      %v2630 = vadd.f32 %v2421, %v2629
      %v2631 = vpop.f32.mrb[0].mxu0
      %v2632 = vpop.f32.mrb[0].mxu0
      %v2633 = vadd.f32 %v2424, %v2632
      %v2634 = vpop.f32.mrb[0].mxu0
      %2635 = vmatprep.mubr.bf16.mxu0 0
      %2636 = vmatmul.mubr.bf16.gmra.mrb[0].mxu0 %v1530
      %v2637 = vpop.f32.mrb[0].mxu0
      %v2638 = vadd.f32 %v2429, %v2637
      %v2639 = vpop.f32.mrb[0].mxu0
      %v2640 = vpop.f32.mrb[0].mxu0
      %v2641 = vadd.f32 %v2432, %v2640
      %v2642 = vpop.f32.mrb[0].mxu0
      %2643 = vmatprep.mubr.bf16.mxu0 0
      %2644 = vmatmul.mubr.bf16.gmra.mrb[0].mxu0 %v1531
      %v2645 = vpop.f32.mrb[0].mxu0
      %v2646 = vadd.f32 %v2437, %v2645
      %v2647 = vpop.f32.mrb[0].mxu0
      %v2648 = vpop.f32.mrb[0].mxu0
      %v2649 = vadd.f32 %v2440, %v2648
      %v2650 = vpop.f32.mrb[0].mxu0
      %2651 = vmatprep.mubr.bf16.mxu0 0
      %2652 = vmatmul.mubr.bf16.gmra.mrb[0].mxu0 %v1532
      %v2653 = vpop.f32.mrb[0].mxu0
      %v2654 = vadd.f32 %v2445, %v2653
      %v2655 = vpop.f32.mrb[0].mxu0
      %v2656 = vpop.f32.mrb[0].mxu0
      %v2657 = vadd.f32 %v2448, %v2656
      %v2658 = vpop.f32.mrb[0].mxu0
      %2659 = vmatprep.mubr.bf16.mxu0 0
      %2660 = vmatmul.mubr.bf16.gmra.mrb[0].mxu0 %v1533
      %v2661 = vpop.f32.mrb[0].mxu0
      %v2662 = vadd.f32 %v2453, %v2661
      %v2663 = vpop.f32.mrb[0].mxu0
      %v2664 = vpop.f32.mrb[0].mxu0
      %v2665 = vadd.f32 %v2456, %v2664
      %v2666 = vpop.f32.mrb[0].mxu0
      %2667 = vmatprep.mubr.bf16.mxu0 0
      %2668 = vmatmul.mubr.bf16.gmra.mrb[0].mxu0 %v1534
      %v2669 = vpop.f32.mrb[0].mxu0
      %v2670 = vadd.f32 %v2461, %v2669
      %v2671 = vpop.f32.mrb[0].mxu0
      %v2672 = vpop.f32.mrb[0].mxu0
      %v2673 = vadd.f32 %v2464, %v2672
      %v2674 = vpop.f32.mrb[0].mxu0
      %2675 = vmatprep.mubr.bf16.mxu0 0
      %2676 = vmatmul.mubr.bf16.gmra.mrb[0].mxu0 %v1535
      %v2677 = vpop.f32.mrb[0].mxu0
      %v2678 = vadd.f32 %v2469, %v2677
      %v2679 = vpop.f32.mrb[0].mxu0
      %v2680 = vpop.f32.mrb[0].mxu0
      %v2681 = vadd.f32 %v2472, %v2680
      %v2682 = vpop.f32.mrb[0].mxu0
      %2683 = vmatprep.mubr.bf16.mxu0 0
      %2684 = vmatmul.mubr.bf16.gmra.mrb[0].mxu0 %v1536
      %v2685 = vpop.f32.mrb[0].mxu0
      %v2686 = vadd.f32 %v2477, %v2685
      %v2687 = vpop.f32.mrb[0].mxu0
      %v2688 = vpop.f32.mrb[0].mxu0
      %v2689 = vadd.f32 %v2480, %v2688
      %v2690 = vpop.f32.mrb[0].mxu0
      %2691 = vmatprep.mubr.bf16.mxu0 0
      %2692 = vmatmul.mubr.bf16.gmra.mrb[0].mxu0 %v1537
      %v2693 = vpop.f32.mrb[0].mxu0
      %v2694 = vadd.f32 %v2485, %v2693
      %v2695 = vpop.f32.mrb[0].mxu0
      %v2696 = vpop.f32.mrb[0].mxu0
      %v2697 = vadd.f32 %v2488, %v2696
      %v2698 = vpop.f32.mrb[0].mxu0
      %2699 = vdwg.mxu0
      %s2700 = scalar_lea.vmem %s5, 384
      %v2701 = vld [vmem:[%s2700] sm:$0xf]
      %v2702 = vld [vmem:[%s2700 + $0x4] sm:$0xf]
      %v2703 = vld [vmem:[%s2700 + $0x8] sm:$0xf]
      %v2704 = vld [vmem:[%s2700 + $0xc] sm:$0xf]
      %v2705 = vld [vmem:[%s2700 + $0x10] sm:$0xf]
      %v2706 = vld [vmem:[%s2700 + $0x14] sm:$0xf]
      %v2707 = vld [vmem:[%s2700 + $0x18] sm:$0xf]
      %v2708 = vld [vmem:[%s2700 + $0x1c] sm:$0xf]
      %v2709 = vld [vmem:[%s2700 + $0x20] sm:$0xf]
      %v2710 = vld [vmem:[%s2700 + $0x24] sm:$0xf]
      %v2711 = vld [vmem:[%s2700 + $0x28] sm:$0xf]
      %v2712 = vld [vmem:[%s2700 + $0x2c] sm:$0xf]
      %v2713 = vld [vmem:[%s2700 + $0x30] sm:$0xf]
      %v2714 = vld [vmem:[%s2700 + $0x34] sm:$0xf]
      %v2715 = vld [vmem:[%s2700 + $0x38] sm:$0xf]
      %v2716 = vld [vmem:[%s2700 + $0x3c] sm:$0xf]
      %v2733 = vunpack.c.l.b16 %v2701
      %v2734 = vunpack.c.l.b16 %v2702
      %v2735 = vunpack.c.l.b16 %v2703
      %v2736 = vunpack.c.l.b16 %v2704
      %v2737 = vunpack.c.l.b16 %v2705
      %v2738 = vunpack.c.l.b16 %v2706
      %v2739 = vunpack.c.l.b16 %v2707
      %v2740 = vunpack.c.l.b16 %v2708
      %v2741 = vunpack.c.l.b16 %v2709
      %v2742 = vunpack.c.l.b16 %v2710
      %v2743 = vunpack.c.l.b16 %v2711
      %v2744 = vunpack.c.l.b16 %v2712
      %v2745 = vunpack.c.l.b16 %v2713
      %v2746 = vunpack.c.l.b16 %v2714
      %v2747 = vunpack.c.l.b16 %v2715
      %v2748 = vunpack.c.l.b16 %v2716
      %v2749 = vpack.c.b16 %v2734, %v2733
      %v2750 = vpack.c.b16 %v2736, %v2735
      %v2751 = vpack.c.b16 %v2738, %v2737
      %v2752 = vpack.c.b16 %v2740, %v2739
      %v2753 = vpack.c.b16 %v2742, %v2741
      %v2754 = vpack.c.b16 %v2744, %v2743
      %v2755 = vpack.c.b16 %v2746, %v2745
      %v2756 = vpack.c.b16 %v2748, %v2747
      %2765 = vmatprep.subr.bf16.mxu0 0
      %2766 = vmatpush1.bf16.msra.mxu0 %v2749
      %2767 = vmatprep.subr.bf16.mxu0 0
      %2768 = vmatpush1.bf16.msra.mxu0 %v2750
      %2769 = vmatprep.subr.bf16.mxu0 0
      %2770 = vmatpush1.bf16.msra.mxu0 %v2751
      %2771 = vmatprep.subr.bf16.mxu0 0
      %2772 = vmatpush1.bf16.msra.mxu0 %v2752
      %2773 = vmatprep.subr.bf16.mxu0 0
      %2774 = vmatpush1.bf16.msra.mxu0 %v2753
      %2775 = vmatprep.subr.bf16.mxu0 0
      %2776 = vmatpush1.bf16.msra.mxu0 %v2754
      %2777 = vmatprep.subr.bf16.mxu0 0
      %2778 = vmatpush1.bf16.msra.mxu0 %v2755
      %2779 = vmatprep.subr.bf16.mxu0 0
      %2780 = vmatpush1.bf16.msra.mxu0 %v2756
      %2781 = vmatprep.subr.bf16.mxu0 0
      %2782 = vmatpush1.bf16.msra.mxu0 0
      %2783 = vmatprep.subr.bf16.mxu0 0
      %2784 = vmatpush1.bf16.msra.mxu0 0
      %2785 = vmatprep.subr.bf16.mxu0 0
      %2786 = vmatpush1.bf16.msra.mxu0 0
      %2787 = vmatprep.subr.bf16.mxu0 0
      %2788 = vmatpush1.bf16.msra.mxu0 0
      %2789 = vmatprep.subr.bf16.mxu0 0
      %2790 = vmatpush1.bf16.msra.mxu0 0
      %2791 = vmatprep.subr.bf16.mxu0 0
      %2792 = vmatpush1.bf16.msra.mxu0 0
      %2793 = vmatprep.subr.bf16.mxu0 0
      %2794 = vmatpush1.bf16.msra.mxu0 0
      %2795 = vmatprep.subr.bf16.mxu0 0
      %2796 = vmatpush1.bf16.msra.mxu0 0
      %2797 = vmatprep.mubr.bf16.mxu0 0
      %2798 = vmatmul.mubr.bf16.gmra.mrb[0].mxu0 %v1524
      %v2799 = vpop.f32.mrb[0].mxu0
      %v2800 = vadd.f32 0.0, %v2799
      %v2801 = vpop.f32.mrb[0].mxu0
      %v2802 = vpop.f32.mrb[0].mxu0
      %v2803 = vadd.f32 0.0, %v2802
      %v2804 = vpop.f32.mrb[0].mxu0
      %2805 = vmatprep.mubr.bf16.mxu0 0
      %2806 = vmatmul.mubr.bf16.gmra.mrb[0].mxu0 %v1525
      %v2807 = vpop.f32.mrb[0].mxu0
      %v2808 = vadd.f32 0.0, %v2807
      %v2809 = vpop.f32.mrb[0].mxu0
      %v2810 = vpop.f32.mrb[0].mxu0
      %v2811 = vadd.f32 0.0, %v2810
      %v2812 = vpop.f32.mrb[0].mxu0
      %2813 = vmatprep.mubr.bf16.mxu0 0
      %2814 = vmatmul.mubr.bf16.gmra.mrb[0].mxu0 %v1526
      %v2815 = vpop.f32.mrb[0].mxu0
      %v2816 = vadd.f32 0.0, %v2815
      %v2817 = vpop.f32.mrb[0].mxu0
      %v2818 = vpop.f32.mrb[0].mxu0
      %v2819 = vadd.f32 0.0, %v2818
      %v2820 = vpop.f32.mrb[0].mxu0
      %2821 = vmatprep.mubr.bf16.mxu0 0
      %2822 = vmatmul.mubr.bf16.gmra.mrb[0].mxu0 %v1527
      %v2823 = vpop.f32.mrb[0].mxu0
      %v2824 = vadd.f32 0.0, %v2823
      %v2825 = vpop.f32.mrb[0].mxu0
      %v2826 = vpop.f32.mrb[0].mxu0
      %v2827 = vadd.f32 0.0, %v2826
      %v2828 = vpop.f32.mrb[0].mxu0
      %2829 = vmatprep.mubr.bf16.mxu0 0
      %2830 = vmatmul.mubr.bf16.gmra.mrb[0].mxu0 %v1528
      %v2831 = vpop.f32.mrb[0].mxu0
      %v2832 = vadd.f32 0.0, %v2831
      %v2833 = vpop.f32.mrb[0].mxu0
      %v2834 = vpop.f32.mrb[0].mxu0
      %v2835 = vadd.f32 0.0, %v2834
      %v2836 = vpop.f32.mrb[0].mxu0
      %2837 = vmatprep.mubr.bf16.mxu0 0
      %2838 = vmatmul.mubr.bf16.gmra.mrb[0].mxu0 %v1529
      %v2839 = vpop.f32.mrb[0].mxu0
      %v2840 = vadd.f32 0.0, %v2839
      %v2841 = vpop.f32.mrb[0].mxu0
      %v2842 = vpop.f32.mrb[0].mxu0
      %v2843 = vadd.f32 0.0, %v2842
      %v2844 = vpop.f32.mrb[0].mxu0
      %2845 = vmatprep.mubr.bf16.mxu0 0
      %2846 = vmatmul.mubr.bf16.gmra.mrb[0].mxu0 %v1530
      %v2847 = vpop.f32.mrb[0].mxu0
      %v2848 = vadd.f32 0.0, %v2847
      %v2849 = vpop.f32.mrb[0].mxu0
      %v2850 = vpop.f32.mrb[0].mxu0
      %v2851 = vadd.f32 0.0, %v2850
      %v2852 = vpop.f32.mrb[0].mxu0
      %2853 = vmatprep.mubr.bf16.mxu0 0
      %2854 = vmatmul.mubr.bf16.gmra.mrb[0].mxu0 %v1531
      %v2855 = vpop.f32.mrb[0].mxu0
      %v2856 = vadd.f32 0.0, %v2855
      %v2857 = vpop.f32.mrb[0].mxu0
      %v2858 = vpop.f32.mrb[0].mxu0
      %v2859 = vadd.f32 0.0, %v2858
      %v2860 = vpop.f32.mrb[0].mxu0
      %2861 = vmatprep.mubr.bf16.mxu0 0
      %2862 = vmatmul.mubr.bf16.gmra.mrb[0].mxu0 %v1532
      %v2863 = vpop.f32.mrb[0].mxu0
      %v2864 = vadd.f32 0.0, %v2863
      %v2865 = vpop.f32.mrb[0].mxu0
      %v2866 = vpop.f32.mrb[0].mxu0
      %v2867 = vadd.f32 0.0, %v2866
      %v2868 = vpop.f32.mrb[0].mxu0
      %2869 = vmatprep.mubr.bf16.mxu0 0
      %2870 = vmatmul.mubr.bf16.gmra.mrb[0].mxu0 %v1533
      %v2871 = vpop.f32.mrb[0].mxu0
      %v2872 = vadd.f32 0.0, %v2871
      %v2873 = vpop.f32.mrb[0].mxu0
      %v2874 = vpop.f32.mrb[0].mxu0
      %v2875 = vadd.f32 0.0, %v2874
      %v2876 = vpop.f32.mrb[0].mxu0
      %2877 = vmatprep.mubr.bf16.mxu0 0
      %2878 = vmatmul.mubr.bf16.gmra.mrb[0].mxu0 %v1534
      %v2879 = vpop.f32.mrb[0].mxu0
      %v2880 = vadd.f32 0.0, %v2879
      %v2881 = vpop.f32.mrb[0].mxu0
      %v2882 = vpop.f32.mrb[0].mxu0
      %v2883 = vadd.f32 0.0, %v2882
      %v2884 = vpop.f32.mrb[0].mxu0
      %2885 = vmatprep.mubr.bf16.mxu0 0
      %2886 = vmatmul.mubr.bf16.gmra.mrb[0].mxu0 %v1535
      %v2887 = vpop.f32.mrb[0].mxu0
      %v2888 = vadd.f32 0.0, %v2887
      %v2889 = vpop.f32.mrb[0].mxu0
      %v2890 = vpop.f32.mrb[0].mxu0
      %v2891 = vadd.f32 0.0, %v2890
      %v2892 = vpop.f32.mrb[0].mxu0
      %2893 = vmatprep.mubr.bf16.mxu0 0
      %2894 = vmatmul.mubr.bf16.gmra.mrb[0].mxu0 %v1536
      %v2895 = vpop.f32.mrb[0].mxu0
      %v2896 = vadd.f32 0.0, %v2895
      %v2897 = vpop.f32.mrb[0].mxu0
      %v2898 = vpop.f32.mrb[0].mxu0
      %v2899 = vadd.f32 0.0, %v2898
      %v2900 = vpop.f32.mrb[0].mxu0
      %2901 = vmatprep.mubr.bf16.mxu0 0
      %2902 = vmatmul.mubr.bf16.gmra.mrb[0].mxu0 %v1537
      %v2903 = vpop.f32.mrb[0].mxu0
      %v2904 = vadd.f32 0.0, %v2903
      %v2905 = vpop.f32.mrb[0].mxu0
      %v2906 = vpop.f32.mrb[0].mxu0
      %v2907 = vadd.f32 0.0, %v2906
      %v2908 = vpop.f32.mrb[0].mxu0
      %2909 = vmatprep.mubr.bf16.mxu0 0
      %2910 = vmatmul.mubr.bf16.gmra.mrb[0].mxu0 %v1538
      %v2911 = vpop.f32.mrb[0].mxu0
      %v2912 = vadd.f32 0.0, %v2911
      %v2913 = vpop.f32.mrb[0].mxu0
      %v2914 = vpop.f32.mrb[0].mxu0
      %v2915 = vadd.f32 0.0, %v2914
      %v2916 = vpop.f32.mrb[0].mxu0
      %2917 = vmatprep.mubr.bf16.mxu0 0
      %2918 = vmatmul.mubr.bf16.gmra.mrb[0].mxu0 0
      %v2919 = vpop.f32.mrb[0].mxu0
      %v2920 = vadd.f32 0.0, %v2919
      %v2921 = vpop.f32.mrb[0].mxu0
      %v2922 = vpop.f32.mrb[0].mxu0
      %v2923 = vadd.f32 0.0, %v2922
      %v2924 = vpop.f32.mrb[0].mxu0
      %2925 = vdwg.mxu0
      %v2926 = vadd.f32 %v2574, %v2800
      %v2927 = vadd.f32 %v2577, %v2803
      %v2928 = vadd.f32 %v2582, %v2808
      %v2929 = vadd.f32 %v2585, %v2811
      %v2930 = vadd.f32 %v2590, %v2816
      %v2931 = vadd.f32 %v2593, %v2819
      %v2932 = vadd.f32 %v2598, %v2824
      %v2933 = vadd.f32 %v2601, %v2827
      %v2934 = vadd.f32 %v2606, %v2832
      %v2935 = vadd.f32 %v2609, %v2835
      %v2936 = vadd.f32 %v2614, %v2840
      %v2937 = vadd.f32 %v2617, %v2843
      %v2938 = vadd.f32 %v2622, %v2848
      %v2939 = vadd.f32 %v2625, %v2851
      %v2940 = vadd.f32 %v2630, %v2856
      %v2941 = vadd.f32 %v2633, %v2859
      %v2942 = vadd.f32 %v2638, %v2864
      %v2943 = vadd.f32 %v2641, %v2867
      %v2944 = vadd.f32 %v2646, %v2872
      %v2945 = vadd.f32 %v2649, %v2875
      %v2946 = vadd.f32 %v2654, %v2880
      %v2947 = vadd.f32 %v2657, %v2883
      %v2948 = vadd.f32 %v2662, %v2888
      %v2949 = vadd.f32 %v2665, %v2891
      %v2950 = vadd.f32 %v2670, %v2896
      %v2951 = vadd.f32 %v2673, %v2899
      %v2952 = vadd.f32 %v2678, %v2904
      %v2953 = vadd.f32 %v2681, %v2907
      %v2954 = vadd.f32 %v2686, %v2912
      %v2955 = vadd.f32 %v2689, %v2915
      %v2956 = vadd.f32 %v2694, %v2920
      %v2957 = vadd.f32 %v2697, %v2923
      %v2958 = vrot.slane %v2926, 7
      %v2959 = vrot.slane %v2927, 7
      %v2960 = vrot.slane %v2928, 7
      %v2961 = vrot.slane %v2929, 7
      %v2962 = vrot.slane %v2930, 7
      %v2963 = vrot.slane %v2931, 7
      %v2964 = vrot.slane %v2932, 7
      %v2965 = vrot.slane %v2933, 7
      %v2966 = vrot.slane %v2934, 7
      %v2967 = vrot.slane %v2935, 7
      %v2968 = vrot.slane %v2936, 7
      %v2969 = vrot.slane %v2937, 7
      %v2970 = vrot.slane %v2938, 7
      %v2971 = vrot.slane %v2939, 7
      %v2972 = vrot.slane %v2940, 7
      %v2973 = vrot.slane %v2941, 7
      %v2974 = vrot.slane %v2942, 7
      %v2975 = vrot.slane %v2943, 7
      %v2976 = vrot.slane %v2944, 7
      %v2977 = vrot.slane %v2945, 7
      %v2978 = vrot.slane %v2946, 7
      %v2979 = vrot.slane %v2947, 7
      %v2980 = vrot.slane %v2948, 7
      %v2981 = vrot.slane %v2949, 7
      %v2982 = vrot.slane %v2950, 7
      %v2983 = vrot.slane %v2951, 7
      %v2984 = vrot.slane %v2952, 7
      %v2985 = vrot.slane %v2953, 7
      %v2986 = vrot.slane %v2954, 7
      %v2987 = vrot.slane %v2955, 7
      %v2988 = vrot.slane %v2956, 7
      %v2989 = vrot.slane %v2957, 7
      %vm2990 = vcmp.lt.s32.totalorder %v335, 1
      %v2991 = vsel %vm2990, %v2988, %v2989
      %v2992 = vsel %vm2990, %v2987, %v2988
      %v2993 = vsel %vm2990, %v2986, %v2987
      %v2994 = vsel %vm2990, %v2985, %v2986
      %v2995 = vsel %vm2990, %v2984, %v2985
      %v2996 = vsel %vm2990, %v2983, %v2984
      %v2997 = vsel %vm2990, %v2982, %v2983
      %v2998 = vsel %vm2990, %v2981, %v2982
      %v2999 = vsel %vm2990, %v2980, %v2981
      %v3000 = vsel %vm2990, %v2979, %v2980
      %v3001 = vsel %vm2990, %v2978, %v2979
      %v3002 = vsel %vm2990, %v2977, %v2978
      %v3003 = vsel %vm2990, %v2976, %v2977
      %v3004 = vsel %vm2990, %v2975, %v2976
      %v3005 = vsel %vm2990, %v2974, %v2975
      %v3006 = vsel %vm2990, %v2973, %v2974
      %v3007 = vsel %vm2990, %v2972, %v2973
      %v3008 = vsel %vm2990, %v2971, %v2972
      %v3009 = vsel %vm2990, %v2970, %v2971
      %v3010 = vsel %vm2990, %v2969, %v2970
      %v3011 = vsel %vm2990, %v2968, %v2969
      %v3012 = vsel %vm2990, %v2967, %v2968
      %v3013 = vsel %vm2990, %v2966, %v2967
      %v3014 = vsel %vm2990, %v2965, %v2966
      %v3015 = vsel %vm2990, %v2964, %v2965
      %v3016 = vsel %vm2990, %v2963, %v2964
      %v3017 = vsel %vm2990, %v2962, %v2963
      %v3018 = vsel %vm2990, %v2961, %v2962
      %v3019 = vsel %vm2990, %v2960, %v2961
      %v3020 = vsel %vm2990, %v2959, %v2960
      %v3021 = vsel %vm2990, %v2958, %v2959
      %v3022 = vsel %vm2990, %v2989, %v2958
      %v3023 = vsel %vm751, 1, 0
      %v3024 = vsel %vm752, 1, 0
      %v3025 = vsel %vm753, 1, 0
      %v3026 = vsel %vm754, 1, 0
      %v3027 = vsel %vm755, 1, 0
      %v3028 = vsel %vm756, 1, 0
      %v3029 = vsel %vm757, 1, 0
      %v3030 = vsel %vm758, 1, 0
      %v3031 = vsel %vm759, 1, 0
      %v3032 = vsel %vm760, 1, 0
      %v3033 = vsel %vm761, 1, 0
      %v3034 = vsel %vm762, 1, 0
      %v3035 = vsel %vm763, 1, 0
      %v3036 = vsel %vm764, 1, 0
      %v3037 = vsel %vm765, 1, 0
      %v3038 = vsel %vm766, 1, 0
      %v3039 = vsel %vm767, 1, 0
      %v3040 = vsel %vm768, 1, 0
      %v3041 = vsel %vm769, 1, 0
      %v3042 = vsel %vm770, 1, 0
      %v3043 = vsel %vm771, 1, 0
      %v3044 = vsel %vm772, 1, 0
      %v3045 = vsel %vm773, 1, 0
      %v3046 = vsel %vm774, 1, 0
      %v3047 = vsel %vm775, 1, 0
      %v3048 = vsel %vm776, 1, 0
      %v3049 = vsel %vm777, 1, 0
      %v3050 = vsel %vm778, 1, 0
      %v3051 = vsel %vm779, 1, 0
      %v3052 = vsel %vm780, 1, 0
      %v3053 = vsel %vm781, 1, 0
      %v3054 = vsel %vm782, 1, 0
      %vm3055 = vcmp.eq.s32.totalorder %v3023, 1
      %vm3056 = vcmp.eq.s32.totalorder %v3024, 1
      %vm3057 = vcmp.eq.s32.totalorder %v3025, 1
      %vm3058 = vcmp.eq.s32.totalorder %v3026, 1
      %vm3059 = vcmp.eq.s32.totalorder %v3027, 1
      %vm3060 = vcmp.eq.s32.totalorder %v3028, 1
      %vm3061 = vcmp.eq.s32.totalorder %v3029, 1
      %vm3062 = vcmp.eq.s32.totalorder %v3030, 1
      %vm3063 = vcmp.eq.s32.totalorder %v3031, 1
      %vm3064 = vcmp.eq.s32.totalorder %v3032, 1
      %vm3065 = vcmp.eq.s32.totalorder %v3033, 1
      %vm3066 = vcmp.eq.s32.totalorder %v3034, 1
      %vm3067 = vcmp.eq.s32.totalorder %v3035, 1
      %vm3068 = vcmp.eq.s32.totalorder %v3036, 1
      %vm3069 = vcmp.eq.s32.totalorder %v3037, 1
      %vm3070 = vcmp.eq.s32.totalorder %v3038, 1
      %vm3071 = vcmp.eq.s32.totalorder %v3039, 1
      %vm3072 = vcmp.eq.s32.totalorder %v3040, 1
      %vm3073 = vcmp.eq.s32.totalorder %v3041, 1
      %vm3074 = vcmp.eq.s32.totalorder %v3042, 1
      %vm3075 = vcmp.eq.s32.totalorder %v3043, 1
      %vm3076 = vcmp.eq.s32.totalorder %v3044, 1
      %vm3077 = vcmp.eq.s32.totalorder %v3045, 1
      %vm3078 = vcmp.eq.s32.totalorder %v3046, 1
      %vm3079 = vcmp.eq.s32.totalorder %v3047, 1
      %vm3080 = vcmp.eq.s32.totalorder %v3048, 1
      %vm3081 = vcmp.eq.s32.totalorder %v3049, 1
      %vm3082 = vcmp.eq.s32.totalorder %v3050, 1
      %vm3083 = vcmp.eq.s32.totalorder %v3051, 1
      %vm3084 = vcmp.eq.s32.totalorder %v3052, 1
      %vm3085 = vcmp.eq.s32.totalorder %v3053, 1
      %vm3086 = vcmp.eq.s32.totalorder %v3054, 1
      %v3087 = vsel %vm3055, %v3022, 0.0
      %v3088 = vsel %vm3056, %v3021, 0.0
      %v3089 = vsel %vm3057, %v3020, 0.0
      %v3090 = vsel %vm3058, %v3019, 0.0
      %v3091 = vsel %vm3059, %v3018, 0.0
      %v3092 = vsel %vm3060, %v3017, 0.0
      %v3093 = vsel %vm3061, %v3016, 0.0
      %v3094 = vsel %vm3062, %v3015, 0.0
      %v3095 = vsel %vm3063, %v3014, 0.0
      %v3096 = vsel %vm3064, %v3013, 0.0
      %v3097 = vsel %vm3065, %v3012, 0.0
      %v3098 = vsel %vm3066, %v3011, 0.0
      %v3099 = vsel %vm3067, %v3010, 0.0
      %v3100 = vsel %vm3068, %v3009, 0.0
      %v3101 = vsel %vm3069, %v3008, 0.0
      %v3102 = vsel %vm3070, %v3007, 0.0
      %v3103 = vsel %vm3071, %v3006, 0.0
      %v3104 = vsel %vm3072, %v3005, 0.0
      %v3105 = vsel %vm3073, %v3004, 0.0
      %v3106 = vsel %vm3074, %v3003, 0.0
      %v3107 = vsel %vm3075, %v3002, 0.0
      %v3108 = vsel %vm3076, %v3001, 0.0
      %v3109 = vsel %vm3077, %v3000, 0.0
      %v3110 = vsel %vm3078, %v2999, 0.0
      %v3111 = vsel %vm3079, %v2998, 0.0
      %v3112 = vsel %vm3080, %v2997, 0.0
      %v3113 = vsel %vm3081, %v2996, 0.0
      %v3114 = vsel %vm3082, %v2995, 0.0
      %v3115 = vsel %vm3083, %v2994, 0.0
      %v3116 = vsel %vm3084, %v2993, 0.0
      %v3117 = vsel %vm3085, %v2992, 0.0
      %v3118 = vsel %vm3086, %v2991, 0.0
      %v3119 = vadd.f32 %v2217, %v3087
      %v3120 = vadd.f32 %v2218, %v3088
      %v3121 = vadd.f32 %v2219, %v3089
      %v3122 = vadd.f32 %v2220, %v3090
      %v3123 = vadd.f32 %v2221, %v3091
      %v3124 = vadd.f32 %v2222, %v3092
      %v3125 = vadd.f32 %v2223, %v3093
      %v3126 = vadd.f32 %v2224, %v3094
      %v3127 = vadd.f32 %v2225, %v3095
      %v3128 = vadd.f32 %v2226, %v3096
      %v3129 = vadd.f32 %v2227, %v3097
      %v3130 = vadd.f32 %v2228, %v3098
      %v3131 = vadd.f32 %v2229, %v3099
      %v3132 = vadd.f32 %v2230, %v3100
      %v3133 = vadd.f32 %v2231, %v3101
      %v3134 = vadd.f32 %v2232, %v3102
      %v3135 = vadd.f32 %v2233, %v3103
      %v3136 = vadd.f32 %v2234, %v3104
      %v3137 = vadd.f32 %v2235, %v3105
      %v3138 = vadd.f32 %v2236, %v3106
      %v3139 = vadd.f32 %v2237, %v3107
      %v3140 = vadd.f32 %v2238, %v3108
      %v3141 = vadd.f32 %v2239, %v3109
      %v3142 = vadd.f32 %v2240, %v3110
      %v3143 = vadd.f32 %v2241, %v3111
      %v3144 = vadd.f32 %v2242, %v3112
      %v3145 = vadd.f32 %v2243, %v3113
      %v3146 = vadd.f32 %v2244, %v3114
      %v3147 = vadd.f32 %v2245, %v3115
      %v3148 = vadd.f32 %v2246, %v3116
      %v3149 = vadd.f32 %v2247, %v3117
      %v3150 = vadd.f32 %v2248, %v3118
      %s3151 = scalar_lea.vmem %s5, 128
      %v3152 = vld [vmem:[%s3151] sm:$0xf]
      %v3153 = vld [vmem:[%s3151 + $0x4] sm:$0xf]
      %v3154 = vld [vmem:[%s3151 + $0x8] sm:$0xf]
      %v3155 = vld [vmem:[%s3151 + $0xc] sm:$0xf]
      %v3156 = vld [vmem:[%s3151 + $0x10] sm:$0xf]
      %v3157 = vld [vmem:[%s3151 + $0x14] sm:$0xf]
      %v3158 = vld [vmem:[%s3151 + $0x18] sm:$0xf]
      %v3159 = vld [vmem:[%s3151 + $0x1c] sm:$0xf]
      %v3160 = vld [vmem:[%s3151 + $0x20] sm:$0xf]
      %v3161 = vld [vmem:[%s3151 + $0x24] sm:$0xf]
      %v3162 = vld [vmem:[%s3151 + $0x28] sm:$0xf]
      %v3163 = vld [vmem:[%s3151 + $0x2c] sm:$0xf]
      %v3164 = vld [vmem:[%s3151 + $0x30] sm:$0xf]
      %v3165 = vld [vmem:[%s3151 + $0x34] sm:$0xf]
      %v3166 = vld [vmem:[%s3151 + $0x38] sm:$0xf]
      %v3167 = vld [vmem:[%s3151 + $0x3c] sm:$0xf]
      %s3168 = scalar_lea.vmem %s5, 320
      %v3169 = vld [vmem:[%s3168] sm:$0xf]
      %v3170 = vld [vmem:[%s3168 + $0x4] sm:$0xf]
      %v3171 = vld [vmem:[%s3168 + $0x8] sm:$0xf]
      %v3172 = vld [vmem:[%s3168 + $0xc] sm:$0xf]
      %v3173 = vld [vmem:[%s3168 + $0x10] sm:$0xf]
      %v3174 = vld [vmem:[%s3168 + $0x14] sm:$0xf]
      %v3175 = vld [vmem:[%s3168 + $0x18] sm:$0xf]
      %v3176 = vld [vmem:[%s3168 + $0x1c] sm:$0xf]
      %v3177 = vld [vmem:[%s3168 + $0x20] sm:$0xf]
      %v3178 = vld [vmem:[%s3168 + $0x24] sm:$0xf]
      %v3179 = vld [vmem:[%s3168 + $0x28] sm:$0xf]
      %v3180 = vld [vmem:[%s3168 + $0x2c] sm:$0xf]
      %v3181 = vld [vmem:[%s3168 + $0x30] sm:$0xf]
      %v3182 = vld [vmem:[%s3168 + $0x34] sm:$0xf]
      %v3183 = vld [vmem:[%s3168 + $0x38] sm:$0xf]
      %v3184 = vld [vmem:[%s3168 + $0x3c] sm:$0xf]
      %v3201 = vunpack.c.l.b16 %v3169
      %v3202 = vunpack.c.l.b16 %v3170
      %v3203 = vunpack.c.l.b16 %v3171
      %v3204 = vunpack.c.l.b16 %v3172
      %v3205 = vunpack.c.l.b16 %v3173
      %v3206 = vunpack.c.l.b16 %v3174
      %v3207 = vunpack.c.l.b16 %v3175
      %v3208 = vunpack.c.l.b16 %v3176
      %v3209 = vunpack.c.l.b16 %v3177
      %v3210 = vunpack.c.l.b16 %v3178
      %v3211 = vunpack.c.l.b16 %v3179
      %v3212 = vunpack.c.l.b16 %v3180
      %v3213 = vunpack.c.l.b16 %v3181
      %v3214 = vunpack.c.l.b16 %v3182
      %v3215 = vunpack.c.l.b16 %v3183
      %v3216 = vunpack.c.l.b16 %v3184
      %v3217 = vpack.c.b16 %v3202, %v3201
      %v3218 = vpack.c.b16 %v3204, %v3203
      %v3219 = vpack.c.b16 %v3206, %v3205
      %v3220 = vpack.c.b16 %v3208, %v3207
      %v3221 = vpack.c.b16 %v3210, %v3209
      %v3222 = vpack.c.b16 %v3212, %v3211
      %v3223 = vpack.c.b16 %v3214, %v3213
      %v3224 = vpack.c.b16 %v3216, %v3215
      %3233 = vmatprep.subr.bf16.mxu0 0
      %3234 = vmatpush1.bf16.msra.mxu0 %v3217
      %3235 = vmatprep.subr.bf16.mxu0 0
      %3236 = vmatpush1.bf16.msra.mxu0 %v3218
      %3237 = vmatprep.subr.bf16.mxu0 0
      %3238 = vmatpush1.bf16.msra.mxu0 %v3219
      %3239 = vmatprep.subr.bf16.mxu0 0
      %3240 = vmatpush1.bf16.msra.mxu0 %v3220
      %3241 = vmatprep.subr.bf16.mxu0 0
      %3242 = vmatpush1.bf16.msra.mxu0 %v3221
      %3243 = vmatprep.subr.bf16.mxu0 0
      %3244 = vmatpush1.bf16.msra.mxu0 %v3222
      %3245 = vmatprep.subr.bf16.mxu0 0
      %3246 = vmatpush1.bf16.msra.mxu0 %v3223
      %3247 = vmatprep.subr.bf16.mxu0 0
      %3248 = vmatpush1.bf16.msra.mxu0 %v3224
      %3249 = vmatprep.subr.bf16.mxu0 0
      %3250 = vmatpush1.bf16.msra.mxu0 0
      %3251 = vmatprep.subr.bf16.mxu0 0
      %3252 = vmatpush1.bf16.msra.mxu0 0
      %3253 = vmatprep.subr.bf16.mxu0 0
      %3254 = vmatpush1.bf16.msra.mxu0 0
      %3255 = vmatprep.subr.bf16.mxu0 0
      %3256 = vmatpush1.bf16.msra.mxu0 0
      %3257 = vmatprep.subr.bf16.mxu0 0
      %3258 = vmatpush1.bf16.msra.mxu0 0
      %3259 = vmatprep.subr.bf16.mxu0 0
      %3260 = vmatpush1.bf16.msra.mxu0 0
      %3261 = vmatprep.subr.bf16.mxu0 0
      %3262 = vmatpush1.bf16.msra.mxu0 0
      %3263 = vmatprep.subr.bf16.mxu0 0
      %3264 = vmatpush1.bf16.msra.mxu0 0
      %3265 = vmatprep.mubr.bf16.mxu0 0
      %3266 = vmatmul.mubr.bf16.gmra.mrb[0].mxu0 %v1523
      %v3267 = vpop.f32.mrb[0].mxu0
      %v3268 = vadd.f32 0.0, %v3267
      %v3269 = vpop.f32.mrb[0].mxu0
      %v3270 = vpop.f32.mrb[0].mxu0
      %v3271 = vadd.f32 0.0, %v3270
      %v3272 = vpop.f32.mrb[0].mxu0
      %3273 = vmatprep.mubr.bf16.mxu0 0
      %3274 = vmatmul.mubr.bf16.gmra.mrb[0].mxu0 %v1524
      %v3275 = vpop.f32.mrb[0].mxu0
      %v3276 = vadd.f32 0.0, %v3275
      %v3277 = vpop.f32.mrb[0].mxu0
      %v3278 = vpop.f32.mrb[0].mxu0
      %v3279 = vadd.f32 0.0, %v3278
      %v3280 = vpop.f32.mrb[0].mxu0
      %3281 = vmatprep.mubr.bf16.mxu0 0
      %3282 = vmatmul.mubr.bf16.gmra.mrb[0].mxu0 %v1525
      %v3283 = vpop.f32.mrb[0].mxu0
      %v3284 = vadd.f32 0.0, %v3283
      %v3285 = vpop.f32.mrb[0].mxu0
      %v3286 = vpop.f32.mrb[0].mxu0
      %v3287 = vadd.f32 0.0, %v3286
      %v3288 = vpop.f32.mrb[0].mxu0
      %3289 = vmatprep.mubr.bf16.mxu0 0
      %3290 = vmatmul.mubr.bf16.gmra.mrb[0].mxu0 %v1526
      %v3291 = vpop.f32.mrb[0].mxu0
      %v3292 = vadd.f32 0.0, %v3291
      %v3293 = vpop.f32.mrb[0].mxu0
      %v3294 = vpop.f32.mrb[0].mxu0
      %v3295 = vadd.f32 0.0, %v3294
      %v3296 = vpop.f32.mrb[0].mxu0
      %3297 = vmatprep.mubr.bf16.mxu0 0
      %3298 = vmatmul.mubr.bf16.gmra.mrb[0].mxu0 %v1527
      %v3299 = vpop.f32.mrb[0].mxu0
      %v3300 = vadd.f32 0.0, %v3299
      %v3301 = vpop.f32.mrb[0].mxu0
      %v3302 = vpop.f32.mrb[0].mxu0
      %v3303 = vadd.f32 0.0, %v3302
      %v3304 = vpop.f32.mrb[0].mxu0
      %3305 = vmatprep.mubr.bf16.mxu0 0
      %3306 = vmatmul.mubr.bf16.gmra.mrb[0].mxu0 %v1528
      %v3307 = vpop.f32.mrb[0].mxu0
      %v3308 = vadd.f32 0.0, %v3307
      %v3309 = vpop.f32.mrb[0].mxu0
      %v3310 = vpop.f32.mrb[0].mxu0
      %v3311 = vadd.f32 0.0, %v3310
      %v3312 = vpop.f32.mrb[0].mxu0
      %3313 = vmatprep.mubr.bf16.mxu0 0
      %3314 = vmatmul.mubr.bf16.gmra.mrb[0].mxu0 %v1529
      %v3315 = vpop.f32.mrb[0].mxu0
      %v3316 = vadd.f32 0.0, %v3315
      %v3317 = vpop.f32.mrb[0].mxu0
      %v3318 = vpop.f32.mrb[0].mxu0
      %v3319 = vadd.f32 0.0, %v3318
      %v3320 = vpop.f32.mrb[0].mxu0
      %3321 = vmatprep.mubr.bf16.mxu0 0
      %3322 = vmatmul.mubr.bf16.gmra.mrb[0].mxu0 %v1530
      %v3323 = vpop.f32.mrb[0].mxu0
      %v3324 = vadd.f32 0.0, %v3323
      %v3325 = vpop.f32.mrb[0].mxu0
      %v3326 = vpop.f32.mrb[0].mxu0
      %v3327 = vadd.f32 0.0, %v3326
      %v3328 = vpop.f32.mrb[0].mxu0
      %3329 = vmatprep.mubr.bf16.mxu0 0
      %3330 = vmatmul.mubr.bf16.gmra.mrb[0].mxu0 %v1531
      %v3331 = vpop.f32.mrb[0].mxu0
      %v3332 = vadd.f32 0.0, %v3331
      %v3333 = vpop.f32.mrb[0].mxu0
      %v3334 = vpop.f32.mrb[0].mxu0
      %v3335 = vadd.f32 0.0, %v3334
      %v3336 = vpop.f32.mrb[0].mxu0
      %3337 = vmatprep.mubr.bf16.mxu0 0
      %3338 = vmatmul.mubr.bf16.gmra.mrb[0].mxu0 %v1532
      %v3339 = vpop.f32.mrb[0].mxu0
      %v3340 = vadd.f32 0.0, %v3339
      %v3341 = vpop.f32.mrb[0].mxu0
      %v3342 = vpop.f32.mrb[0].mxu0
      %v3343 = vadd.f32 0.0, %v3342
      %v3344 = vpop.f32.mrb[0].mxu0
      %3345 = vmatprep.mubr.bf16.mxu0 0
      %3346 = vmatmul.mubr.bf16.gmra.mrb[0].mxu0 %v1533
      %v3347 = vpop.f32.mrb[0].mxu0
      %v3348 = vadd.f32 0.0, %v3347
      %v3349 = vpop.f32.mrb[0].mxu0
      %v3350 = vpop.f32.mrb[0].mxu0
      %v3351 = vadd.f32 0.0, %v3350
      %v3352 = vpop.f32.mrb[0].mxu0
      %3353 = vmatprep.mubr.bf16.mxu0 0
      %3354 = vmatmul.mubr.bf16.gmra.mrb[0].mxu0 %v1534
      %v3355 = vpop.f32.mrb[0].mxu0
      %v3356 = vadd.f32 0.0, %v3355
      %v3357 = vpop.f32.mrb[0].mxu0
      %v3358 = vpop.f32.mrb[0].mxu0
      %v3359 = vadd.f32 0.0, %v3358
      %v3360 = vpop.f32.mrb[0].mxu0
      %3361 = vmatprep.mubr.bf16.mxu0 0
      %3362 = vmatmul.mubr.bf16.gmra.mrb[0].mxu0 %v1535
      %v3363 = vpop.f32.mrb[0].mxu0
      %v3364 = vadd.f32 0.0, %v3363
      %v3365 = vpop.f32.mrb[0].mxu0
      %v3366 = vpop.f32.mrb[0].mxu0
      %v3367 = vadd.f32 0.0, %v3366
      %v3368 = vpop.f32.mrb[0].mxu0
      %3369 = vmatprep.mubr.bf16.mxu0 0
      %3370 = vmatmul.mubr.bf16.gmra.mrb[0].mxu0 %v1536
      %v3371 = vpop.f32.mrb[0].mxu0
      %v3372 = vadd.f32 0.0, %v3371
      %v3373 = vpop.f32.mrb[0].mxu0
      %v3374 = vpop.f32.mrb[0].mxu0
      %v3375 = vadd.f32 0.0, %v3374
      %v3376 = vpop.f32.mrb[0].mxu0
      %3377 = vmatprep.mubr.bf16.mxu0 0
      %3378 = vmatmul.mubr.bf16.gmra.mrb[0].mxu0 %v1537
      %v3379 = vpop.f32.mrb[0].mxu0
      %v3380 = vadd.f32 0.0, %v3379
      %v3381 = vpop.f32.mrb[0].mxu0
      %v3382 = vpop.f32.mrb[0].mxu0
      %v3383 = vadd.f32 0.0, %v3382
      %v3384 = vpop.f32.mrb[0].mxu0
      %3385 = vmatprep.mubr.bf16.mxu0 0
      %3386 = vmatmul.mubr.bf16.gmra.mrb[0].mxu0 %v1538
      %v3387 = vpop.f32.mrb[0].mxu0
      %v3388 = vadd.f32 0.0, %v3387
      %v3389 = vpop.f32.mrb[0].mxu0
      %v3390 = vpop.f32.mrb[0].mxu0
      %v3391 = vadd.f32 0.0, %v3390
      %v3392 = vpop.f32.mrb[0].mxu0
      %3393 = vdwg.mxu0
      %v3410 = vunpack.c.l.b16 %v3152
      %v3411 = vunpack.c.l.b16 %v3153
      %v3412 = vunpack.c.l.b16 %v3154
      %v3413 = vunpack.c.l.b16 %v3155
      %v3414 = vunpack.c.l.b16 %v3156
      %v3415 = vunpack.c.l.b16 %v3157
      %v3416 = vunpack.c.l.b16 %v3158
      %v3417 = vunpack.c.l.b16 %v3159
      %v3418 = vunpack.c.l.b16 %v3160
      %v3419 = vunpack.c.l.b16 %v3161
      %v3420 = vunpack.c.l.b16 %v3162
      %v3421 = vunpack.c.l.b16 %v3163
      %v3422 = vunpack.c.l.b16 %v3164
      %v3423 = vunpack.c.l.b16 %v3165
      %v3424 = vunpack.c.l.b16 %v3166
      %v3425 = vunpack.c.l.b16 %v3167
      %v3426 = vpack.c.b16 %v3411, %v3410
      %v3427 = vpack.c.b16 %v3413, %v3412
      %v3428 = vpack.c.b16 %v3415, %v3414
      %v3429 = vpack.c.b16 %v3417, %v3416
      %v3430 = vpack.c.b16 %v3419, %v3418
      %v3431 = vpack.c.b16 %v3421, %v3420
      %v3432 = vpack.c.b16 %v3423, %v3422
      %v3433 = vpack.c.b16 %v3425, %v3424
      %3442 = vmatprep.subr.bf16.mxu0 0
      %3443 = vmatpush1.bf16.msra.mxu0 %v3426
      %3444 = vmatprep.subr.bf16.mxu0 0
      %3445 = vmatpush1.bf16.msra.mxu0 %v3427
      %3446 = vmatprep.subr.bf16.mxu0 0
      %3447 = vmatpush1.bf16.msra.mxu0 %v3428
      %3448 = vmatprep.subr.bf16.mxu0 0
      %3449 = vmatpush1.bf16.msra.mxu0 %v3429
      %3450 = vmatprep.subr.bf16.mxu0 0
      %3451 = vmatpush1.bf16.msra.mxu0 %v3430
      %3452 = vmatprep.subr.bf16.mxu0 0
      %3453 = vmatpush1.bf16.msra.mxu0 %v3431
      %3454 = vmatprep.subr.bf16.mxu0 0
      %3455 = vmatpush1.bf16.msra.mxu0 %v3432
      %3456 = vmatprep.subr.bf16.mxu0 0
      %3457 = vmatpush1.bf16.msra.mxu0 %v3433
      %3458 = vmatprep.subr.bf16.mxu0 0
      %3459 = vmatpush1.bf16.msra.mxu0 0
      %3460 = vmatprep.subr.bf16.mxu0 0
      %3461 = vmatpush1.bf16.msra.mxu0 0
      %3462 = vmatprep.subr.bf16.mxu0 0
      %3463 = vmatpush1.bf16.msra.mxu0 0
      %3464 = vmatprep.subr.bf16.mxu0 0
      %3465 = vmatpush1.bf16.msra.mxu0 0
      %3466 = vmatprep.subr.bf16.mxu0 0
      %3467 = vmatpush1.bf16.msra.mxu0 0
      %3468 = vmatprep.subr.bf16.mxu0 0
      %3469 = vmatpush1.bf16.msra.mxu0 0
      %3470 = vmatprep.subr.bf16.mxu0 0
      %3471 = vmatpush1.bf16.msra.mxu0 0
      %3472 = vmatprep.subr.bf16.mxu0 0
      %3473 = vmatpush1.bf16.msra.mxu0 0
      %3474 = vmatprep.mubr.bf16.mxu0 0
      %3475 = vmatmul.mubr.bf16.gmra.mrb[0].mxu0 0
      %v3476 = vpop.f32.mrb[0].mxu0
      %v3477 = vadd.f32 %v3268, %v3476
      %v3478 = vpop.f32.mrb[0].mxu0
      %v3479 = vpop.f32.mrb[0].mxu0
      %v3480 = vadd.f32 %v3271, %v3479
      %v3481 = vpop.f32.mrb[0].mxu0
      %3482 = vmatprep.mubr.bf16.mxu0 0
      %3483 = vmatmul.mubr.bf16.gmra.mrb[0].mxu0 %v1523
      %v3484 = vpop.f32.mrb[0].mxu0
      %v3485 = vadd.f32 %v3276, %v3484
      %v3486 = vpop.f32.mrb[0].mxu0
      %v3487 = vpop.f32.mrb[0].mxu0
      %v3488 = vadd.f32 %v3279, %v3487
      %v3489 = vpop.f32.mrb[0].mxu0
      %3490 = vmatprep.mubr.bf16.mxu0 0
      %3491 = vmatmul.mubr.bf16.gmra.mrb[0].mxu0 %v1524
      %v3492 = vpop.f32.mrb[0].mxu0
      %v3493 = vadd.f32 %v3284, %v3492
      %v3494 = vpop.f32.mrb[0].mxu0
      %v3495 = vpop.f32.mrb[0].mxu0
      %v3496 = vadd.f32 %v3287, %v3495
      %v3497 = vpop.f32.mrb[0].mxu0
      %3498 = vmatprep.mubr.bf16.mxu0 0
      %3499 = vmatmul.mubr.bf16.gmra.mrb[0].mxu0 %v1525
      %v3500 = vpop.f32.mrb[0].mxu0
      %v3501 = vadd.f32 %v3292, %v3500
      %v3502 = vpop.f32.mrb[0].mxu0
      %v3503 = vpop.f32.mrb[0].mxu0
      %v3504 = vadd.f32 %v3295, %v3503
      %v3505 = vpop.f32.mrb[0].mxu0
      %3506 = vmatprep.mubr.bf16.mxu0 0
      %3507 = vmatmul.mubr.bf16.gmra.mrb[0].mxu0 %v1526
      %v3508 = vpop.f32.mrb[0].mxu0
      %v3509 = vadd.f32 %v3300, %v3508
      %v3510 = vpop.f32.mrb[0].mxu0
      %v3511 = vpop.f32.mrb[0].mxu0
      %v3512 = vadd.f32 %v3303, %v3511
      %v3513 = vpop.f32.mrb[0].mxu0
      %3514 = vmatprep.mubr.bf16.mxu0 0
      %3515 = vmatmul.mubr.bf16.gmra.mrb[0].mxu0 %v1527
      %v3516 = vpop.f32.mrb[0].mxu0
      %v3517 = vadd.f32 %v3308, %v3516
      %v3518 = vpop.f32.mrb[0].mxu0
      %v3519 = vpop.f32.mrb[0].mxu0
      %v3520 = vadd.f32 %v3311, %v3519
      %v3521 = vpop.f32.mrb[0].mxu0
      %3522 = vmatprep.mubr.bf16.mxu0 0
      %3523 = vmatmul.mubr.bf16.gmra.mrb[0].mxu0 %v1528
      %v3524 = vpop.f32.mrb[0].mxu0
      %v3525 = vadd.f32 %v3316, %v3524
      %v3526 = vpop.f32.mrb[0].mxu0
      %v3527 = vpop.f32.mrb[0].mxu0
      %v3528 = vadd.f32 %v3319, %v3527
      %v3529 = vpop.f32.mrb[0].mxu0
      %3530 = vmatprep.mubr.bf16.mxu0 0
      %3531 = vmatmul.mubr.bf16.gmra.mrb[0].mxu0 %v1529
      %v3532 = vpop.f32.mrb[0].mxu0
      %v3533 = vadd.f32 %v3324, %v3532
      %v3534 = vpop.f32.mrb[0].mxu0
      %v3535 = vpop.f32.mrb[0].mxu0
      %v3536 = vadd.f32 %v3327, %v3535
      %v3537 = vpop.f32.mrb[0].mxu0
      %3538 = vmatprep.mubr.bf16.mxu0 0
      %3539 = vmatmul.mubr.bf16.gmra.mrb[0].mxu0 %v1530
      %v3540 = vpop.f32.mrb[0].mxu0
      %v3541 = vadd.f32 %v3332, %v3540
      %v3542 = vpop.f32.mrb[0].mxu0
      %v3543 = vpop.f32.mrb[0].mxu0
      %v3544 = vadd.f32 %v3335, %v3543
      %v3545 = vpop.f32.mrb[0].mxu0
      %3546 = vmatprep.mubr.bf16.mxu0 0
      %3547 = vmatmul.mubr.bf16.gmra.mrb[0].mxu0 %v1531
      %v3548 = vpop.f32.mrb[0].mxu0
      %v3549 = vadd.f32 %v3340, %v3548
      %v3550 = vpop.f32.mrb[0].mxu0
      %v3551 = vpop.f32.mrb[0].mxu0
      %v3552 = vadd.f32 %v3343, %v3551
      %v3553 = vpop.f32.mrb[0].mxu0
      %3554 = vmatprep.mubr.bf16.mxu0 0
      %3555 = vmatmul.mubr.bf16.gmra.mrb[0].mxu0 %v1532
      %v3556 = vpop.f32.mrb[0].mxu0
      %v3557 = vadd.f32 %v3348, %v3556
      %v3558 = vpop.f32.mrb[0].mxu0
      %v3559 = vpop.f32.mrb[0].mxu0
      %v3560 = vadd.f32 %v3351, %v3559
      %v3561 = vpop.f32.mrb[0].mxu0
      %3562 = vmatprep.mubr.bf16.mxu0 0
      %3563 = vmatmul.mubr.bf16.gmra.mrb[0].mxu0 %v1533
      %v3564 = vpop.f32.mrb[0].mxu0
      %v3565 = vadd.f32 %v3356, %v3564
      %v3566 = vpop.f32.mrb[0].mxu0
      %v3567 = vpop.f32.mrb[0].mxu0
      %v3568 = vadd.f32 %v3359, %v3567
      %v3569 = vpop.f32.mrb[0].mxu0
      %3570 = vmatprep.mubr.bf16.mxu0 0
      %3571 = vmatmul.mubr.bf16.gmra.mrb[0].mxu0 %v1534
      %v3572 = vpop.f32.mrb[0].mxu0
      %v3573 = vadd.f32 %v3364, %v3572
      %v3574 = vpop.f32.mrb[0].mxu0
      %v3575 = vpop.f32.mrb[0].mxu0
      %v3576 = vadd.f32 %v3367, %v3575
      %v3577 = vpop.f32.mrb[0].mxu0
      %3578 = vmatprep.mubr.bf16.mxu0 0
      %3579 = vmatmul.mubr.bf16.gmra.mrb[0].mxu0 %v1535
      %v3580 = vpop.f32.mrb[0].mxu0
      %v3581 = vadd.f32 %v3372, %v3580
      %v3582 = vpop.f32.mrb[0].mxu0
      %v3583 = vpop.f32.mrb[0].mxu0
      %v3584 = vadd.f32 %v3375, %v3583
      %v3585 = vpop.f32.mrb[0].mxu0
      %3586 = vmatprep.mubr.bf16.mxu0 0
      %3587 = vmatmul.mubr.bf16.gmra.mrb[0].mxu0 %v1536
      %v3588 = vpop.f32.mrb[0].mxu0
      %v3589 = vadd.f32 %v3380, %v3588
      %v3590 = vpop.f32.mrb[0].mxu0
      %v3591 = vpop.f32.mrb[0].mxu0
      %v3592 = vadd.f32 %v3383, %v3591
      %v3593 = vpop.f32.mrb[0].mxu0
      %3594 = vmatprep.mubr.bf16.mxu0 0
      %3595 = vmatmul.mubr.bf16.gmra.mrb[0].mxu0 %v1537
      %v3596 = vpop.f32.mrb[0].mxu0
      %v3597 = vadd.f32 %v3388, %v3596
      %v3598 = vpop.f32.mrb[0].mxu0
      %v3599 = vpop.f32.mrb[0].mxu0
      %v3600 = vadd.f32 %v3391, %v3599
      %v3601 = vpop.f32.mrb[0].mxu0
      %3602 = vdwg.mxu0
      %s3603 = scalar_lea.vmem %s5, 512
      %v3604 = vld [vmem:[%s3603] sm:$0xf]
      %v3605 = vld [vmem:[%s3603 + $0x4] sm:$0xf]
      %v3606 = vld [vmem:[%s3603 + $0x8] sm:$0xf]
      %v3607 = vld [vmem:[%s3603 + $0xc] sm:$0xf]
      %v3608 = vld [vmem:[%s3603 + $0x10] sm:$0xf]
      %v3609 = vld [vmem:[%s3603 + $0x14] sm:$0xf]
      %v3610 = vld [vmem:[%s3603 + $0x18] sm:$0xf]
      %v3611 = vld [vmem:[%s3603 + $0x1c] sm:$0xf]
      %v3612 = vld [vmem:[%s3603 + $0x20] sm:$0xf]
      %v3613 = vld [vmem:[%s3603 + $0x24] sm:$0xf]
      %v3614 = vld [vmem:[%s3603 + $0x28] sm:$0xf]
      %v3615 = vld [vmem:[%s3603 + $0x2c] sm:$0xf]
      %v3616 = vld [vmem:[%s3603 + $0x30] sm:$0xf]
      %v3617 = vld [vmem:[%s3603 + $0x34] sm:$0xf]
      %v3618 = vld [vmem:[%s3603 + $0x38] sm:$0xf]
      %v3619 = vld [vmem:[%s3603 + $0x3c] sm:$0xf]
      %v3636 = vunpack.c.l.b16 %v3604
      %v3637 = vunpack.c.l.b16 %v3605
      %v3638 = vunpack.c.l.b16 %v3606
      %v3639 = vunpack.c.l.b16 %v3607
      %v3640 = vunpack.c.l.b16 %v3608
      %v3641 = vunpack.c.l.b16 %v3609
      %v3642 = vunpack.c.l.b16 %v3610
      %v3643 = vunpack.c.l.b16 %v3611
      %v3644 = vunpack.c.l.b16 %v3612
      %v3645 = vunpack.c.l.b16 %v3613
      %v3646 = vunpack.c.l.b16 %v3614
      %v3647 = vunpack.c.l.b16 %v3615
      %v3648 = vunpack.c.l.b16 %v3616
      %v3649 = vunpack.c.l.b16 %v3617
      %v3650 = vunpack.c.l.b16 %v3618
      %v3651 = vunpack.c.l.b16 %v3619
      %v3652 = vpack.c.b16 %v3637, %v3636
      %v3653 = vpack.c.b16 %v3639, %v3638
      %v3654 = vpack.c.b16 %v3641, %v3640
      %v3655 = vpack.c.b16 %v3643, %v3642
      %v3656 = vpack.c.b16 %v3645, %v3644
      %v3657 = vpack.c.b16 %v3647, %v3646
      %v3658 = vpack.c.b16 %v3649, %v3648
      %v3659 = vpack.c.b16 %v3651, %v3650
      %3668 = vmatprep.subr.bf16.mxu0 0
      %3669 = vmatpush1.bf16.msra.mxu0 %v3652
      %3670 = vmatprep.subr.bf16.mxu0 0
      %3671 = vmatpush1.bf16.msra.mxu0 %v3653
      %3672 = vmatprep.subr.bf16.mxu0 0
      %3673 = vmatpush1.bf16.msra.mxu0 %v3654
      %3674 = vmatprep.subr.bf16.mxu0 0
      %3675 = vmatpush1.bf16.msra.mxu0 %v3655
      %3676 = vmatprep.subr.bf16.mxu0 0
      %3677 = vmatpush1.bf16.msra.mxu0 %v3656
      %3678 = vmatprep.subr.bf16.mxu0 0
      %3679 = vmatpush1.bf16.msra.mxu0 %v3657
      %3680 = vmatprep.subr.bf16.mxu0 0
      %3681 = vmatpush1.bf16.msra.mxu0 %v3658
      %3682 = vmatprep.subr.bf16.mxu0 0
      %3683 = vmatpush1.bf16.msra.mxu0 %v3659
      %3684 = vmatprep.subr.bf16.mxu0 0
      %3685 = vmatpush1.bf16.msra.mxu0 0
      %3686 = vmatprep.subr.bf16.mxu0 0
      %3687 = vmatpush1.bf16.msra.mxu0 0
      %3688 = vmatprep.subr.bf16.mxu0 0
      %3689 = vmatpush1.bf16.msra.mxu0 0
      %3690 = vmatprep.subr.bf16.mxu0 0
      %3691 = vmatpush1.bf16.msra.mxu0 0
      %3692 = vmatprep.subr.bf16.mxu0 0
      %3693 = vmatpush1.bf16.msra.mxu0 0
      %3694 = vmatprep.subr.bf16.mxu0 0
      %3695 = vmatpush1.bf16.msra.mxu0 0
      %3696 = vmatprep.subr.bf16.mxu0 0
      %3697 = vmatpush1.bf16.msra.mxu0 0
      %3698 = vmatprep.subr.bf16.mxu0 0
      %3699 = vmatpush1.bf16.msra.mxu0 0
      %3700 = vmatprep.mubr.bf16.mxu0 0
      %3701 = vmatmul.mubr.bf16.gmra.mrb[0].mxu0 %v1524
      %v3702 = vpop.f32.mrb[0].mxu0
      %v3703 = vadd.f32 0.0, %v3702
      %v3704 = vpop.f32.mrb[0].mxu0
      %v3705 = vpop.f32.mrb[0].mxu0
      %v3706 = vadd.f32 0.0, %v3705
      %v3707 = vpop.f32.mrb[0].mxu0
      %3708 = vmatprep.mubr.bf16.mxu0 0
      %3709 = vmatmul.mubr.bf16.gmra.mrb[0].mxu0 %v1525
      %v3710 = vpop.f32.mrb[0].mxu0
      %v3711 = vadd.f32 0.0, %v3710
      %v3712 = vpop.f32.mrb[0].mxu0
      %v3713 = vpop.f32.mrb[0].mxu0
      %v3714 = vadd.f32 0.0, %v3713
      %v3715 = vpop.f32.mrb[0].mxu0
      %3716 = vmatprep.mubr.bf16.mxu0 0
      %3717 = vmatmul.mubr.bf16.gmra.mrb[0].mxu0 %v1526
      %v3718 = vpop.f32.mrb[0].mxu0
      %v3719 = vadd.f32 0.0, %v3718
      %v3720 = vpop.f32.mrb[0].mxu0
      %v3721 = vpop.f32.mrb[0].mxu0
      %v3722 = vadd.f32 0.0, %v3721
      %v3723 = vpop.f32.mrb[0].mxu0
      %3724 = vmatprep.mubr.bf16.mxu0 0
      %3725 = vmatmul.mubr.bf16.gmra.mrb[0].mxu0 %v1527
      %v3726 = vpop.f32.mrb[0].mxu0
      %v3727 = vadd.f32 0.0, %v3726
      %v3728 = vpop.f32.mrb[0].mxu0
      %v3729 = vpop.f32.mrb[0].mxu0
      %v3730 = vadd.f32 0.0, %v3729
      %v3731 = vpop.f32.mrb[0].mxu0
      %3732 = vmatprep.mubr.bf16.mxu0 0
      %3733 = vmatmul.mubr.bf16.gmra.mrb[0].mxu0 %v1528
      %v3734 = vpop.f32.mrb[0].mxu0
      %v3735 = vadd.f32 0.0, %v3734
      %v3736 = vpop.f32.mrb[0].mxu0
      %v3737 = vpop.f32.mrb[0].mxu0
      %v3738 = vadd.f32 0.0, %v3737
      %v3739 = vpop.f32.mrb[0].mxu0
      %3740 = vmatprep.mubr.bf16.mxu0 0
      %3741 = vmatmul.mubr.bf16.gmra.mrb[0].mxu0 %v1529
      %v3742 = vpop.f32.mrb[0].mxu0
      %v3743 = vadd.f32 0.0, %v3742
      %v3744 = vpop.f32.mrb[0].mxu0
      %v3745 = vpop.f32.mrb[0].mxu0
      %v3746 = vadd.f32 0.0, %v3745
      %v3747 = vpop.f32.mrb[0].mxu0
      %3748 = vmatprep.mubr.bf16.mxu0 0
      %3749 = vmatmul.mubr.bf16.gmra.mrb[0].mxu0 %v1530
      %v3750 = vpop.f32.mrb[0].mxu0
      %v3751 = vadd.f32 0.0, %v3750
      %v3752 = vpop.f32.mrb[0].mxu0
      %v3753 = vpop.f32.mrb[0].mxu0
      %v3754 = vadd.f32 0.0, %v3753
      %v3755 = vpop.f32.mrb[0].mxu0
      %3756 = vmatprep.mubr.bf16.mxu0 0
      %3757 = vmatmul.mubr.bf16.gmra.mrb[0].mxu0 %v1531
      %v3758 = vpop.f32.mrb[0].mxu0
      %v3759 = vadd.f32 0.0, %v3758
      %v3760 = vpop.f32.mrb[0].mxu0
      %v3761 = vpop.f32.mrb[0].mxu0
      %v3762 = vadd.f32 0.0, %v3761
      %v3763 = vpop.f32.mrb[0].mxu0
      %3764 = vmatprep.mubr.bf16.mxu0 0
      %3765 = vmatmul.mubr.bf16.gmra.mrb[0].mxu0 %v1532
      %v3766 = vpop.f32.mrb[0].mxu0
      %v3767 = vadd.f32 0.0, %v3766
      %v3768 = vpop.f32.mrb[0].mxu0
      %v3769 = vpop.f32.mrb[0].mxu0
      %v3770 = vadd.f32 0.0, %v3769
      %v3771 = vpop.f32.mrb[0].mxu0
      %3772 = vmatprep.mubr.bf16.mxu0 0
      %3773 = vmatmul.mubr.bf16.gmra.mrb[0].mxu0 %v1533
      %v3774 = vpop.f32.mrb[0].mxu0
      %v3775 = vadd.f32 0.0, %v3774
      %v3776 = vpop.f32.mrb[0].mxu0
      %v3777 = vpop.f32.mrb[0].mxu0
      %v3778 = vadd.f32 0.0, %v3777
      %v3779 = vpop.f32.mrb[0].mxu0
      %3780 = vmatprep.mubr.bf16.mxu0 0
      %3781 = vmatmul.mubr.bf16.gmra.mrb[0].mxu0 %v1534
      %v3782 = vpop.f32.mrb[0].mxu0
      %v3783 = vadd.f32 0.0, %v3782
      %v3784 = vpop.f32.mrb[0].mxu0
      %v3785 = vpop.f32.mrb[0].mxu0
      %v3786 = vadd.f32 0.0, %v3785
      %v3787 = vpop.f32.mrb[0].mxu0
      %3788 = vmatprep.mubr.bf16.mxu0 0
      %3789 = vmatmul.mubr.bf16.gmra.mrb[0].mxu0 %v1535
      %v3790 = vpop.f32.mrb[0].mxu0
      %v3791 = vadd.f32 0.0, %v3790
      %v3792 = vpop.f32.mrb[0].mxu0
      %v3793 = vpop.f32.mrb[0].mxu0
      %v3794 = vadd.f32 0.0, %v3793
      %v3795 = vpop.f32.mrb[0].mxu0
      %3796 = vmatprep.mubr.bf16.mxu0 0
      %3797 = vmatmul.mubr.bf16.gmra.mrb[0].mxu0 %v1536
      %v3798 = vpop.f32.mrb[0].mxu0
      %v3799 = vadd.f32 0.0, %v3798
      %v3800 = vpop.f32.mrb[0].mxu0
      %v3801 = vpop.f32.mrb[0].mxu0
      %v3802 = vadd.f32 0.0, %v3801
      %v3803 = vpop.f32.mrb[0].mxu0
      %3804 = vmatprep.mubr.bf16.mxu0 0
      %3805 = vmatmul.mubr.bf16.gmra.mrb[0].mxu0 %v1537
      %v3806 = vpop.f32.mrb[0].mxu0
      %v3807 = vadd.f32 0.0, %v3806
      %v3808 = vpop.f32.mrb[0].mxu0
      %v3809 = vpop.f32.mrb[0].mxu0
      %v3810 = vadd.f32 0.0, %v3809
      %v3811 = vpop.f32.mrb[0].mxu0
      %3812 = vmatprep.mubr.bf16.mxu0 0
      %3813 = vmatmul.mubr.bf16.gmra.mrb[0].mxu0 %v1538
      %v3814 = vpop.f32.mrb[0].mxu0
      %v3815 = vadd.f32 0.0, %v3814
      %v3816 = vpop.f32.mrb[0].mxu0
      %v3817 = vpop.f32.mrb[0].mxu0
      %v3818 = vadd.f32 0.0, %v3817
      %v3819 = vpop.f32.mrb[0].mxu0
      %3820 = vmatprep.mubr.bf16.mxu0 0
      %3821 = vmatmul.mubr.bf16.gmra.mrb[0].mxu0 0
      %v3822 = vpop.f32.mrb[0].mxu0
      %v3823 = vadd.f32 0.0, %v3822
      %v3824 = vpop.f32.mrb[0].mxu0
      %v3825 = vpop.f32.mrb[0].mxu0
      %v3826 = vadd.f32 0.0, %v3825
      %v3827 = vpop.f32.mrb[0].mxu0
      %3828 = vdwg.mxu0
      %v3829 = vadd.f32 %v3477, %v3703
      %v3830 = vadd.f32 %v3480, %v3706
      %v3831 = vadd.f32 %v3485, %v3711
      %v3832 = vadd.f32 %v3488, %v3714
      %v3833 = vadd.f32 %v3493, %v3719
      %v3834 = vadd.f32 %v3496, %v3722
      %v3835 = vadd.f32 %v3501, %v3727
      %v3836 = vadd.f32 %v3504, %v3730
      %v3837 = vadd.f32 %v3509, %v3735
      %v3838 = vadd.f32 %v3512, %v3738
      %v3839 = vadd.f32 %v3517, %v3743
      %v3840 = vadd.f32 %v3520, %v3746
      %v3841 = vadd.f32 %v3525, %v3751
      %v3842 = vadd.f32 %v3528, %v3754
      %v3843 = vadd.f32 %v3533, %v3759
      %v3844 = vadd.f32 %v3536, %v3762
      %v3845 = vadd.f32 %v3541, %v3767
      %v3846 = vadd.f32 %v3544, %v3770
      %v3847 = vadd.f32 %v3549, %v3775
      %v3848 = vadd.f32 %v3552, %v3778
      %v3849 = vadd.f32 %v3557, %v3783
      %v3850 = vadd.f32 %v3560, %v3786
      %v3851 = vadd.f32 %v3565, %v3791
      %v3852 = vadd.f32 %v3568, %v3794
      %v3853 = vadd.f32 %v3573, %v3799
      %v3854 = vadd.f32 %v3576, %v3802
      %v3855 = vadd.f32 %v3581, %v3807
      %v3856 = vadd.f32 %v3584, %v3810
      %v3857 = vadd.f32 %v3589, %v3815
      %v3858 = vadd.f32 %v3592, %v3818
      %v3859 = vadd.f32 %v3597, %v3823
      %v3860 = vadd.f32 %v3600, %v3826
      %v3861 = vrot.slane %v3829, 1
      %v3862 = vrot.slane %v3830, 1
      %v3863 = vrot.slane %v3831, 1
      %v3864 = vrot.slane %v3832, 1
      %v3865 = vrot.slane %v3833, 1
      %v3866 = vrot.slane %v3834, 1
      %v3867 = vrot.slane %v3835, 1
      %v3868 = vrot.slane %v3836, 1
      %v3869 = vrot.slane %v3837, 1
      %v3870 = vrot.slane %v3838, 1
      %v3871 = vrot.slane %v3839, 1
      %v3872 = vrot.slane %v3840, 1
      %v3873 = vrot.slane %v3841, 1
      %v3874 = vrot.slane %v3842, 1
      %v3875 = vrot.slane %v3843, 1
      %v3876 = vrot.slane %v3844, 1
      %v3877 = vrot.slane %v3845, 1
      %v3878 = vrot.slane %v3846, 1
      %v3879 = vrot.slane %v3847, 1
      %v3880 = vrot.slane %v3848, 1
      %v3881 = vrot.slane %v3849, 1
      %v3882 = vrot.slane %v3850, 1
      %v3883 = vrot.slane %v3851, 1
      %v3884 = vrot.slane %v3852, 1
      %v3885 = vrot.slane %v3853, 1
      %v3886 = vrot.slane %v3854, 1
      %v3887 = vrot.slane %v3855, 1
      %v3888 = vrot.slane %v3856, 1
      %v3889 = vrot.slane %v3857, 1
      %v3890 = vrot.slane %v3858, 1
      %v3891 = vrot.slane %v3859, 1
      %v3892 = vrot.slane %v3860, 1
      %vm3893 = vcmp.lt.s32.totalorder %v335, 7
      %v3894 = vsel %vm3893, %v3891, %v3892
      %v3895 = vsel %vm3893, %v3890, %v3891
      %v3896 = vsel %vm3893, %v3889, %v3890
      %v3897 = vsel %vm3893, %v3888, %v3889
      %v3898 = vsel %vm3893, %v3887, %v3888
      %v3899 = vsel %vm3893, %v3886, %v3887
      %v3900 = vsel %vm3893, %v3885, %v3886
      %v3901 = vsel %vm3893, %v3884, %v3885
      %v3902 = vsel %vm3893, %v3883, %v3884
      %v3903 = vsel %vm3893, %v3882, %v3883
      %v3904 = vsel %vm3893, %v3881, %v3882
      %v3905 = vsel %vm3893, %v3880, %v3881
      %v3906 = vsel %vm3893, %v3879, %v3880
      %v3907 = vsel %vm3893, %v3878, %v3879
      %v3908 = vsel %vm3893, %v3877, %v3878
      %v3909 = vsel %vm3893, %v3876, %v3877
      %v3910 = vsel %vm3893, %v3875, %v3876
      %v3911 = vsel %vm3893, %v3874, %v3875
      %v3912 = vsel %vm3893, %v3873, %v3874
      %v3913 = vsel %vm3893, %v3872, %v3873
      %v3914 = vsel %vm3893, %v3871, %v3872
      %v3915 = vsel %vm3893, %v3870, %v3871
      %v3916 = vsel %vm3893, %v3869, %v3870
      %v3917 = vsel %vm3893, %v3868, %v3869
      %v3918 = vsel %vm3893, %v3867, %v3868
      %v3919 = vsel %vm3893, %v3866, %v3867
      %v3920 = vsel %vm3893, %v3865, %v3866
      %v3921 = vsel %vm3893, %v3864, %v3865
      %v3922 = vsel %vm3893, %v3863, %v3864
      %v3923 = vsel %vm3893, %v3862, %v3863
      %v3924 = vsel %vm3893, %v3861, %v3862
      %v3925 = vsel %vm3893, %v3892, %v3861
      %v3926 = vsel %vm783, 1, 0
      %v3927 = vsel %vm784, 1, 0
      %v3928 = vsel %vm785, 1, 0
      %v3929 = vsel %vm786, 1, 0
      %v3930 = vsel %vm787, 1, 0
      %v3931 = vsel %vm788, 1, 0
      %v3932 = vsel %vm789, 1, 0
      %v3933 = vsel %vm790, 1, 0
      %v3934 = vsel %vm791, 1, 0
      %v3935 = vsel %vm792, 1, 0
      %v3936 = vsel %vm793, 1, 0
      %v3937 = vsel %vm794, 1, 0
      %v3938 = vsel %vm795, 1, 0
      %v3939 = vsel %vm796, 1, 0
      %v3940 = vsel %vm797, 1, 0
      %v3941 = vsel %vm798, 1, 0
      %v3942 = vsel %vm799, 1, 0
      %v3943 = vsel %vm800, 1, 0
      %v3944 = vsel %vm801, 1, 0
      %v3945 = vsel %vm802, 1, 0
      %v3946 = vsel %vm803, 1, 0
      %v3947 = vsel %vm804, 1, 0
      %v3948 = vsel %vm805, 1, 0
      %v3949 = vsel %vm806, 1, 0
      %v3950 = vsel %vm807, 1, 0
      %v3951 = vsel %vm808, 1, 0
      %v3952 = vsel %vm809, 1, 0
      %v3953 = vsel %vm810, 1, 0
      %v3954 = vsel %vm811, 1, 0
      %v3955 = vsel %vm812, 1, 0
      %v3956 = vsel %vm813, 1, 0
      %v3957 = vsel %vm814, 1, 0
      %vm3958 = vcmp.eq.s32.totalorder %v3926, 1
      %vm3959 = vcmp.eq.s32.totalorder %v3927, 1
      %vm3960 = vcmp.eq.s32.totalorder %v3928, 1
      %vm3961 = vcmp.eq.s32.totalorder %v3929, 1
      %vm3962 = vcmp.eq.s32.totalorder %v3930, 1
      %vm3963 = vcmp.eq.s32.totalorder %v3931, 1
      %vm3964 = vcmp.eq.s32.totalorder %v3932, 1
      %vm3965 = vcmp.eq.s32.totalorder %v3933, 1
      %vm3966 = vcmp.eq.s32.totalorder %v3934, 1
      %vm3967 = vcmp.eq.s32.totalorder %v3935, 1
      %vm3968 = vcmp.eq.s32.totalorder %v3936, 1
      %vm3969 = vcmp.eq.s32.totalorder %v3937, 1
      %vm3970 = vcmp.eq.s32.totalorder %v3938, 1
      %vm3971 = vcmp.eq.s32.totalorder %v3939, 1
      %vm3972 = vcmp.eq.s32.totalorder %v3940, 1
      %vm3973 = vcmp.eq.s32.totalorder %v3941, 1
      %vm3974 = vcmp.eq.s32.totalorder %v3942, 1
      %vm3975 = vcmp.eq.s32.totalorder %v3943, 1
      %vm3976 = vcmp.eq.s32.totalorder %v3944, 1
      %vm3977 = vcmp.eq.s32.totalorder %v3945, 1
      %vm3978 = vcmp.eq.s32.totalorder %v3946, 1
      %vm3979 = vcmp.eq.s32.totalorder %v3947, 1
      %vm3980 = vcmp.eq.s32.totalorder %v3948, 1
      %vm3981 = vcmp.eq.s32.totalorder %v3949, 1
      %vm3982 = vcmp.eq.s32.totalorder %v3950, 1
      %vm3983 = vcmp.eq.s32.totalorder %v3951, 1
      %vm3984 = vcmp.eq.s32.totalorder %v3952, 1
      %vm3985 = vcmp.eq.s32.totalorder %v3953, 1
      %vm3986 = vcmp.eq.s32.totalorder %v3954, 1
      %vm3987 = vcmp.eq.s32.totalorder %v3955, 1
      %vm3988 = vcmp.eq.s32.totalorder %v3956, 1
      %vm3989 = vcmp.eq.s32.totalorder %v3957, 1
      %v3990 = vsel %vm3958, %v3924, 0.0
      %v3991 = vsel %vm3959, %v3923, 0.0
      %v3992 = vsel %vm3960, %v3922, 0.0
      %v3993 = vsel %vm3961, %v3921, 0.0
      %v3994 = vsel %vm3962, %v3920, 0.0
      %v3995 = vsel %vm3963, %v3919, 0.0
      %v3996 = vsel %vm3964, %v3918, 0.0
      %v3997 = vsel %vm3965, %v3917, 0.0
      %v3998 = vsel %vm3966, %v3916, 0.0
      %v3999 = vsel %vm3967, %v3915, 0.0
      %v4000 = vsel %vm3968, %v3914, 0.0
      %v4001 = vsel %vm3969, %v3913, 0.0
      %v4002 = vsel %vm3970, %v3912, 0.0
      %v4003 = vsel %vm3971, %v3911, 0.0
      %v4004 = vsel %vm3972, %v3910, 0.0
      %v4005 = vsel %vm3973, %v3909, 0.0
      %v4006 = vsel %vm3974, %v3908, 0.0
      %v4007 = vsel %vm3975, %v3907, 0.0
      %v4008 = vsel %vm3976, %v3906, 0.0
      %v4009 = vsel %vm3977, %v3905, 0.0
      %v4010 = vsel %vm3978, %v3904, 0.0
      %v4011 = vsel %vm3979, %v3903, 0.0
      %v4012 = vsel %vm3980, %v3902, 0.0
      %v4013 = vsel %vm3981, %v3901, 0.0
      %v4014 = vsel %vm3982, %v3900, 0.0
      %v4015 = vsel %vm3983, %v3899, 0.0
      %v4016 = vsel %vm3984, %v3898, 0.0
      %v4017 = vsel %vm3985, %v3897, 0.0
      %v4018 = vsel %vm3986, %v3896, 0.0
      %v4019 = vsel %vm3987, %v3895, 0.0
      %v4020 = vsel %vm3988, %v3894, 0.0
      %v4021 = vsel %vm3989, %v3925, 0.0
      %v4022 = vadd.f32 %v3119, %v3990
      %v4023 = vadd.f32 %v3120, %v3991
      %v4024 = vadd.f32 %v3121, %v3992
      %v4025 = vadd.f32 %v3122, %v3993
      %v4026 = vadd.f32 %v3123, %v3994
      %v4027 = vadd.f32 %v3124, %v3995
      %v4028 = vadd.f32 %v3125, %v3996
      %v4029 = vadd.f32 %v3126, %v3997
      %v4030 = vadd.f32 %v3127, %v3998
      %v4031 = vadd.f32 %v3128, %v3999
      %v4032 = vadd.f32 %v3129, %v4000
      %v4033 = vadd.f32 %v3130, %v4001
      %v4034 = vadd.f32 %v3131, %v4002
      %v4035 = vadd.f32 %v3132, %v4003
      %v4036 = vadd.f32 %v3133, %v4004
      %v4037 = vadd.f32 %v3134, %v4005
      %v4038 = vadd.f32 %v3135, %v4006
      %v4039 = vadd.f32 %v3136, %v4007
      %v4040 = vadd.f32 %v3137, %v4008
      %v4041 = vadd.f32 %v3138, %v4009
      %v4042 = vadd.f32 %v3139, %v4010
      %v4043 = vadd.f32 %v3140, %v4011
      %v4044 = vadd.f32 %v3141, %v4012
      %v4045 = vadd.f32 %v3142, %v4013
      %v4046 = vadd.f32 %v3143, %v4014
      %v4047 = vadd.f32 %v3144, %v4015
      %v4048 = vadd.f32 %v3145, %v4016
      %v4049 = vadd.f32 %v3146, %v4017
      %v4050 = vadd.f32 %v3147, %v4018
      %v4051 = vadd.f32 %v3148, %v4019
      %v4052 = vadd.f32 %v3149, %v4020
      %v4053 = vadd.f32 %v3150, %v4021
      %v4054 = vld [vmem:[%s6] sm:$0x1]
      %v4056 = vlaneseq
      %v4057 = vshrl.u32 %v4056, 7
      %v4058 = vsub.s32 0, %v4057
      %v4059 = vrot.slane %v4054, %v4058
      %v4061 = vadd.f32 %v4022, %v4059
      %v4062 = vadd.f32 %v4023, %v4059
      %v4063 = vadd.f32 %v4024, %v4059
      %v4064 = vadd.f32 %v4025, %v4059
      %v4065 = vadd.f32 %v4026, %v4059
      %v4066 = vadd.f32 %v4027, %v4059
      %v4067 = vadd.f32 %v4028, %v4059
      %v4068 = vadd.f32 %v4029, %v4059
      %v4069 = vadd.f32 %v4030, %v4059
      %v4070 = vadd.f32 %v4031, %v4059
      %v4071 = vadd.f32 %v4032, %v4059
      %v4072 = vadd.f32 %v4033, %v4059
      %v4073 = vadd.f32 %v4034, %v4059
      %v4074 = vadd.f32 %v4035, %v4059
      %v4075 = vadd.f32 %v4036, %v4059
      %v4076 = vadd.f32 %v4037, %v4059
      %v4077 = vadd.f32 %v4038, %v4059
      %v4078 = vadd.f32 %v4039, %v4059
      %v4079 = vadd.f32 %v4040, %v4059
      %v4080 = vadd.f32 %v4041, %v4059
      %v4081 = vadd.f32 %v4042, %v4059
      %v4082 = vadd.f32 %v4043, %v4059
      %v4083 = vadd.f32 %v4044, %v4059
      %v4084 = vadd.f32 %v4045, %v4059
      %v4085 = vadd.f32 %v4046, %v4059
      %v4086 = vadd.f32 %v4047, %v4059
      %v4087 = vadd.f32 %v4048, %v4059
      %v4088 = vadd.f32 %v4049, %v4059
      %v4089 = vadd.f32 %v4050, %v4059
      %v4090 = vadd.f32 %v4051, %v4059
      %v4091 = vadd.f32 %v4052, %v4059
      %v4092 = vadd.f32 %v4053, %v4059
      %v4093 = vld [vmem:[%s7] sm:$0x1]
      %v4094 = vld [vmem:[%s8] sm:$0x1]
      %v4095 = vadd.f32 %v4061, %v4062
      %v4096 = vadd.f32 %v4095, %v4063
      %v4097 = vadd.f32 %v4096, %v4064
      %v4098 = vadd.f32 %v4097, %v4065
      %v4099 = vadd.f32 %v4098, %v4066
      %v4100 = vadd.f32 %v4099, %v4067
      %v4101 = vadd.f32 %v4100, %v4068
      %v4102 = vadd.f32 %v4101, %v4069
      %v4103 = vadd.f32 %v4102, %v4070
      %v4104 = vadd.f32 %v4103, %v4071
      %v4105 = vadd.f32 %v4104, %v4072
      %v4106 = vadd.f32 %v4105, %v4073
      %v4107 = vadd.f32 %v4106, %v4074
      %v4108 = vadd.f32 %v4107, %v4075
      %v4109 = vadd.f32 %v4108, %v4076
      %v4110 = vadd.f32 %v4109, %v4077
      %v4111 = vadd.f32 %v4110, %v4078
      %v4112 = vadd.f32 %v4111, %v4079
      %v4113 = vadd.f32 %v4112, %v4080
      %v4114 = vadd.f32 %v4113, %v4081
      %v4115 = vadd.f32 %v4114, %v4082
      %v4116 = vadd.f32 %v4115, %v4083
      %v4117 = vadd.f32 %v4116, %v4084
      %v4118 = vadd.f32 %v4117, %v4085
      %v4119 = vadd.f32 %v4118, %v4086
      %v4120 = vadd.f32 %v4119, %v4087
      %v4121 = vadd.f32 %v4120, %v4088
      %v4122 = vadd.f32 %v4121, %v4089
      %v4123 = vadd.f32 %v4122, %v4090
      %v4124 = vadd.f32 %v4123, %v4091
      %v4125 = vadd.f32 %v4124, %v4092
      %v4126 = vrot.slane %v4125, 4
      %v4127 = vadd.f32 %v4125, %v4126
      %v4128 = vrot.slane %v4127, 2
      %v4129 = vadd.f32 %v4127, %v4128
      %v4130 = vrot.slane %v4129, 1
      %v4131 = vadd.f32 %v4129, %v4130
      %v4132 = vmul.f32 %v4131, 0.00390625
      %v4133 = vsub.f32 %v4061, %v4132
      %v4134 = vsub.f32 %v4062, %v4132
      %v4135 = vsub.f32 %v4063, %v4132
      %v4136 = vsub.f32 %v4064, %v4132
      %v4137 = vsub.f32 %v4065, %v4132
      %v4138 = vsub.f32 %v4066, %v4132
      %v4139 = vsub.f32 %v4067, %v4132
      %v4140 = vsub.f32 %v4068, %v4132
      %v4141 = vsub.f32 %v4069, %v4132
      %v4142 = vsub.f32 %v4070, %v4132
      %v4143 = vsub.f32 %v4071, %v4132
      %v4144 = vsub.f32 %v4072, %v4132
      %v4145 = vsub.f32 %v4073, %v4132
      %v4146 = vsub.f32 %v4074, %v4132
      %v4147 = vsub.f32 %v4075, %v4132
      %v4148 = vsub.f32 %v4076, %v4132
      %v4149 = vsub.f32 %v4077, %v4132
      %v4150 = vsub.f32 %v4078, %v4132
      %v4151 = vsub.f32 %v4079, %v4132
      %v4152 = vsub.f32 %v4080, %v4132
      %v4153 = vsub.f32 %v4081, %v4132
      %v4154 = vsub.f32 %v4082, %v4132
      %v4155 = vsub.f32 %v4083, %v4132
      %v4156 = vsub.f32 %v4084, %v4132
      %v4157 = vsub.f32 %v4085, %v4132
      %v4158 = vsub.f32 %v4086, %v4132
      %v4159 = vsub.f32 %v4087, %v4132
      %v4160 = vsub.f32 %v4088, %v4132
      %v4161 = vsub.f32 %v4089, %v4132
      %v4162 = vsub.f32 %v4090, %v4132
      %v4163 = vsub.f32 %v4091, %v4132
      %v4164 = vsub.f32 %v4092, %v4132
      %v4165 = vmul.f32 %v4133, %v4133
      %v4166 = vmul.f32 %v4134, %v4134
      %v4167 = vmul.f32 %v4135, %v4135
      %v4168 = vmul.f32 %v4136, %v4136
      %v4169 = vmul.f32 %v4137, %v4137
      %v4170 = vmul.f32 %v4138, %v4138
      %v4171 = vmul.f32 %v4139, %v4139
      %v4172 = vmul.f32 %v4140, %v4140
      %v4173 = vmul.f32 %v4141, %v4141
      %v4174 = vmul.f32 %v4142, %v4142
      %v4175 = vmul.f32 %v4143, %v4143
      %v4176 = vmul.f32 %v4144, %v4144
      %v4177 = vmul.f32 %v4145, %v4145
      %v4178 = vmul.f32 %v4146, %v4146
      %v4179 = vmul.f32 %v4147, %v4147
      %v4180 = vmul.f32 %v4148, %v4148
      %v4181 = vmul.f32 %v4149, %v4149
      %v4182 = vmul.f32 %v4150, %v4150
      %v4183 = vmul.f32 %v4151, %v4151
      %v4184 = vmul.f32 %v4152, %v4152
      %v4185 = vmul.f32 %v4153, %v4153
      %v4186 = vmul.f32 %v4154, %v4154
      %v4187 = vmul.f32 %v4155, %v4155
      %v4188 = vmul.f32 %v4156, %v4156
      %v4189 = vmul.f32 %v4157, %v4157
      %v4190 = vmul.f32 %v4158, %v4158
      %v4191 = vmul.f32 %v4159, %v4159
      %v4192 = vmul.f32 %v4160, %v4160
      %v4193 = vmul.f32 %v4161, %v4161
      %v4194 = vmul.f32 %v4162, %v4162
      %v4195 = vmul.f32 %v4163, %v4163
      %v4196 = vmul.f32 %v4164, %v4164
      %v4197 = vadd.f32 %v4165, %v4166
      %v4198 = vadd.f32 %v4197, %v4167
      %v4199 = vadd.f32 %v4198, %v4168
      %v4200 = vadd.f32 %v4199, %v4169
      %v4201 = vadd.f32 %v4200, %v4170
      %v4202 = vadd.f32 %v4201, %v4171
      %v4203 = vadd.f32 %v4202, %v4172
      %v4204 = vadd.f32 %v4203, %v4173
      %v4205 = vadd.f32 %v4204, %v4174
      %v4206 = vadd.f32 %v4205, %v4175
      %v4207 = vadd.f32 %v4206, %v4176
      %v4208 = vadd.f32 %v4207, %v4177
      %v4209 = vadd.f32 %v4208, %v4178
      %v4210 = vadd.f32 %v4209, %v4179
      %v4211 = vadd.f32 %v4210, %v4180
      %v4212 = vadd.f32 %v4211, %v4181
      %v4213 = vadd.f32 %v4212, %v4182
      %v4214 = vadd.f32 %v4213, %v4183
      %v4215 = vadd.f32 %v4214, %v4184
      %v4216 = vadd.f32 %v4215, %v4185
      %v4217 = vadd.f32 %v4216, %v4186
      %v4218 = vadd.f32 %v4217, %v4187
      %v4219 = vadd.f32 %v4218, %v4188
      %v4220 = vadd.f32 %v4219, %v4189
      %v4221 = vadd.f32 %v4220, %v4190
      %v4222 = vadd.f32 %v4221, %v4191
      %v4223 = vadd.f32 %v4222, %v4192
      %v4224 = vadd.f32 %v4223, %v4193
      %v4225 = vadd.f32 %v4224, %v4194
      %v4226 = vadd.f32 %v4225, %v4195
      %v4227 = vadd.f32 %v4226, %v4196
      %v4228 = vrot.slane %v4227, 4
      %v4229 = vadd.f32 %v4227, %v4228
      %v4230 = vrot.slane %v4229, 2
      %v4231 = vadd.f32 %v4229, %v4230
      %v4232 = vrot.slane %v4231, 1
      %v4233 = vadd.f32 %v4231, %v4232
      %v4234 = vmul.f32 %v4233, 0.00390625
      %v4235 = vadd.f32 %v4234, 1e-05
      %v4236 = vrsqrt.pop %v4235
      %v4237 = vmul.f32 %v4133, %v4236
      %v4238 = vmul.f32 %v4134, %v4236
      %v4239 = vmul.f32 %v4135, %v4236
      %v4240 = vmul.f32 %v4136, %v4236
      %v4241 = vmul.f32 %v4137, %v4236
      %v4242 = vmul.f32 %v4138, %v4236
      %v4243 = vmul.f32 %v4139, %v4236
      %v4244 = vmul.f32 %v4140, %v4236
      %v4245 = vmul.f32 %v4141, %v4236
      %v4246 = vmul.f32 %v4142, %v4236
      %v4247 = vmul.f32 %v4143, %v4236
      %v4248 = vmul.f32 %v4144, %v4236
      %v4249 = vmul.f32 %v4145, %v4236
      %v4250 = vmul.f32 %v4146, %v4236
      %v4251 = vmul.f32 %v4147, %v4236
      %v4252 = vmul.f32 %v4148, %v4236
      %v4253 = vmul.f32 %v4149, %v4236
      %v4254 = vmul.f32 %v4150, %v4236
      %v4255 = vmul.f32 %v4151, %v4236
      %v4256 = vmul.f32 %v4152, %v4236
      %v4257 = vmul.f32 %v4153, %v4236
      %v4258 = vmul.f32 %v4154, %v4236
      %v4259 = vmul.f32 %v4155, %v4236
      %v4260 = vmul.f32 %v4156, %v4236
      %v4261 = vmul.f32 %v4157, %v4236
      %v4262 = vmul.f32 %v4158, %v4236
      %v4263 = vmul.f32 %v4159, %v4236
      %v4264 = vmul.f32 %v4160, %v4236
      %v4265 = vmul.f32 %v4161, %v4236
      %v4266 = vmul.f32 %v4162, %v4236
      %v4267 = vmul.f32 %v4163, %v4236
      %v4268 = vmul.f32 %v4164, %v4236
      %v4270 = vlaneseq
      %v4271 = vshrl.u32 %v4270, 7
      %v4272 = vsub.s32 0, %v4271
      %v4273 = vrot.slane %v4093, %v4272
      %v4275 = vmul.f32 %v4237, %v4273
      %v4276 = vmul.f32 %v4238, %v4273
      %v4277 = vmul.f32 %v4239, %v4273
      %v4278 = vmul.f32 %v4240, %v4273
      %v4279 = vmul.f32 %v4241, %v4273
      %v4280 = vmul.f32 %v4242, %v4273
      %v4281 = vmul.f32 %v4243, %v4273
      %v4282 = vmul.f32 %v4244, %v4273
      %v4283 = vmul.f32 %v4245, %v4273
      %v4284 = vmul.f32 %v4246, %v4273
      %v4285 = vmul.f32 %v4247, %v4273
      %v4286 = vmul.f32 %v4248, %v4273
      %v4287 = vmul.f32 %v4249, %v4273
      %v4288 = vmul.f32 %v4250, %v4273
      %v4289 = vmul.f32 %v4251, %v4273
      %v4290 = vmul.f32 %v4252, %v4273
      %v4291 = vmul.f32 %v4253, %v4273
      %v4292 = vmul.f32 %v4254, %v4273
      %v4293 = vmul.f32 %v4255, %v4273
      %v4294 = vmul.f32 %v4256, %v4273
      %v4295 = vmul.f32 %v4257, %v4273
      %v4296 = vmul.f32 %v4258, %v4273
      %v4297 = vmul.f32 %v4259, %v4273
      %v4298 = vmul.f32 %v4260, %v4273
      %v4299 = vmul.f32 %v4261, %v4273
      %v4300 = vmul.f32 %v4262, %v4273
      %v4301 = vmul.f32 %v4263, %v4273
      %v4302 = vmul.f32 %v4264, %v4273
      %v4303 = vmul.f32 %v4265, %v4273
      %v4304 = vmul.f32 %v4266, %v4273
      %v4305 = vmul.f32 %v4267, %v4273
      %v4306 = vmul.f32 %v4268, %v4273
      %v4308 = vlaneseq
      %v4309 = vshrl.u32 %v4308, 7
      %v4310 = vsub.s32 0, %v4309
      %v4311 = vrot.slane %v4094, %v4310
      %v4313 = vadd.f32 %v4275, %v4311
      %v4314 = vadd.f32 %v4276, %v4311
      %v4315 = vadd.f32 %v4277, %v4311
      %v4316 = vadd.f32 %v4278, %v4311
      %v4317 = vadd.f32 %v4279, %v4311
      %v4318 = vadd.f32 %v4280, %v4311
      %v4319 = vadd.f32 %v4281, %v4311
      %v4320 = vadd.f32 %v4282, %v4311
      %v4321 = vadd.f32 %v4283, %v4311
      %v4322 = vadd.f32 %v4284, %v4311
      %v4323 = vadd.f32 %v4285, %v4311
      %v4324 = vadd.f32 %v4286, %v4311
      %v4325 = vadd.f32 %v4287, %v4311
      %v4326 = vadd.f32 %v4288, %v4311
      %v4327 = vadd.f32 %v4289, %v4311
      %v4328 = vadd.f32 %v4290, %v4311
      %v4329 = vadd.f32 %v4291, %v4311
      %v4330 = vadd.f32 %v4292, %v4311
      %v4331 = vadd.f32 %v4293, %v4311
      %v4332 = vadd.f32 %v4294, %v4311
      %v4333 = vadd.f32 %v4295, %v4311
      %v4334 = vadd.f32 %v4296, %v4311
      %v4335 = vadd.f32 %v4297, %v4311
      %v4336 = vadd.f32 %v4298, %v4311
      %v4337 = vadd.f32 %v4299, %v4311
      %v4338 = vadd.f32 %v4300, %v4311
      %v4339 = vadd.f32 %v4301, %v4311
      %v4340 = vadd.f32 %v4302, %v4311
      %v4341 = vadd.f32 %v4303, %v4311
      %v4342 = vadd.f32 %v4304, %v4311
      %v4343 = vadd.f32 %v4305, %v4311
      %v4344 = vadd.f32 %v4306, %v4311
      %vm4345 = vcmp.ge.f32.partialorder %v4313, 0.0
      %vm4346 = vcmp.ge.f32.partialorder %v4314, 0.0
      %vm4347 = vcmp.ge.f32.partialorder %v4315, 0.0
      %vm4348 = vcmp.ge.f32.partialorder %v4316, 0.0
      %vm4349 = vcmp.ge.f32.partialorder %v4317, 0.0
      %vm4350 = vcmp.ge.f32.partialorder %v4318, 0.0
      %vm4351 = vcmp.ge.f32.partialorder %v4319, 0.0
      %vm4352 = vcmp.ge.f32.partialorder %v4320, 0.0
      %vm4353 = vcmp.ge.f32.partialorder %v4321, 0.0
      %vm4354 = vcmp.ge.f32.partialorder %v4322, 0.0
      %vm4355 = vcmp.ge.f32.partialorder %v4323, 0.0
      %vm4356 = vcmp.ge.f32.partialorder %v4324, 0.0
      %vm4357 = vcmp.ge.f32.partialorder %v4325, 0.0
      %vm4358 = vcmp.ge.f32.partialorder %v4326, 0.0
      %vm4359 = vcmp.ge.f32.partialorder %v4327, 0.0
      %vm4360 = vcmp.ge.f32.partialorder %v4328, 0.0
      %vm4361 = vcmp.ge.f32.partialorder %v4329, 0.0
      %vm4362 = vcmp.ge.f32.partialorder %v4330, 0.0
      %vm4363 = vcmp.ge.f32.partialorder %v4331, 0.0
      %vm4364 = vcmp.ge.f32.partialorder %v4332, 0.0
      %vm4365 = vcmp.ge.f32.partialorder %v4333, 0.0
      %vm4366 = vcmp.ge.f32.partialorder %v4334, 0.0
      %vm4367 = vcmp.ge.f32.partialorder %v4335, 0.0
      %vm4368 = vcmp.ge.f32.partialorder %v4336, 0.0
      %vm4369 = vcmp.ge.f32.partialorder %v4337, 0.0
      %vm4370 = vcmp.ge.f32.partialorder %v4338, 0.0
      %vm4371 = vcmp.ge.f32.partialorder %v4339, 0.0
      %vm4372 = vcmp.ge.f32.partialorder %v4340, 0.0
      %vm4373 = vcmp.ge.f32.partialorder %v4341, 0.0
      %vm4374 = vcmp.ge.f32.partialorder %v4342, 0.0
      %vm4375 = vcmp.ge.f32.partialorder %v4343, 0.0
      %vm4376 = vcmp.ge.f32.partialorder %v4344, 0.0
      %v4377 = vmul.f32 %v4313, 0.1
      %v4378 = vmul.f32 %v4314, 0.1
      %v4379 = vmul.f32 %v4315, 0.1
      %v4380 = vmul.f32 %v4316, 0.1
      %v4381 = vmul.f32 %v4317, 0.1
      %v4382 = vmul.f32 %v4318, 0.1
      %v4383 = vmul.f32 %v4319, 0.1
      %v4384 = vmul.f32 %v4320, 0.1
      %v4385 = vmul.f32 %v4321, 0.1
      %v4386 = vmul.f32 %v4322, 0.1
      %v4387 = vmul.f32 %v4323, 0.1
      %v4388 = vmul.f32 %v4324, 0.1
      %v4389 = vmul.f32 %v4325, 0.1
      %v4390 = vmul.f32 %v4326, 0.1
      %v4391 = vmul.f32 %v4327, 0.1
      %v4392 = vmul.f32 %v4328, 0.1
      %v4393 = vmul.f32 %v4329, 0.1
      %v4394 = vmul.f32 %v4330, 0.1
      %v4395 = vmul.f32 %v4331, 0.1
      %v4396 = vmul.f32 %v4332, 0.1
      %v4397 = vmul.f32 %v4333, 0.1
      %v4398 = vmul.f32 %v4334, 0.1
      %v4399 = vmul.f32 %v4335, 0.1
      %v4400 = vmul.f32 %v4336, 0.1
      %v4401 = vmul.f32 %v4337, 0.1
      %v4402 = vmul.f32 %v4338, 0.1
      %v4403 = vmul.f32 %v4339, 0.1
      %v4404 = vmul.f32 %v4340, 0.1
      %v4405 = vmul.f32 %v4341, 0.1
      %v4406 = vmul.f32 %v4342, 0.1
      %v4407 = vmul.f32 %v4343, 0.1
      %v4408 = vmul.f32 %v4344, 0.1
      %v4409 = vsel %vm4345, %v4313, %v4377
      %v4410 = vsel %vm4346, %v4314, %v4378
      %v4411 = vsel %vm4347, %v4315, %v4379
      %v4412 = vsel %vm4348, %v4316, %v4380
      %v4413 = vsel %vm4349, %v4317, %v4381
      %v4414 = vsel %vm4350, %v4318, %v4382
      %v4415 = vsel %vm4351, %v4319, %v4383
      %v4416 = vsel %vm4352, %v4320, %v4384
      %v4417 = vsel %vm4353, %v4321, %v4385
      %v4418 = vsel %vm4354, %v4322, %v4386
      %v4419 = vsel %vm4355, %v4323, %v4387
      %v4420 = vsel %vm4356, %v4324, %v4388
      %v4421 = vsel %vm4357, %v4325, %v4389
      %v4422 = vsel %vm4358, %v4326, %v4390
      %v4423 = vsel %vm4359, %v4327, %v4391
      %v4424 = vsel %vm4360, %v4328, %v4392
      %v4425 = vsel %vm4361, %v4329, %v4393
      %v4426 = vsel %vm4362, %v4330, %v4394
      %v4427 = vsel %vm4363, %v4331, %v4395
      %v4428 = vsel %vm4364, %v4332, %v4396
      %v4429 = vsel %vm4365, %v4333, %v4397
      %v4430 = vsel %vm4366, %v4334, %v4398
      %v4431 = vsel %vm4367, %v4335, %v4399
      %v4432 = vsel %vm4368, %v4336, %v4400
      %v4433 = vsel %vm4369, %v4337, %v4401
      %v4434 = vsel %vm4370, %v4338, %v4402
      %v4435 = vsel %vm4371, %v4339, %v4403
      %v4436 = vsel %vm4372, %v4340, %v4404
      %v4437 = vsel %vm4373, %v4341, %v4405
      %v4438 = vsel %vm4374, %v4342, %v4406
      %v4439 = vsel %vm4375, %v4343, %v4407
      %v4440 = vsel %vm4376, %v4344, %v4408
      %v4441 = vpack.c.bf16 %v4410, %v4409
      %v4442 = vpack.c.bf16 %v4412, %v4411
      %v4443 = vpack.c.bf16 %v4414, %v4413
      %v4444 = vpack.c.bf16 %v4416, %v4415
      %v4445 = vpack.c.bf16 %v4418, %v4417
      %v4446 = vpack.c.bf16 %v4420, %v4419
      %v4447 = vpack.c.bf16 %v4422, %v4421
      %v4448 = vpack.c.bf16 %v4424, %v4423
      %v4449 = vpack.c.bf16 %v4426, %v4425
      %v4450 = vpack.c.bf16 %v4428, %v4427
      %v4451 = vpack.c.bf16 %v4430, %v4429
      %v4452 = vpack.c.bf16 %v4432, %v4431
      %v4453 = vpack.c.bf16 %v4434, %v4433
      %v4454 = vpack.c.bf16 %v4436, %v4435
      %v4455 = vpack.c.bf16 %v4438, %v4437
      %v4456 = vpack.c.bf16 %v4440, %v4439
      %v4473 = vunpack.c.l.b16 %v4441
      %v4474 = vunpack.c.h.b16 %v4441
      %v4475 = vunpack.c.l.b16 %v4442
      %v4476 = vunpack.c.h.b16 %v4442
      %v4477 = vunpack.c.l.b16 %v4443
      %v4478 = vunpack.c.h.b16 %v4443
      %v4479 = vunpack.c.l.b16 %v4444
      %v4480 = vunpack.c.h.b16 %v4444
      %v4481 = vunpack.c.l.b16 %v4445
      %v4482 = vunpack.c.h.b16 %v4445
      %v4483 = vunpack.c.l.b16 %v4446
      %v4484 = vunpack.c.h.b16 %v4446
      %v4485 = vunpack.c.l.b16 %v4447
      %v4486 = vunpack.c.h.b16 %v4447
      %v4487 = vunpack.c.l.b16 %v4448
      %v4488 = vunpack.c.h.b16 %v4448
      %v4489 = vunpack.c.l.b16 %v4449
      %v4490 = vunpack.c.h.b16 %v4449
      %v4491 = vunpack.c.l.b16 %v4450
      %v4492 = vunpack.c.h.b16 %v4450
      %v4493 = vunpack.c.l.b16 %v4451
      %v4494 = vunpack.c.h.b16 %v4451
      %v4495 = vunpack.c.l.b16 %v4452
      %v4496 = vunpack.c.h.b16 %v4452
      %v4497 = vunpack.c.l.b16 %v4453
      %v4498 = vunpack.c.h.b16 %v4453
      %v4499 = vunpack.c.l.b16 %v4454
      %v4500 = vunpack.c.h.b16 %v4454
      %v4501 = vunpack.c.l.b16 %v4455
      %v4502 = vunpack.c.h.b16 %v4455
      %v4503 = vunpack.c.l.b16 %v4456
      %v4504 = vunpack.c.h.b16 %v4456
      %v4505 = vpack.c.b16 %v4473, %v4473
      %v4506 = vpack.c.b16 %v4474, %v4474
      %v4507 = vpack.c.b16 %v4475, %v4475
      %v4508 = vpack.c.b16 %v4476, %v4476
      %v4509 = vpack.c.b16 %v4477, %v4477
      %v4510 = vpack.c.b16 %v4478, %v4478
      %v4511 = vpack.c.b16 %v4479, %v4479
      %v4512 = vpack.c.b16 %v4480, %v4480
      %v4513 = vpack.c.b16 %v4481, %v4481
      %v4514 = vpack.c.b16 %v4482, %v4482
      %v4515 = vpack.c.b16 %v4483, %v4483
      %v4516 = vpack.c.b16 %v4484, %v4484
      %v4517 = vpack.c.b16 %v4485, %v4485
      %v4518 = vpack.c.b16 %v4486, %v4486
      %v4519 = vpack.c.b16 %v4487, %v4487
      %v4520 = vpack.c.b16 %v4488, %v4488
      %v4521 = vpack.c.b16 %v4489, %v4489
      %v4522 = vpack.c.b16 %v4490, %v4490
      %v4523 = vpack.c.b16 %v4491, %v4491
      %v4524 = vpack.c.b16 %v4492, %v4492
      %v4525 = vpack.c.b16 %v4493, %v4493
      %v4526 = vpack.c.b16 %v4494, %v4494
      %v4527 = vpack.c.b16 %v4495, %v4495
      %v4528 = vpack.c.b16 %v4496, %v4496
      %v4529 = vpack.c.b16 %v4497, %v4497
      %v4530 = vpack.c.b16 %v4498, %v4498
      %v4531 = vpack.c.b16 %v4499, %v4499
      %v4532 = vpack.c.b16 %v4500, %v4500
      %v4533 = vpack.c.b16 %v4501, %v4501
      %v4534 = vpack.c.b16 %v4502, %v4502
      %v4535 = vpack.c.b16 %v4503, %v4503
      %v4536 = vpack.c.b16 %v4504, %v4504
      %4569 = vst [vmem:[%s332] sm:$0xf] %v4505
      %4570 = vst [vmem:[%s332 + $0x4] sm:$0xf] %v4506
      %4571 = vst [vmem:[%s332 + $0x8] sm:$0xf] %v4507
      %4572 = vst [vmem:[%s332 + $0xc] sm:$0xf] %v4508
      %4573 = vst [vmem:[%s332 + $0x10] sm:$0xf] %v4509
      %4574 = vst [vmem:[%s332 + $0x14] sm:$0xf] %v4510
      %4575 = vst [vmem:[%s332 + $0x18] sm:$0xf] %v4511
      %4576 = vst [vmem:[%s332 + $0x1c] sm:$0xf] %v4512
      %4577 = vst [vmem:[%s332 + $0x20] sm:$0xf] %v4513
      %4578 = vst [vmem:[%s332 + $0x24] sm:$0xf] %v4514
      %4579 = vst [vmem:[%s332 + $0x28] sm:$0xf] %v4515
      %4580 = vst [vmem:[%s332 + $0x2c] sm:$0xf] %v4516
      %4581 = vst [vmem:[%s332 + $0x30] sm:$0xf] %v4517
      %4582 = vst [vmem:[%s332 + $0x34] sm:$0xf] %v4518
      %4583 = vst [vmem:[%s332 + $0x38] sm:$0xf] %v4519
      %4584 = vst [vmem:[%s332 + $0x3c] sm:$0xf] %v4520
      %4585 = vst [vmem:[%s332 + $0x40] sm:$0xf] %v4521
      %4586 = vst [vmem:[%s332 + $0x44] sm:$0xf] %v4522
      %4587 = vst [vmem:[%s332 + $0x48] sm:$0xf] %v4523
      %4588 = vst [vmem:[%s332 + $0x4c] sm:$0xf] %v4524
      %4589 = vst [vmem:[%s332 + $0x50] sm:$0xf] %v4525
      %4590 = vst [vmem:[%s332 + $0x54] sm:$0xf] %v4526
      %4591 = vst [vmem:[%s332 + $0x58] sm:$0xf] %v4527
      %4592 = vst [vmem:[%s332 + $0x5c] sm:$0xf] %v4528
      %4593 = vst [vmem:[%s332 + $0x60] sm:$0xf] %v4529
      %4594 = vst [vmem:[%s332 + $0x64] sm:$0xf] %v4530
      %4595 = vst [vmem:[%s332 + $0x68] sm:$0xf] %v4531
      %4596 = vst [vmem:[%s332 + $0x6c] sm:$0xf] %v4532
      %4597 = vst [vmem:[%s332 + $0x70] sm:$0xf] %v4533
      %4598 = vst [vmem:[%s332 + $0x74] sm:$0xf] %v4534
      %4599 = vst [vmem:[%s332 + $0x78] sm:$0xf] %v4535
      %4600 = vst [vmem:[%s332 + $0x7c] sm:$0xf] %v4536
      %p4601 = scmp.lt.s32.totalorder %s20, 1
      %s4602 = scalar_select %p4601, %s20, 1
      %s4603 = smul.addr %s4602, 32
      %s4604 = smul.addr %s4603, 4
      %s4605 = scalar_lea.vmem %s9, %s4604
      // Predicated region
      $region57: #{vgg_block_forward.1} parent=55 // pred_check
        %p4606 = pneg %p232
      $region58: #{vgg_block_forward.1} parent=55 // pred_check_branch
        %4608 = sbr.rel (%p4606) target = $region60
      $region59: #{vgg_block_forward.1} parent=55 // pred_region
        _
      $region60: #{vgg_block_forward.1} parent=55 // pred_fallthru
        _
    $region56: #{vgg_block_forward.1} parent=5 // pred_fallthru
      _
    %p4609 = scmp.le.s32.totalorder 2, %s15
    // Predicated region
    $region61: #{vgg_block_forward.1} parent=5 // pred_check
      %p4610 = pneg %p4609
    $region62: #{vgg_block_forward.1} parent=5 // pred_check_branch
      %4612 = sbr.rel (%p4610) target = $region64
    $region63: #{vgg_block_forward.1} parent=5 // pred_region
      %s4613 = ssub.s32 %s15, 2
      // Predicated region
      $region65: #{vgg_block_forward.1} parent=63 // pred_check
        %p4614 = pneg %p238
      $region66: #{vgg_block_forward.1} parent=63 // pred_check_branch
        %4616 = sbr.rel (%p4614) target = $region68
      $region67: #{vgg_block_forward.1} parent=63 // pred_region
        %p4617 = scmp.lt.s32.totalorder %s21, 1
        %s4618 = scalar_select %p4617, %s21, 1
        %s4619 = smul.addr %s4618, 32
        %s4620 = smul.addr %s4619, 4
        %s4621 = scalar_lea.vmem %s9, %s4620
      $region68: #{vgg_block_forward.1} parent=63 // pred_fallthru
        _
    $region64: #{vgg_block_forward.1} parent=5 // pred_fallthru
      _
  $region6: #{vgg_block_forward.1} parent=0 // loop_footer
    %s19 = sadd.s32 1, %s15
  $region7: #{vgg_block_forward.1} parent=0 // loop_footer_branch
    %14 = sbr.rel target = $region3
  $region8: #{vgg_block_forward.1} parent=0 // loop_exit
    _

</llo_original>
